<compile_context>
chip_gen: v7x
topology: tpu7x:2x2x1
jax: 0.10.0
libtpu: 0.0.40
codegen_flags: <defaults>
</compile_context>

<pallas_src>
import jax
import jax.numpy as jnp
from jax.experimental import pallas as pl
from jax.experimental.pallas import tpu as pltpu

# ---------------- small synthetic ViT config ----------------
IMAGE_SIZE = 16
PATCH      = 8
CHANNELS   = 3
WIDTH      = 64                    # transformer width
HEADS      = 2
HEAD_DIM   = WIDTH // HEADS        # 32
LAYERS     = 2
MLP_DIM    = 4 * WIDTH             # 256
EMBED      = 32                    # output projection dim
BATCH      = 2
GRID_HW    = IMAGE_SIZE // PATCH   # 2
NPATCH     = GRID_HW * GRID_HW     # 4
SEQ        = NPATCH + 1            # 5 real tokens (cls + patches)
SEQ_PAD    = 8                     # padded to a sublane multiple
CPP        = CHANNELS * PATCH * PATCH   # 192 flattened patch size
LANE       = 128
OUT_PAD    = 128                   # lane-dense projection output width
QKV_W      = HEADS * 3 * LANE      # 768: head-major q/k/v, one 128-lane block each
ATTN_W     = QKV_W + LANE          # 896: + one 128-lane block holding wo
EPS        = 1e-5

# const-slab row layout (f32, [CONST_ROWS, WIDTH])
BASE_OFF   = 0                               # rows 0..7: pos (cls folded into row 0)
LNPRE_G, LNPRE_B   = SEQ_PAD, SEQ_PAD + 1    # 8, 9
LNPOST_G, LNPOST_B = SEQ_PAD + 2, SEQ_PAD + 3  # 10, 11
LN_OFF     = SEQ_PAD + 4                     # 12: per-layer [ln1_g, ln1_b, ln2_g, ln2_b]
CONST_ROWS = ((LN_OFF + 4 * LAYERS + 7) // 8) * 8  # 24


# ---------------- in-kernel helpers ----------------
def _layernorm(x, g, b):
    mean = jnp.mean(x, axis=-1, keepdims=True)
    var = jnp.mean((x - mean) ** 2, axis=-1, keepdims=True)
    return (x - mean) * jax.lax.rsqrt(var + EPS) * g + b


# ---------------- single fused Pallas kernel (one image per program) ----------------
def clip_encode_kernel(patches_ref, const_ref, bias_ref, wep_ref, wattn_ref, wmlp_ref,
                       o_ref):
    f32, bf16 = jnp.float32, jnp.bfloat16

    # ---- patch embedding: rows already laid out (0 = cls slot, 1..4 = patches, rest 0) ----
    pe = jnp.dot(patches_ref[0].astype(bf16), wep_ref[0:CPP, 0:WIDTH],
                 preferred_element_type=f32)                           # [SEQ_PAD, WIDTH]

    # ---- tokens = (pos embedding with cls folded into row 0) + patch embeds; ln_pre ----
    x = const_ref[BASE_OFF:BASE_OFF + SEQ_PAD, :] + pe
    x = _layernorm(x, const_ref[LNPRE_G:LNPRE_G + 1, :], const_ref[LNPRE_B:LNPRE_B + 1, :])

    # mask for padded key positions (built once, reused by all layers/heads)
    kidx = jax.lax.broadcasted_iota(jnp.int32, (1, SEQ_PAD), 1)
    key_bias = jnp.where(kidx < SEQ, 0.0, -1e30).astype(f32)
    scale = 1.0 / (HEAD_DIM ** 0.5)

    # ---- transformer layers (LAYERS=2: statically unrolled) ----
    for l in range(LAYERS):
        r = LN_OFF + 4 * l

        # -- multi-head self-attention (pre-LN), head-major / lane-aligned QKV --
        h = _layernorm(x, const_ref[r:r + 1, :], const_ref[r + 1:r + 2, :])
        qkv = jnp.dot(h.astype(bf16), wattn_ref[l, :, 0:QKV_W],
                      preferred_element_type=f32) + bias_ref[l, 0:1, :]  # [SEQ_PAD, 768]
        attn = jnp.zeros((SEQ_PAD, WIDTH), f32)
        for hd in range(HEADS):                                          # static unroll
            base = hd * 3 * LANE
            # 128-lane-aligned slices; lanes >= HEAD_DIM of q/k blocks are exactly zero
            q_h = qkv[:, base:base + LANE] * scale                       # [8, 128]
            k_h = qkv[:, base + LANE:base + 2 * LANE]                    # [8, 128]
            v_h = qkv[:, base + 2 * LANE:base + 2 * LANE + HEAD_DIM]     # [8, 32]
            s = jax.lax.dot_general(q_h, k_h, (((1,), (1,)), ((), ())),
                                    preferred_element_type=f32)          # [8, 8]
            s = s + key_bias
            p = jnp.exp(s)                                               # exp(-1e30) == 0
            p = p * pl.reciprocal(jnp.sum(p, axis=-1, keepdims=True), approx=True)
            o_h = jnp.dot(p, v_h, preferred_element_type=f32)            # [8, 32]
            # per-head output projection accumulation (avoids lane concat over heads)
            wo_h = wattn_ref[l, hd * HEAD_DIM:(hd + 1) * HEAD_DIM, QKV_W:QKV_W + WIDTH]
            attn = attn + jnp.dot(o_h.astype(bf16), wo_h, preferred_element_type=f32)
        x = x + attn + bias_ref[l, 1:2, 0:WIDTH]

        # -- MLP (pre-LN) with QuickGELU --
        h = _layernorm(x, const_ref[r + 2:r + 3, :], const_ref[r + 3:r + 4, :])
        m = jnp.dot(h.astype(bf16), wmlp_ref[l, 0:WIDTH, :],
                    preferred_element_type=f32) + bias_ref[l, 2:3, 0:MLP_DIM]
        m = m * jax.nn.sigmoid(1.702 * m)                                # QuickGELU (CLIP)
        m = jnp.dot(m.astype(bf16), wmlp_ref[l, WIDTH:WIDTH + MLP_DIM, 0:WIDTH],
                    preferred_element_type=f32) + bias_ref[l, 3:4, 0:WIDTH]
        x = x + m

    # ---- ln_post on the class token + lane-dense (128-wide) projection ----
    cls_tok = x[0:1, :]
    xn = _layernorm(cls_tok, const_ref[LNPOST_G:LNPOST_G + 1, :],
                    const_ref[LNPOST_B:LNPOST_B + 1, :])
    out = jnp.dot(xn.astype(bf16), wep_ref[CPP:CPP + WIDTH, :],
                  preferred_element_type=f32)                            # [1, OUT_PAD]
    o_ref[...] = out[None]


# ---------------- synthetic parameters (deterministic) ----------------
def init_params(key):
    ks = jax.random.split(key, 12)
    rnd = lambda k, shape: 0.02 * jax.random.normal(k, shape, jnp.float32)
    return {
        "conv_w":    rnd(ks[0], (WIDTH, CHANNELS, PATCH, PATCH)),
        "class_emb": rnd(ks[1], (WIDTH,)),
        "pos_emb":   rnd(ks[2], (SEQ, WIDTH)),
        "proj":      rnd(ks[3], (WIDTH, EMBED)),
        "ln_pre_g":  jnp.ones((WIDTH,), jnp.float32),
        "ln_pre_b":  jnp.zeros((WIDTH,), jnp.float32),
        "ln_post_g": jnp.ones((WIDTH,), jnp.float32),
        "ln_post_b": jnp.zeros((WIDTH,), jnp.float32),
        "ln1_g": jnp.ones((LAYERS, WIDTH), jnp.float32),
        "ln1_b": jnp.zeros((LAYERS, WIDTH), jnp.float32),
        "ln2_g": jnp.ones((LAYERS, WIDTH), jnp.float32),
        "ln2_b": jnp.zeros((LAYERS, WIDTH), jnp.float32),
        "wqkv": rnd(ks[4], (LAYERS, WIDTH, 3 * WIDTH)),
        "bqkv": rnd(ks[5], (LAYERS, 3 * WIDTH)),
        "wo":   rnd(ks[6], (LAYERS, WIDTH, WIDTH)),
        "bo":   rnd(ks[7], (LAYERS, WIDTH)),
        "w1":   rnd(ks[8], (LAYERS, WIDTH, MLP_DIM)),
        "b1":   rnd(ks[9], (LAYERS, MLP_DIM)),
        "w2":   rnd(ks[10], (LAYERS, MLP_DIM, WIDTH)),
        "b2":   rnd(ks[11], (LAYERS, WIDTH)),
    }


# ---------------- pack raw params into the 5 kernel slabs (done once, outside jit) ----------------
def pack_params(p):
    f32, bf16 = jnp.float32, jnp.bfloat16

    # const slab (f32): base tokens (pos + cls@row0), ln_pre/post, per-layer LN params
    const = jnp.zeros((CONST_ROWS, WIDTH), f32)
    base = jnp.zeros((SEQ_PAD, WIDTH), f32).at[:SEQ].set(p["pos_emb"])
    base = base.at[0].add(p["class_emb"])
    const = const.at[BASE_OFF:BASE_OFF + SEQ_PAD].set(base)
    const = const.at[LNPRE_G].set(p["ln_pre_g"]).at[LNPRE_B].set(p["ln_pre_b"])
    const = const.at[LNPOST_G].set(p["ln_post_g"]).at[LNPOST_B].set(p["ln_post_b"])
    for l in range(LAYERS):
        r = LN_OFF + 4 * l
        const = (const.at[r + 0].set(p["ln1_g"][l]).at[r + 1].set(p["ln1_b"][l])
                      .at[r + 2].set(p["ln2_g"][l]).at[r + 3].set(p["ln2_b"][l]))

    # patch-embed + projection weights (bf16, one slab, proj lane-padded to 128)
    wep = jnp.zeros((CPP + WIDTH, OUT_PAD), f32)
    wep = wep.at[:CPP, :WIDTH].set(p["conv_w"].reshape(WIDTH, -1).T)
    wep = wep.at[CPP:, :EMBED].set(p["proj"])

    # attention weights: head-major Q/K/V blocks on 128-lane boundaries + wo (bf16);
    # matching head-major qkv bias plus bo / b1 / b2 in one f32 bias slab
    wattn = jnp.zeros((LAYERS, WIDTH, ATTN_W), f32)
    bias = jnp.zeros((LAYERS, 4, QKV_W), f32)
    for l in range(LAYERS):
        for hd in range(HEADS):
            for j, off in enumerate((0, WIDTH, 2 * WIDTH)):        # q, k, v column groups
                src = slice(off + hd * HEAD_DIM, off + (hd + 1) * HEAD_DIM)
                dst = (hd * 3 + j) * LANE
                wattn = wattn.at[l, :, dst:dst + HEAD_DIM].set(p["wqkv"][l][:, src])
                bias = bias.at[l, 0, dst:dst + HEAD_DIM].set(p["bqkv"][l][src])
        wattn = wattn.at[l, :, QKV_W:QKV_W + WIDTH].set(p["wo"][l])
        bias = (bias.at[l, 1, :WIDTH].set(p["bo"][l])
                    .at[l, 2, :MLP_DIM].set(p["b1"][l])
                    .at[l, 3, :WIDTH].set(p["b2"][l]))

    # MLP weights: w1 rows [0:W], w2 rows [W:W+MLP_DIM] (bf16, one slab)
    wmlp = jnp.zeros((LAYERS, WIDTH + MLP_DIM, MLP_DIM), f32)
    wmlp = wmlp.at[:, :WIDTH, :].set(p["w1"])
    wmlp = wmlp.at[:, WIDTH:, :WIDTH].set(p["w2"])

    return {"const": const, "bias": bias, "wep": wep.astype(bf16),
            "wattn": wattn.astype(bf16), "wmlp": wmlp.astype(bf16)}


# ---------------- forward (CLIP encode_image) ----------------
@jax.jit
def encode_image(image, packed):
    B = image.shape[0]
    # Non-overlapping patches, flattened in (C, Ph, Pw) order to match Conv2d weight
    # [width, C, Ph, Pw]; patch order (gh, gw) matches CLIP's reshape+permute.
    patches = image.reshape(B, CHANNELS, GRID_HW, PATCH, GRID_HW, PATCH)
    patches = patches.transpose(0, 2, 4, 1, 3, 5).reshape(B, NPATCH, CPP)
    # Place patch rows at token rows 1..NPATCH so the patch-embed matmul directly emits
    # the padded [SEQ_PAD, WIDTH] token layout (row 0 = cls slot, rows 5..7 = padding).
    patches_pad = jnp.zeros((B, SEQ_PAD, CPP), jnp.float32).at[:, 1:1 + NPATCH, :].set(patches)

    out = pl.pallas_call(
        clip_encode_kernel,
        out_shape=jax.ShapeDtypeStruct((B, 1, OUT_PAD), jnp.float32),
        grid=(B,),
        in_specs=[
            pl.BlockSpec((1, SEQ_PAD, CPP), lambda b: (b, 0, 0)),          # per-image patches
            pl.BlockSpec((CONST_ROWS, WIDTH), lambda b: (0, 0)),           # LN/pos/cls consts
            pl.BlockSpec((LAYERS, 4, QKV_W), lambda b: (0, 0, 0)),         # biases
            pl.BlockSpec((CPP + WIDTH, OUT_PAD), lambda b: (0, 0)),        # embed + proj (bf16)
            pl.BlockSpec((LAYERS, WIDTH, ATTN_W), lambda b: (0, 0, 0)),    # attention (bf16)
            pl.BlockSpec((LAYERS, WIDTH + MLP_DIM, MLP_DIM), lambda b: (0, 0, 0)),  # MLP (bf16)
        ],
        out_specs=pl.BlockSpec((1, 1, OUT_PAD), lambda b: (b, 0, 0)),
        compiler_params=pltpu.CompilerParams(dimension_semantics=("parallel",)),
    )(patches_pad, packed["const"], packed["bias"], packed["wep"],
      packed["wattn"], packed["wmlp"])

    return out[:, 0, :EMBED].astype(jnp.float32)                          # .to(torch.float32)


if __name__ == "__main__":
    key = jax.random.PRNGKey(0)
    k_img, k_par = jax.random.split(key)
    image = jax.random.normal(k_img, (BATCH, CHANNELS, IMAGE_SIZE, IMAGE_SIZE), jnp.float32)
    params = init_params(k_par)
    packed = pack_params(params)

    feats = encode_image(image, packed)
    feats = jax.block_until_ready(feats)
    assert feats.shape == (BATCH, EMBED) and feats.dtype == jnp.float32
    assert bool(jnp.all(jnp.isfinite(feats)))
    print("KERNEL_OK")
</pallas_src>

<mosaic_0001>
module attributes {stable_mosaic.version = 11 : i64} {
  func.func @clip_encode_kernel(%arg0: i32, %arg1: memref<1x8x192xf32, #tpu.memory_space<vmem>>, %arg2: memref<24x64xf32, #tpu.memory_space<vmem>>, %arg3: memref<2x4x768xf32, #tpu.memory_space<vmem>>, %arg4: memref<256x128xbf16, #tpu.memory_space<vmem>>, %arg5: memref<2x64x896xbf16, #tpu.memory_space<vmem>>, %arg6: memref<2x320x256xbf16, #tpu.memory_space<vmem>>, %arg7: memref<1x1x128xf32, #tpu.memory_space<vmem>>) attributes {dimension_semantics = [#tpu.dimension_semantics<parallel>], iteration_bounds = array<i64: 2>, scalar_prefetch = 0 : i64, scratch_operands = 0 : i64, tpu.core_type = #tpu.core_type<tc>, window_params = [{transform_indices = @transform_0, window_bounds = array<i64: 1, 8, 192>}, {pipeline_mode = #tpu.pipeline_mode<synchronous>, transform_indices = @transform_1, window_bounds = array<i64: 24, 64>}, {pipeline_mode = #tpu.pipeline_mode<synchronous>, transform_indices = @transform_2, window_bounds = array<i64: 2, 4, 768>}, {pipeline_mode = #tpu.pipeline_mode<synchronous>, transform_indices = @transform_3, window_bounds = array<i64: 256, 128>}, {pipeline_mode = #tpu.pipeline_mode<synchronous>, transform_indices = @transform_4, window_bounds = array<i64: 2, 64, 896>}, {pipeline_mode = #tpu.pipeline_mode<synchronous>, transform_indices = @transform_5, window_bounds = array<i64: 2, 320, 256>}, {transform_indices = @transform_6, window_bounds = array<i64: 1, 1, 128>}]} {
    %c0 = arith.constant 0 : index
    %c0_0 = arith.constant 0 : index
    %c0_1 = arith.constant 0 : index
    %0 = vector.load %arg1[%c0, %c0_0, %c0_1] : memref<1x8x192xf32, #tpu.memory_space<vmem>>, vector<1x8x192xf32>
    %1 = vector.shape_cast %0 : vector<1x8x192xf32> to vector<8x192xf32>
    %2 = arith.truncf %1 : vector<8x192xf32> to vector<8x192xbf16>
    %c0_2 = arith.constant 0 : index
    %c0_3 = arith.constant 0 : index
    %3 = vector.load %arg4[%c0_2, %c0_3] : memref<256x128xbf16, #tpu.memory_space<vmem>>, vector<192x64xbf16>
    %cst = arith.constant dense<0.000000e+00> : vector<8x64xf32>
    %4 = tpu.matmul %2, %3, %cst {dimension_numbers = #tpu.dot_dimension_numbers<[1], [0], [0], [1], [0, 0, 1, 1], [], []>} : vector<8x192xbf16>, vector<192x64xbf16>, vector<8x64xf32> -> vector<8x64xf32>
    %c0_4 = arith.constant 0 : index
    %c0_5 = arith.constant 0 : index
    %5 = vector.load %arg2[%c0_4, %c0_5] : memref<24x64xf32, #tpu.memory_space<vmem>>, vector<8x64xf32>
    %6 = arith.addf %5, %4 : vector<8x64xf32>
    %c8 = arith.constant 8 : index
    %c0_6 = arith.constant 0 : index
    %7 = vector.load %arg2[%c8, %c0_6] : memref<24x64xf32, #tpu.memory_space<vmem>>, vector<1x64xf32>
    %c9 = arith.constant 9 : index
    %c0_7 = arith.constant 0 : index
    %8 = vector.load %arg2[%c9, %c0_7] : memref<24x64xf32, #tpu.memory_space<vmem>>, vector<1x64xf32>
    %cst_8 = arith.constant dense<0.000000e+00> : vector<8xf32>
    %9 = vector.multi_reduction <add>, %6, %cst_8 [1] : vector<8x64xf32> to vector<8xf32>
    %10 = vector.shape_cast %9 : vector<8xf32> to vector<8x1xf32>
    %cst_9 = arith.constant 6.400000e+01 : f32
    %11 = vector.broadcast %cst_9 : f32 to vector<8x1xf32>
    %12 = arith.divf %10, %11 : vector<8x1xf32>
    %13 = vector.broadcast %12 : vector<8x1xf32> to vector<8x64xf32>
    %14 = arith.subf %6, %13 : vector<8x64xf32>
    %15 = arith.mulf %14, %14 : vector<8x64xf32>
    %cst_10 = arith.constant dense<0.000000e+00> : vector<8xf32>
    %16 = vector.multi_reduction <add>, %15, %cst_10 [1] : vector<8x64xf32> to vector<8xf32>
    %17 = vector.shape_cast %16 : vector<8xf32> to vector<8x1xf32>
    %cst_11 = arith.constant 6.400000e+01 : f32
    %18 = vector.broadcast %cst_11 : f32 to vector<8x1xf32>
    %19 = arith.divf %17, %18 : vector<8x1xf32>
    %20 = vector.broadcast %12 : vector<8x1xf32> to vector<8x64xf32>
    %21 = arith.subf %6, %20 : vector<8x64xf32>
    %cst_12 = arith.constant 9.99999974E-6 : f32
    %22 = vector.broadcast %cst_12 : f32 to vector<8x1xf32>
    %23 = arith.addf %19, %22 : vector<8x1xf32>
    %24 = math.rsqrt %23 : vector<8x1xf32>
    %25 = vector.broadcast %24 : vector<8x1xf32> to vector<8x64xf32>
    %26 = arith.mulf %21, %25 : vector<8x64xf32>
    %27 = vector.broadcast %7 : vector<1x64xf32> to vector<8x64xf32>
    %28 = arith.mulf %26, %27 : vector<8x64xf32>
    %29 = vector.broadcast %8 : vector<1x64xf32> to vector<8x64xf32>
    %30 = arith.addf %28, %29 : vector<8x64xf32>
    %31 = tpu.iota {dimensions = array<i32: 1>} : vector<1x8xi32>
    %c5_i32 = arith.constant 5 : i32
    %32 = vector.broadcast %c5_i32 : i32 to vector<1x8xi32>
    %33 = arith.cmpi slt, %31, %32 : vector<1x8xi32>
    %cst_13 = arith.constant 0.000000e+00 : f32
    %cst_14 = arith.constant -1.000000e+30 : f32
    %34 = vector.broadcast %cst_13 : f32 to vector<1x8xf32>
    %35 = vector.broadcast %cst_14 : f32 to vector<1x8xf32>
    %36 = arith.select %33, %34, %35 : vector<1x8xi1>, vector<1x8xf32>
    %c12 = arith.constant 12 : index
    %c0_15 = arith.constant 0 : index
    %37 = vector.load %arg2[%c12, %c0_15] : memref<24x64xf32, #tpu.memory_space<vmem>>, vector<1x64xf32>
    %c13 = arith.constant 13 : index
    %c0_16 = arith.constant 0 : index
    %38 = vector.load %arg2[%c13, %c0_16] : memref<24x64xf32, #tpu.memory_space<vmem>>, vector<1x64xf32>
    %cst_17 = arith.constant dense<0.000000e+00> : vector<8xf32>
    %39 = vector.multi_reduction <add>, %30, %cst_17 [1] : vector<8x64xf32> to vector<8xf32>
    %40 = vector.shape_cast %39 : vector<8xf32> to vector<8x1xf32>
    %cst_18 = arith.constant 6.400000e+01 : f32
    %41 = vector.broadcast %cst_18 : f32 to vector<8x1xf32>
    %42 = arith.divf %40, %41 : vector<8x1xf32>
    %43 = vector.broadcast %42 : vector<8x1xf32> to vector<8x64xf32>
    %44 = arith.subf %30, %43 : vector<8x64xf32>
    %45 = arith.mulf %44, %44 : vector<8x64xf32>
    %cst_19 = arith.constant dense<0.000000e+00> : vector<8xf32>
    %46 = vector.multi_reduction <add>, %45, %cst_19 [1] : vector<8x64xf32> to vector<8xf32>
    %47 = vector.shape_cast %46 : vector<8xf32> to vector<8x1xf32>
    %cst_20 = arith.constant 6.400000e+01 : f32
    %48 = vector.broadcast %cst_20 : f32 to vector<8x1xf32>
    %49 = arith.divf %47, %48 : vector<8x1xf32>
    %50 = vector.broadcast %42 : vector<8x1xf32> to vector<8x64xf32>
    %51 = arith.subf %30, %50 : vector<8x64xf32>
    %cst_21 = arith.constant 9.99999974E-6 : f32
    %52 = vector.broadcast %cst_21 : f32 to vector<8x1xf32>
    %53 = arith.addf %49, %52 : vector<8x1xf32>
    %54 = math.rsqrt %53 : vector<8x1xf32>
    %55 = vector.broadcast %54 : vector<8x1xf32> to vector<8x64xf32>
    %56 = arith.mulf %51, %55 : vector<8x64xf32>
    %57 = vector.broadcast %37 : vector<1x64xf32> to vector<8x64xf32>
    %58 = arith.mulf %56, %57 : vector<8x64xf32>
    %59 = vector.broadcast %38 : vector<1x64xf32> to vector<8x64xf32>
    %60 = arith.addf %58, %59 : vector<8x64xf32>
    %61 = arith.truncf %60 : vector<8x64xf32> to vector<8x64xbf16>
    %c0_22 = arith.constant 0 : index
    %c0_23 = arith.constant 0 : index
    %c0_24 = arith.constant 0 : index
    %62 = vector.load %arg5[%c0_22, %c0_23, %c0_24] : memref<2x64x896xbf16, #tpu.memory_space<vmem>>, vector<1x64x768xbf16>
    %63 = vector.shape_cast %62 : vector<1x64x768xbf16> to vector<64x768xbf16>
    %cst_25 = arith.constant dense<0.000000e+00> : vector<8x768xf32>
    %64 = tpu.matmul %61, %63, %cst_25 {dimension_numbers = #tpu.dot_dimension_numbers<[1], [0], [0], [1], [0, 0, 1, 1], [], []>} : vector<8x64xbf16>, vector<64x768xbf16>, vector<8x768xf32> -> vector<8x768xf32>
    %c0_26 = arith.constant 0 : index
    %c0_27 = arith.constant 0 : index
    %c0_28 = arith.constant 0 : index
    %65 = vector.load %arg3[%c0_26, %c0_27, %c0_28] : memref<2x4x768xf32, #tpu.memory_space<vmem>>, vector<1x1x768xf32>
    %66 = vector.shape_cast %65 : vector<1x1x768xf32> to vector<1x768xf32>
    %67 = vector.broadcast %66 : vector<1x768xf32> to vector<8x768xf32>
    %68 = arith.addf %64, %67 : vector<8x768xf32>
    %cst_29 = arith.constant 0.000000e+00 : f32
    %69 = vector.broadcast %cst_29 : f32 to vector<8x64xf32>
    %70 = vector.extract_strided_slice %68 {offsets = [0, 0], sizes = [8, 128], strides = [1, 1]} : vector<8x768xf32> to vector<8x128xf32>
    %cst_30 = arith.constant 0.176776692 : f32
    %71 = vector.broadcast %cst_30 : f32 to vector<8x128xf32>
    %72 = arith.mulf %70, %71 : vector<8x128xf32>
    %73 = vector.extract_strided_slice %68 {offsets = [0, 128], sizes = [8, 128], strides = [1, 1]} : vector<8x768xf32> to vector<8x128xf32>
    %74 = vector.extract_strided_slice %68 {offsets = [0, 256], sizes = [8, 32], strides = [1, 1]} : vector<8x768xf32> to vector<8x32xf32>
    %cst_31 = arith.constant dense<0.000000e+00> : vector<8x8xf32>
    %75 = tpu.matmul %72, %73, %cst_31 {dimension_numbers = #tpu.dot_dimension_numbers<[1], [1], [0], [0], [0, 0, 1, 0], [], []>} : vector<8x128xf32>, vector<8x128xf32>, vector<8x8xf32> -> vector<8x8xf32>
    %76 = vector.broadcast %36 : vector<1x8xf32> to vector<8x8xf32>
    %77 = arith.addf %75, %76 : vector<8x8xf32>
    %78 = math.exp %77 : vector<8x8xf32>
    %cst_32 = arith.constant dense<0.000000e+00> : vector<8xf32>
    %79 = vector.multi_reduction <add>, %78, %cst_32 [1] : vector<8x8xf32> to vector<8xf32>
    %80 = vector.shape_cast %79 : vector<8xf32> to vector<8x1xf32>
    %81 = tpu.reciprocal %80 {approx = true} : vector<8x1xf32> -> vector<8x1xf32>
    %82 = vector.broadcast %81 : vector<8x1xf32> to vector<8x8xf32>
    %83 = arith.mulf %78, %82 : vector<8x8xf32>
    %cst_33 = arith.constant dense<0.000000e+00> : vector<8x32xf32>
    %84 = tpu.matmul %83, %74, %cst_33 {dimension_numbers = #tpu.dot_dimension_numbers<[1], [0], [0], [1], [0, 0, 1, 1], [], []>} : vector<8x8xf32>, vector<8x32xf32>, vector<8x32xf32> -> vector<8x32xf32>
    %c0_34 = arith.constant 0 : index
    %c0_35 = arith.constant 0 : index
    %c768 = arith.constant 768 : index
    %85 = vector.load %arg5[%c0_34, %c0_35, %c768] : memref<2x64x896xbf16, #tpu.memory_space<vmem>>, vector<1x32x64xbf16>
    %86 = vector.shape_cast %85 : vector<1x32x64xbf16> to vector<32x64xbf16>
    %87 = arith.truncf %84 : vector<8x32xf32> to vector<8x32xbf16>
    %cst_36 = arith.constant dense<0.000000e+00> : vector<8x64xf32>
    %88 = tpu.matmul %87, %86, %cst_36 {dimension_numbers = #tpu.dot_dimension_numbers<[1], [0], [0], [1], [0, 0, 1, 1], [], []>} : vector<8x32xbf16>, vector<32x64xbf16>, vector<8x64xf32> -> vector<8x64xf32>
    %89 = arith.addf %69, %88 : vector<8x64xf32>
    %90 = vector.extract_strided_slice %68 {offsets = [0, 384], sizes = [8, 128], strides = [1, 1]} : vector<8x768xf32> to vector<8x128xf32>
    %cst_37 = arith.constant 0.176776692 : f32
    %91 = vector.broadcast %cst_37 : f32 to vector<8x128xf32>
    %92 = arith.mulf %90, %91 : vector<8x128xf32>
    %93 = vector.extract_strided_slice %68 {offsets = [0, 512], sizes = [8, 128], strides = [1, 1]} : vector<8x768xf32> to vector<8x128xf32>
    %94 = vector.extract_strided_slice %68 {offsets = [0, 640], sizes = [8, 32], strides = [1, 1]} : vector<8x768xf32> to vector<8x32xf32>
    %cst_38 = arith.constant dense<0.000000e+00> : vector<8x8xf32>
    %95 = tpu.matmul %92, %93, %cst_38 {dimension_numbers = #tpu.dot_dimension_numbers<[1], [1], [0], [0], [0, 0, 1, 0], [], []>} : vector<8x128xf32>, vector<8x128xf32>, vector<8x8xf32> -> vector<8x8xf32>
    %96 = vector.broadcast %36 : vector<1x8xf32> to vector<8x8xf32>
    %97 = arith.addf %95, %96 : vector<8x8xf32>
    %98 = math.exp %97 : vector<8x8xf32>
    %cst_39 = arith.constant dense<0.000000e+00> : vector<8xf32>
    %99 = vector.multi_reduction <add>, %98, %cst_39 [1] : vector<8x8xf32> to vector<8xf32>
    %100 = vector.shape_cast %99 : vector<8xf32> to vector<8x1xf32>
    %101 = tpu.reciprocal %100 {approx = true} : vector<8x1xf32> -> vector<8x1xf32>
    %102 = vector.broadcast %101 : vector<8x1xf32> to vector<8x8xf32>
    %103 = arith.mulf %98, %102 : vector<8x8xf32>
    %cst_40 = arith.constant dense<0.000000e+00> : vector<8x32xf32>
    %104 = tpu.matmul %103, %94, %cst_40 {dimension_numbers = #tpu.dot_dimension_numbers<[1], [0], [0], [1], [0, 0, 1, 1], [], []>} : vector<8x8xf32>, vector<8x32xf32>, vector<8x32xf32> -> vector<8x32xf32>
    %c0_41 = arith.constant 0 : index
    %c32 = arith.constant 32 : index
    %c768_42 = arith.constant 768 : index
    %105 = vector.load %arg5[%c0_41, %c32, %c768_42] : memref<2x64x896xbf16, #tpu.memory_space<vmem>>, vector<1x32x64xbf16>
    %106 = vector.shape_cast %105 : vector<1x32x64xbf16> to vector<32x64xbf16>
    %107 = arith.truncf %104 : vector<8x32xf32> to vector<8x32xbf16>
    %cst_43 = arith.constant dense<0.000000e+00> : vector<8x64xf32>
    %108 = tpu.matmul %107, %106, %cst_43 {dimension_numbers = #tpu.dot_dimension_numbers<[1], [0], [0], [1], [0, 0, 1, 1], [], []>} : vector<8x32xbf16>, vector<32x64xbf16>, vector<8x64xf32> -> vector<8x64xf32>
    %109 = arith.addf %89, %108 : vector<8x64xf32>
    %110 = arith.addf %30, %109 : vector<8x64xf32>
    %c0_44 = arith.constant 0 : index
    %c1 = arith.constant 1 : index
    %c0_45 = arith.constant 0 : index
    %111 = vector.load %arg3[%c0_44, %c1, %c0_45] : memref<2x4x768xf32, #tpu.memory_space<vmem>>, vector<1x1x64xf32>
    %112 = vector.shape_cast %111 : vector<1x1x64xf32> to vector<1x64xf32>
    %113 = vector.broadcast %112 : vector<1x64xf32> to vector<8x64xf32>
    %114 = arith.addf %110, %113 : vector<8x64xf32>
    %c14 = arith.constant 14 : index
    %c0_46 = arith.constant 0 : index
    %115 = vector.load %arg2[%c14, %c0_46] : memref<24x64xf32, #tpu.memory_space<vmem>>, vector<1x64xf32>
    %c15 = arith.constant 15 : index
    %c0_47 = arith.constant 0 : index
    %116 = vector.load %arg2[%c15, %c0_47] : memref<24x64xf32, #tpu.memory_space<vmem>>, vector<1x64xf32>
    %cst_48 = arith.constant dense<0.000000e+00> : vector<8xf32>
    %117 = vector.multi_reduction <add>, %114, %cst_48 [1] : vector<8x64xf32> to vector<8xf32>
    %118 = vector.shape_cast %117 : vector<8xf32> to vector<8x1xf32>
    %cst_49 = arith.constant 6.400000e+01 : f32
    %119 = vector.broadcast %cst_49 : f32 to vector<8x1xf32>
    %120 = arith.divf %118, %119 : vector<8x1xf32>
    %121 = vector.broadcast %120 : vector<8x1xf32> to vector<8x64xf32>
    %122 = arith.subf %114, %121 : vector<8x64xf32>
    %123 = arith.mulf %122, %122 : vector<8x64xf32>
    %cst_50 = arith.constant dense<0.000000e+00> : vector<8xf32>
    %124 = vector.multi_reduction <add>, %123, %cst_50 [1] : vector<8x64xf32> to vector<8xf32>
    %125 = vector.shape_cast %124 : vector<8xf32> to vector<8x1xf32>
    %cst_51 = arith.constant 6.400000e+01 : f32
    %126 = vector.broadcast %cst_51 : f32 to vector<8x1xf32>
    %127 = arith.divf %125, %126 : vector<8x1xf32>
    %128 = vector.broadcast %120 : vector<8x1xf32> to vector<8x64xf32>
    %129 = arith.subf %114, %128 : vector<8x64xf32>
    %cst_52 = arith.constant 9.99999974E-6 : f32
    %130 = vector.broadcast %cst_52 : f32 to vector<8x1xf32>
    %131 = arith.addf %127, %130 : vector<8x1xf32>
    %132 = math.rsqrt %131 : vector<8x1xf32>
    %133 = vector.broadcast %132 : vector<8x1xf32> to vector<8x64xf32>
    %134 = arith.mulf %129, %133 : vector<8x64xf32>
    %135 = vector.broadcast %115 : vector<1x64xf32> to vector<8x64xf32>
    %136 = arith.mulf %134, %135 : vector<8x64xf32>
    %137 = vector.broadcast %116 : vector<1x64xf32> to vector<8x64xf32>
    %138 = arith.addf %136, %137 : vector<8x64xf32>
    %139 = arith.truncf %138 : vector<8x64xf32> to vector<8x64xbf16>
    %c0_53 = arith.constant 0 : index
    %c0_54 = arith.constant 0 : index
    %c0_55 = arith.constant 0 : index
    %140 = vector.load %arg6[%c0_53, %c0_54, %c0_55] : memref<2x320x256xbf16, #tpu.memory_space<vmem>>, vector<1x64x256xbf16>
    %141 = vector.shape_cast %140 : vector<1x64x256xbf16> to vector<64x256xbf16>
    %cst_56 = arith.constant dense<0.000000e+00> : vector<8x256xf32>
    %142 = tpu.matmul %139, %141, %cst_56 {dimension_numbers = #tpu.dot_dimension_numbers<[1], [0], [0], [1], [0, 0, 1, 1], [], []>} : vector<8x64xbf16>, vector<64x256xbf16>, vector<8x256xf32> -> vector<8x256xf32>
    %c0_57 = arith.constant 0 : index
    %c2 = arith.constant 2 : index
    %c0_58 = arith.constant 0 : index
    %143 = vector.load %arg3[%c0_57, %c2, %c0_58] : memref<2x4x768xf32, #tpu.memory_space<vmem>>, vector<1x1x256xf32>
    %144 = vector.shape_cast %143 : vector<1x1x256xf32> to vector<1x256xf32>
    %145 = vector.broadcast %144 : vector<1x256xf32> to vector<8x256xf32>
    %146 = arith.addf %142, %145 : vector<8x256xf32>
    %cst_59 = arith.constant 1.702000e+00 : f32
    %147 = vector.broadcast %cst_59 : f32 to vector<8x256xf32>
    %148 = arith.mulf %147, %146 : vector<8x256xf32>
    %149 = arith.negf %148 : vector<8x256xf32>
    %150 = math.exp %149 : vector<8x256xf32>
    %cst_60 = arith.constant 1.000000e+00 : f32
    %151 = vector.broadcast %cst_60 : f32 to vector<8x256xf32>
    %152 = arith.addf %151, %150 : vector<8x256xf32>
    %153 = arith.divf %151, %152 : vector<8x256xf32>
    %154 = arith.mulf %146, %153 : vector<8x256xf32>
    %155 = arith.truncf %154 : vector<8x256xf32> to vector<8x256xbf16>
    %c0_61 = arith.constant 0 : index
    %c64 = arith.constant 64 : index
    %c0_62 = arith.constant 0 : index
    %156 = vector.load %arg6[%c0_61, %c64, %c0_62] : memref<2x320x256xbf16, #tpu.memory_space<vmem>>, vector<1x256x64xbf16>
    %157 = vector.shape_cast %156 : vector<1x256x64xbf16> to vector<256x64xbf16>
    %cst_63 = arith.constant dense<0.000000e+00> : vector<8x64xf32>
    %158 = tpu.matmul %155, %157, %cst_63 {dimension_numbers = #tpu.dot_dimension_numbers<[1], [0], [0], [1], [0, 0, 1, 1], [], []>} : vector<8x256xbf16>, vector<256x64xbf16>, vector<8x64xf32> -> vector<8x64xf32>
    %c0_64 = arith.constant 0 : index
    %c3 = arith.constant 3 : index
    %c0_65 = arith.constant 0 : index
    %159 = vector.load %arg3[%c0_64, %c3, %c0_65] : memref<2x4x768xf32, #tpu.memory_space<vmem>>, vector<1x1x64xf32>
    %160 = vector.shape_cast %159 : vector<1x1x64xf32> to vector<1x64xf32>
    %161 = vector.broadcast %160 : vector<1x64xf32> to vector<8x64xf32>
    %162 = arith.addf %158, %161 : vector<8x64xf32>
    %163 = arith.addf %114, %162 : vector<8x64xf32>
    %c16 = arith.constant 16 : index
    %c0_66 = arith.constant 0 : index
    %164 = vector.load %arg2[%c16, %c0_66] : memref<24x64xf32, #tpu.memory_space<vmem>>, vector<1x64xf32>
    %c17 = arith.constant 17 : index
    %c0_67 = arith.constant 0 : index
    %165 = vector.load %arg2[%c17, %c0_67] : memref<24x64xf32, #tpu.memory_space<vmem>>, vector<1x64xf32>
    %cst_68 = arith.constant dense<0.000000e+00> : vector<8xf32>
    %166 = vector.multi_reduction <add>, %163, %cst_68 [1] : vector<8x64xf32> to vector<8xf32>
    %167 = vector.shape_cast %166 : vector<8xf32> to vector<8x1xf32>
    %cst_69 = arith.constant 6.400000e+01 : f32
    %168 = vector.broadcast %cst_69 : f32 to vector<8x1xf32>
    %169 = arith.divf %167, %168 : vector<8x1xf32>
    %170 = vector.broadcast %169 : vector<8x1xf32> to vector<8x64xf32>
    %171 = arith.subf %163, %170 : vector<8x64xf32>
    %172 = arith.mulf %171, %171 : vector<8x64xf32>
    %cst_70 = arith.constant dense<0.000000e+00> : vector<8xf32>
    %173 = vector.multi_reduction <add>, %172, %cst_70 [1] : vector<8x64xf32> to vector<8xf32>
    %174 = vector.shape_cast %173 : vector<8xf32> to vector<8x1xf32>
    %cst_71 = arith.constant 6.400000e+01 : f32
    %175 = vector.broadcast %cst_71 : f32 to vector<8x1xf32>
    %176 = arith.divf %174, %175 : vector<8x1xf32>
    %177 = vector.broadcast %169 : vector<8x1xf32> to vector<8x64xf32>
    %178 = arith.subf %163, %177 : vector<8x64xf32>
    %cst_72 = arith.constant 9.99999974E-6 : f32
    %179 = vector.broadcast %cst_72 : f32 to vector<8x1xf32>
    %180 = arith.addf %176, %179 : vector<8x1xf32>
    %181 = math.rsqrt %180 : vector<8x1xf32>
    %182 = vector.broadcast %181 : vector<8x1xf32> to vector<8x64xf32>
    %183 = arith.mulf %178, %182 : vector<8x64xf32>
    %184 = vector.broadcast %164 : vector<1x64xf32> to vector<8x64xf32>
    %185 = arith.mulf %183, %184 : vector<8x64xf32>
    %186 = vector.broadcast %165 : vector<1x64xf32> to vector<8x64xf32>
    %187 = arith.addf %185, %186 : vector<8x64xf32>
    %188 = arith.truncf %187 : vector<8x64xf32> to vector<8x64xbf16>
    %c1_73 = arith.constant 1 : index
    %c0_74 = arith.constant 0 : index
    %c0_75 = arith.constant 0 : index
    %189 = vector.load %arg5[%c1_73, %c0_74, %c0_75] : memref<2x64x896xbf16, #tpu.memory_space<vmem>>, vector<1x64x768xbf16>
    %190 = vector.shape_cast %189 : vector<1x64x768xbf16> to vector<64x768xbf16>
    %cst_76 = arith.constant dense<0.000000e+00> : vector<8x768xf32>
    %191 = tpu.matmul %188, %190, %cst_76 {dimension_numbers = #tpu.dot_dimension_numbers<[1], [0], [0], [1], [0, 0, 1, 1], [], []>} : vector<8x64xbf16>, vector<64x768xbf16>, vector<8x768xf32> -> vector<8x768xf32>
    %c1_77 = arith.constant 1 : index
    %c0_78 = arith.constant 0 : index
    %c0_79 = arith.constant 0 : index
    %192 = vector.load %arg3[%c1_77, %c0_78, %c0_79] : memref<2x4x768xf32, #tpu.memory_space<vmem>>, vector<1x1x768xf32>
    %193 = vector.shape_cast %192 : vector<1x1x768xf32> to vector<1x768xf32>
    %194 = vector.broadcast %193 : vector<1x768xf32> to vector<8x768xf32>
    %195 = arith.addf %191, %194 : vector<8x768xf32>
    %cst_80 = arith.constant 0.000000e+00 : f32
    %196 = vector.broadcast %cst_80 : f32 to vector<8x64xf32>
    %197 = vector.extract_strided_slice %195 {offsets = [0, 0], sizes = [8, 128], strides = [1, 1]} : vector<8x768xf32> to vector<8x128xf32>
    %cst_81 = arith.constant 0.176776692 : f32
    %198 = vector.broadcast %cst_81 : f32 to vector<8x128xf32>
    %199 = arith.mulf %197, %198 : vector<8x128xf32>
    %200 = vector.extract_strided_slice %195 {offsets = [0, 128], sizes = [8, 128], strides = [1, 1]} : vector<8x768xf32> to vector<8x128xf32>
    %201 = vector.extract_strided_slice %195 {offsets = [0, 256], sizes = [8, 32], strides = [1, 1]} : vector<8x768xf32> to vector<8x32xf32>
    %cst_82 = arith.constant dense<0.000000e+00> : vector<8x8xf32>
    %202 = tpu.matmul %199, %200, %cst_82 {dimension_numbers = #tpu.dot_dimension_numbers<[1], [1], [0], [0], [0, 0, 1, 0], [], []>} : vector<8x128xf32>, vector<8x128xf32>, vector<8x8xf32> -> vector<8x8xf32>
    %203 = vector.broadcast %36 : vector<1x8xf32> to vector<8x8xf32>
    %204 = arith.addf %202, %203 : vector<8x8xf32>
    %205 = math.exp %204 : vector<8x8xf32>
    %cst_83 = arith.constant dense<0.000000e+00> : vector<8xf32>
    %206 = vector.multi_reduction <add>, %205, %cst_83 [1] : vector<8x8xf32> to vector<8xf32>
    %207 = vector.shape_cast %206 : vector<8xf32> to vector<8x1xf32>
    %208 = tpu.reciprocal %207 {approx = true} : vector<8x1xf32> -> vector<8x1xf32>
    %209 = vector.broadcast %208 : vector<8x1xf32> to vector<8x8xf32>
    %210 = arith.mulf %205, %209 : vector<8x8xf32>
    %cst_84 = arith.constant dense<0.000000e+00> : vector<8x32xf32>
    %211 = tpu.matmul %210, %201, %cst_84 {dimension_numbers = #tpu.dot_dimension_numbers<[1], [0], [0], [1], [0, 0, 1, 1], [], []>} : vector<8x8xf32>, vector<8x32xf32>, vector<8x32xf32> -> vector<8x32xf32>
    %c1_85 = arith.constant 1 : index
    %c0_86 = arith.constant 0 : index
    %c768_87 = arith.constant 768 : index
    %212 = vector.load %arg5[%c1_85, %c0_86, %c768_87] : memref<2x64x896xbf16, #tpu.memory_space<vmem>>, vector<1x32x64xbf16>
    %213 = vector.shape_cast %212 : vector<1x32x64xbf16> to vector<32x64xbf16>
    %214 = arith.truncf %211 : vector<8x32xf32> to vector<8x32xbf16>
    %cst_88 = arith.constant dense<0.000000e+00> : vector<8x64xf32>
    %215 = tpu.matmul %214, %213, %cst_88 {dimension_numbers = #tpu.dot_dimension_numbers<[1], [0], [0], [1], [0, 0, 1, 1], [], []>} : vector<8x32xbf16>, vector<32x64xbf16>, vector<8x64xf32> -> vector<8x64xf32>
    %216 = arith.addf %196, %215 : vector<8x64xf32>
    %217 = vector.extract_strided_slice %195 {offsets = [0, 384], sizes = [8, 128], strides = [1, 1]} : vector<8x768xf32> to vector<8x128xf32>
    %cst_89 = arith.constant 0.176776692 : f32
    %218 = vector.broadcast %cst_89 : f32 to vector<8x128xf32>
    %219 = arith.mulf %217, %218 : vector<8x128xf32>
    %220 = vector.extract_strided_slice %195 {offsets = [0, 512], sizes = [8, 128], strides = [1, 1]} : vector<8x768xf32> to vector<8x128xf32>
    %221 = vector.extract_strided_slice %195 {offsets = [0, 640], sizes = [8, 32], strides = [1, 1]} : vector<8x768xf32> to vector<8x32xf32>
    %cst_90 = arith.constant dense<0.000000e+00> : vector<8x8xf32>
    %222 = tpu.matmul %219, %220, %cst_90 {dimension_numbers = #tpu.dot_dimension_numbers<[1], [1], [0], [0], [0, 0, 1, 0], [], []>} : vector<8x128xf32>, vector<8x128xf32>, vector<8x8xf32> -> vector<8x8xf32>
    %223 = vector.broadcast %36 : vector<1x8xf32> to vector<8x8xf32>
    %224 = arith.addf %222, %223 : vector<8x8xf32>
    %225 = math.exp %224 : vector<8x8xf32>
    %cst_91 = arith.constant dense<0.000000e+00> : vector<8xf32>
    %226 = vector.multi_reduction <add>, %225, %cst_91 [1] : vector<8x8xf32> to vector<8xf32>
    %227 = vector.shape_cast %226 : vector<8xf32> to vector<8x1xf32>
    %228 = tpu.reciprocal %227 {approx = true} : vector<8x1xf32> -> vector<8x1xf32>
    %229 = vector.broadcast %228 : vector<8x1xf32> to vector<8x8xf32>
    %230 = arith.mulf %225, %229 : vector<8x8xf32>
    %cst_92 = arith.constant dense<0.000000e+00> : vector<8x32xf32>
    %231 = tpu.matmul %230, %221, %cst_92 {dimension_numbers = #tpu.dot_dimension_numbers<[1], [0], [0], [1], [0, 0, 1, 1], [], []>} : vector<8x8xf32>, vector<8x32xf32>, vector<8x32xf32> -> vector<8x32xf32>
    %c1_93 = arith.constant 1 : index
    %c32_94 = arith.constant 32 : index
    %c768_95 = arith.constant 768 : index
    %232 = vector.load %arg5[%c1_93, %c32_94, %c768_95] : memref<2x64x896xbf16, #tpu.memory_space<vmem>>, vector<1x32x64xbf16>
    %233 = vector.shape_cast %232 : vector<1x32x64xbf16> to vector<32x64xbf16>
    %234 = arith.truncf %231 : vector<8x32xf32> to vector<8x32xbf16>
    %cst_96 = arith.constant dense<0.000000e+00> : vector<8x64xf32>
    %235 = tpu.matmul %234, %233, %cst_96 {dimension_numbers = #tpu.dot_dimension_numbers<[1], [0], [0], [1], [0, 0, 1, 1], [], []>} : vector<8x32xbf16>, vector<32x64xbf16>, vector<8x64xf32> -> vector<8x64xf32>
    %236 = arith.addf %216, %235 : vector<8x64xf32>
    %237 = arith.addf %163, %236 : vector<8x64xf32>
    %c1_97 = arith.constant 1 : index
    %c1_98 = arith.constant 1 : index
    %c0_99 = arith.constant 0 : index
    %238 = vector.load %arg3[%c1_97, %c1_98, %c0_99] : memref<2x4x768xf32, #tpu.memory_space<vmem>>, vector<1x1x64xf32>
    %239 = vector.shape_cast %238 : vector<1x1x64xf32> to vector<1x64xf32>
    %240 = vector.broadcast %239 : vector<1x64xf32> to vector<8x64xf32>
    %241 = arith.addf %237, %240 : vector<8x64xf32>
    %c18 = arith.constant 18 : index
    %c0_100 = arith.constant 0 : index
    %242 = vector.load %arg2[%c18, %c0_100] : memref<24x64xf32, #tpu.memory_space<vmem>>, vector<1x64xf32>
    %c19 = arith.constant 19 : index
    %c0_101 = arith.constant 0 : index
    %243 = vector.load %arg2[%c19, %c0_101] : memref<24x64xf32, #tpu.memory_space<vmem>>, vector<1x64xf32>
    %cst_102 = arith.constant dense<0.000000e+00> : vector<8xf32>
    %244 = vector.multi_reduction <add>, %241, %cst_102 [1] : vector<8x64xf32> to vector<8xf32>
    %245 = vector.shape_cast %244 : vector<8xf32> to vector<8x1xf32>
    %cst_103 = arith.constant 6.400000e+01 : f32
    %246 = vector.broadcast %cst_103 : f32 to vector<8x1xf32>
    %247 = arith.divf %245, %246 : vector<8x1xf32>
    %248 = vector.broadcast %247 : vector<8x1xf32> to vector<8x64xf32>
    %249 = arith.subf %241, %248 : vector<8x64xf32>
    %250 = arith.mulf %249, %249 : vector<8x64xf32>
    %cst_104 = arith.constant dense<0.000000e+00> : vector<8xf32>
    %251 = vector.multi_reduction <add>, %250, %cst_104 [1] : vector<8x64xf32> to vector<8xf32>
    %252 = vector.shape_cast %251 : vector<8xf32> to vector<8x1xf32>
    %cst_105 = arith.constant 6.400000e+01 : f32
    %253 = vector.broadcast %cst_105 : f32 to vector<8x1xf32>
    %254 = arith.divf %252, %253 : vector<8x1xf32>
    %255 = vector.broadcast %247 : vector<8x1xf32> to vector<8x64xf32>
    %256 = arith.subf %241, %255 : vector<8x64xf32>
    %cst_106 = arith.constant 9.99999974E-6 : f32
    %257 = vector.broadcast %cst_106 : f32 to vector<8x1xf32>
    %258 = arith.addf %254, %257 : vector<8x1xf32>
    %259 = math.rsqrt %258 : vector<8x1xf32>
    %260 = vector.broadcast %259 : vector<8x1xf32> to vector<8x64xf32>
    %261 = arith.mulf %256, %260 : vector<8x64xf32>
    %262 = vector.broadcast %242 : vector<1x64xf32> to vector<8x64xf32>
    %263 = arith.mulf %261, %262 : vector<8x64xf32>
    %264 = vector.broadcast %243 : vector<1x64xf32> to vector<8x64xf32>
    %265 = arith.addf %263, %264 : vector<8x64xf32>
    %266 = arith.truncf %265 : vector<8x64xf32> to vector<8x64xbf16>
    %c1_107 = arith.constant 1 : index
    %c0_108 = arith.constant 0 : index
    %c0_109 = arith.constant 0 : index
    %267 = vector.load %arg6[%c1_107, %c0_108, %c0_109] : memref<2x320x256xbf16, #tpu.memory_space<vmem>>, vector<1x64x256xbf16>
    %268 = vector.shape_cast %267 : vector<1x64x256xbf16> to vector<64x256xbf16>
    %cst_110 = arith.constant dense<0.000000e+00> : vector<8x256xf32>
    %269 = tpu.matmul %266, %268, %cst_110 {dimension_numbers = #tpu.dot_dimension_numbers<[1], [0], [0], [1], [0, 0, 1, 1], [], []>} : vector<8x64xbf16>, vector<64x256xbf16>, vector<8x256xf32> -> vector<8x256xf32>
    %c1_111 = arith.constant 1 : index
    %c2_112 = arith.constant 2 : index
    %c0_113 = arith.constant 0 : index
    %270 = vector.load %arg3[%c1_111, %c2_112, %c0_113] : memref<2x4x768xf32, #tpu.memory_space<vmem>>, vector<1x1x256xf32>
    %271 = vector.shape_cast %270 : vector<1x1x256xf32> to vector<1x256xf32>
    %272 = vector.broadcast %271 : vector<1x256xf32> to vector<8x256xf32>
    %273 = arith.addf %269, %272 : vector<8x256xf32>
    %cst_114 = arith.constant 1.702000e+00 : f32
    %274 = vector.broadcast %cst_114 : f32 to vector<8x256xf32>
    %275 = arith.mulf %274, %273 : vector<8x256xf32>
    %276 = arith.negf %275 : vector<8x256xf32>
    %277 = math.exp %276 : vector<8x256xf32>
    %cst_115 = arith.constant 1.000000e+00 : f32
    %278 = vector.broadcast %cst_115 : f32 to vector<8x256xf32>
    %279 = arith.addf %278, %277 : vector<8x256xf32>
    %280 = arith.divf %278, %279 : vector<8x256xf32>
    %281 = arith.mulf %273, %280 : vector<8x256xf32>
    %282 = arith.truncf %281 : vector<8x256xf32> to vector<8x256xbf16>
    %c1_116 = arith.constant 1 : index
    %c64_117 = arith.constant 64 : index
    %c0_118 = arith.constant 0 : index
    %283 = vector.load %arg6[%c1_116, %c64_117, %c0_118] : memref<2x320x256xbf16, #tpu.memory_space<vmem>>, vector<1x256x64xbf16>
    %284 = vector.shape_cast %283 : vector<1x256x64xbf16> to vector<256x64xbf16>
    %cst_119 = arith.constant dense<0.000000e+00> : vector<8x64xf32>
    %285 = tpu.matmul %282, %284, %cst_119 {dimension_numbers = #tpu.dot_dimension_numbers<[1], [0], [0], [1], [0, 0, 1, 1], [], []>} : vector<8x256xbf16>, vector<256x64xbf16>, vector<8x64xf32> -> vector<8x64xf32>
    %c1_120 = arith.constant 1 : index
    %c3_121 = arith.constant 3 : index
    %c0_122 = arith.constant 0 : index
    %286 = vector.load %arg3[%c1_120, %c3_121, %c0_122] : memref<2x4x768xf32, #tpu.memory_space<vmem>>, vector<1x1x64xf32>
    %287 = vector.shape_cast %286 : vector<1x1x64xf32> to vector<1x64xf32>
    %288 = vector.broadcast %287 : vector<1x64xf32> to vector<8x64xf32>
    %289 = arith.addf %285, %288 : vector<8x64xf32>
    %290 = arith.addf %241, %289 : vector<8x64xf32>
    %291 = vector.extract_strided_slice %290 {offsets = [0, 0], sizes = [1, 64], strides = [1, 1]} : vector<8x64xf32> to vector<1x64xf32>
    %c10 = arith.constant 10 : index
    %c0_123 = arith.constant 0 : index
    %292 = vector.load %arg2[%c10, %c0_123] : memref<24x64xf32, #tpu.memory_space<vmem>>, vector<1x64xf32>
    %c11 = arith.constant 11 : index
    %c0_124 = arith.constant 0 : index
    %293 = vector.load %arg2[%c11, %c0_124] : memref<24x64xf32, #tpu.memory_space<vmem>>, vector<1x64xf32>
    %cst_125 = arith.constant dense<0.000000e+00> : vector<1xf32>
    %294 = vector.multi_reduction <add>, %291, %cst_125 [1] : vector<1x64xf32> to vector<1xf32>
    %295 = vector.shape_cast %294 : vector<1xf32> to vector<1x1xf32>
    %cst_126 = arith.constant 6.400000e+01 : f32
    %296 = vector.broadcast %cst_126 : f32 to vector<1x1xf32>
    %297 = arith.divf %295, %296 : vector<1x1xf32>
    %298 = vector.broadcast %297 : vector<1x1xf32> to vector<1x64xf32>
    %299 = arith.subf %291, %298 : vector<1x64xf32>
    %300 = arith.mulf %299, %299 : vector<1x64xf32>
    %cst_127 = arith.constant dense<0.000000e+00> : vector<1xf32>
    %301 = vector.multi_reduction <add>, %300, %cst_127 [1] : vector<1x64xf32> to vector<1xf32>
    %302 = vector.shape_cast %301 : vector<1xf32> to vector<1x1xf32>
    %cst_128 = arith.constant 6.400000e+01 : f32
    %303 = vector.broadcast %cst_128 : f32 to vector<1x1xf32>
    %304 = arith.divf %302, %303 : vector<1x1xf32>
    %305 = vector.broadcast %297 : vector<1x1xf32> to vector<1x64xf32>
    %306 = arith.subf %291, %305 : vector<1x64xf32>
    %cst_129 = arith.constant 9.99999974E-6 : f32
    %307 = vector.broadcast %cst_129 : f32 to vector<1x1xf32>
    %308 = arith.addf %304, %307 : vector<1x1xf32>
    %309 = math.rsqrt %308 : vector<1x1xf32>
    %310 = vector.broadcast %309 : vector<1x1xf32> to vector<1x64xf32>
    %311 = arith.mulf %306, %310 : vector<1x64xf32>
    %312 = arith.mulf %311, %292 : vector<1x64xf32>
    %313 = arith.addf %312, %293 : vector<1x64xf32>
    %314 = arith.truncf %313 : vector<1x64xf32> to vector<1x64xbf16>
    %c192 = arith.constant 192 : index
    %c0_130 = arith.constant 0 : index
    %315 = vector.load %arg4[%c192, %c0_130] : memref<256x128xbf16, #tpu.memory_space<vmem>>, vector<64x128xbf16>
    %cst_131 = arith.constant dense<0.000000e+00> : vector<1x128xf32>
    %316 = tpu.matmul %314, %315, %cst_131 {dimension_numbers = #tpu.dot_dimension_numbers<[1], [0], [0], [1], [0, 0, 1, 1], [], []>} : vector<1x64xbf16>, vector<64x128xbf16>, vector<1x128xf32> -> vector<1x128xf32>
    %317 = vector.shape_cast %316 : vector<1x128xf32> to vector<1x1x128xf32>
    %c0_132 = arith.constant 0 : index
    %c0_133 = arith.constant 0 : index
    %c0_134 = arith.constant 0 : index
    %318 = vector.load %arg7[%c0_132, %c0_133, %c0_134] : memref<1x1x128xf32, #tpu.memory_space<vmem>>, vector<1x1x128xf32>
    tpu.vector_store %arg7[%c0_132, %c0_133, %c0_134], %317 {strides = array<i32>} : memref<1x1x128xf32, #tpu.memory_space<vmem>>, vector<1x1x128xf32>,
    return
  }
  func.func @transform_0(%arg0: i32) -> (i32, i32, i32) {
    %c0_i32 = arith.constant 0 : i32
    %c0_i32_0 = arith.constant 0 : i32
    %c0_i32_1 = arith.constant 0 : i32
    return %arg0, %c0_i32, %c0_i32_0 : i32, i32, i32
  }
  func.func @transform_1(%arg0: i32) -> (i32, i32) {
    %c0_i32 = arith.constant 0 : i32
    %c0_i32_0 = arith.constant 0 : i32
    %c0_i32_1 = arith.constant 0 : i32
    return %c0_i32, %c0_i32_0 : i32, i32
  }
  func.func @transform_2(%arg0: i32) -> (i32, i32, i32) {
    %c0_i32 = arith.constant 0 : i32
    %c0_i32_0 = arith.constant 0 : i32
    %c0_i32_1 = arith.constant 0 : i32
    %c0_i32_2 = arith.constant 0 : i32
    return %c0_i32, %c0_i32_0, %c0_i32_1 : i32, i32, i32
  }
  func.func @transform_3(%arg0: i32) -> (i32, i32) {
    %c0_i32 = arith.constant 0 : i32
    %c0_i32_0 = arith.constant 0 : i32
    %c0_i32_1 = arith.constant 0 : i32
    return %c0_i32, %c0_i32_0 : i32, i32
  }
  func.func @transform_4(%arg0: i32) -> (i32, i32, i32) {
    %c0_i32 = arith.constant 0 : i32
    %c0_i32_0 = arith.constant 0 : i32
    %c0_i32_1 = arith.constant 0 : i32
    %c0_i32_2 = arith.constant 0 : i32
    return %c0_i32, %c0_i32_0, %c0_i32_1 : i32, i32, i32
  }
  func.func @transform_5(%arg0: i32) -> (i32, i32, i32) {
    %c0_i32 = arith.constant 0 : i32
    %c0_i32_0 = arith.constant 0 : i32
    %c0_i32_1 = arith.constant 0 : i32
    %c0_i32_2 = arith.constant 0 : i32
    return %c0_i32, %c0_i32_0, %c0_i32_1 : i32, i32, i32
  }
  func.func @transform_6(%arg0: i32) -> (i32, i32, i32) {
    %c0_i32 = arith.constant 0 : i32
    %c0_i32_0 = arith.constant 0 : i32
    %c0_i32_1 = arith.constant 0 : i32
    return %arg0, %c0_i32, %c0_i32_0 : i32, i32, i32
  }
}

</mosaic_0001>

<llo_original>
// kernel: encode_image.1
$region0: #{encode_image.1}
  #allocation0 [shape = 'u32[]', space=smem, size = 0x4, offset = 0x4, fixed_abs, tag = 'smem constant byte address 0x4 - core index']
  #allocation1 [shape = 'u32[144,128]{1,0:T(1,128)}', space=vmem, size = 0x12000, scoped, tag = 'internal scratch']
  %s0 = inlined_call_operand.vmem [shape: f32[2,8,192], index: 0, kind: input, shape index: {}]
  %s1 = inlined_call_operand.vmem [shape: f32[24,64], index: 1, kind: input, shape index: {}]
  %s2 = inlined_call_operand.vmem [shape: f32[2,4,768], index: 2, kind: input, shape index: {}]
  %s3 = inlined_call_operand.vmem [shape: bf16[256,128], index: 3, kind: input, shape index: {}]
  %s4 = inlined_call_operand.hbm [shape: bf16[2,64,896], index: 4, kind: input, shape index: {}]
  %s5 = inlined_call_operand.vmem [shape: bf16[2,320,256], index: 5, kind: input, shape index: {}]
  %s6 = inlined_call_operand.hbm [shape: f32[2,1,128], index: 6, kind: output, shape index: {}]
  %s7 = sld [smem:[#allocation0]]
  $region61: #{encode_image.1} parent=0
    _
  %s9 = ssub.s32 1, %s7
  %s10 = scalar_select 0, %s9, %s7
  $region1: #{encode_image.1} parent=0
    #allocation2 [shape = 'u8[229376]{0}', space=vmem, size = 0x38000, scoped, tag = 'input window, operand 4, single buffered']
    #allocation3 [shape = 's32[2]{0}', space=sflag, size = 0x8, scoped, tag = 'scoped memory for encode_image.1']
    #allocation4 [shape = 's32[2]{0}', space=sflag, size = 0x8, scoped, tag = 'scoped memory for encode_image.1']
    #allocation5 [shape = 'u8[1024]{0}', space=vmem, size = 0x400, scoped, tag = 'output window, operand 0']
    %11 = vsyncpa [#allocation3], 0
    %12 = vsyncpa [#allocation4], 0
    %s13 = scalar_lea.sflag [#allocation4], 1
    %14 = vsyncpa %s13, 0
    loop: start=0, step=1, limit=4
    $region2: #{encode_image.1} parent=1 // loop_pre_header
      _
    $region3: #{encode_image.1} parent=1 // loop_header
      %s16 = sphi 0, %s20
      %p17 = scmp.ge.s32.totalorder %s16, 4
      %s26 = sphi 0, %s28
      %s29 = sphi 0, %s26
      %s30 = sphi 0, %s29
      %s46 = sphi 0, %s30
      %s50 = sphi 0, %s50
      %s52 = sphi 0, %s50
      %s53 = sphi 0, %s52
      %s67 = sphi 0, %s53
      %s71 = sphi 0, %s71
      %s73 = sphi 0, %s71
      %s74 = sphi 0, %s73
      %s88 = sphi 0, %s74
      %s92 = sphi 0, %s92
      %s94 = sphi 0, %s92
      %s95 = sphi 0, %s94
      %s109 = sphi 0, %s95
      %s113 = sphi 0, %s113
      %s115 = sphi 0, %s113
      %s116 = sphi 0, %s115
      %s130 = sphi 0, %s116
      %s134 = sphi 0, %s134
      %s136 = sphi 0, %s134
      %s137 = sphi 0, %s136
      %s151 = sphi 0, %s137
      %s157 = sphi 0, %s159
      %s160 = sphi 0, %s157
      %s161 = sphi 0, %s160
      %s177 = sphi 0, %s161
    $region4: #{encode_image.1} parent=1 // loop_header_branch
      %19 = sbr.rel (%p17) target = $region8
    $region5: #{encode_image.1} parent=1 // loop_body
      %s21 = ssub.s32 %s16, 1
      %s22 = ssub.s32 %s16, 2
      %s23 = sadd.s32 %s16, 1
      %s24 = ssub.s32 %s16, %s23
      %p25 = scmp.eq.s32.totalorder %s24, 0
      %s27 = sadd.s32 %s26, 1
      %s28 = scalar_select %p25, %s26, %s27
      %p31 = pneg %p25
      %p32 = scmp.eq.s32.totalorder %s16, 1
      %p33 = por %p31, %p32
      %p34 = scmp.ne.s32.totalorder %s26, %s29
      %p35 = scmp.eq.s32.totalorder %s16, 0
      %p36 = por %p34, %p35
      %p37 = scmp.ne.s32.totalorder %s26, %s29
      %p38 = scmp.eq.s32.totalorder %s21, 1
      %p39 = por %p37, %p38
      %p40 = scmp.ne.s32.totalorder %s29, %s30
      %p41 = scmp.eq.s32.totalorder %s21, 0
      %p42 = por %p40, %p41
      %p43 = scmp.ne.s32.totalorder %s29, %s30
      %p44 = scmp.eq.s32.totalorder %s22, 1
      %p45 = por %p43, %p44
      %p47 = scmp.ne.s32.totalorder %s30, %s46
      %p48 = scmp.eq.s32.totalorder %s22, 0
      %p49 = por %p47, %p48
      %s51 = sadd.s32 %s50, 1
      %p54 = scmp.eq.s32.totalorder %s16, 1
      %p55 = scmp.ne.s32.totalorder %s50, %s52
      %p56 = scmp.eq.s32.totalorder %s16, 0
      %p57 = por %p55, %p56
      %p58 = scmp.ne.s32.totalorder %s50, %s52
      %p59 = scmp.eq.s32.totalorder %s21, 1
      %p60 = por %p58, %p59
      %p61 = scmp.ne.s32.totalorder %s52, %s53
      %p62 = scmp.eq.s32.totalorder %s21, 0
      %p63 = por %p61, %p62
      %p64 = scmp.ne.s32.totalorder %s52, %s53
      %p65 = scmp.eq.s32.totalorder %s22, 1
      %p66 = por %p64, %p65
      %p68 = scmp.ne.s32.totalorder %s53, %s67
      %p69 = scmp.eq.s32.totalorder %s22, 0
      %p70 = por %p68, %p69
      %s72 = sadd.s32 %s71, 1
      %p75 = scmp.eq.s32.totalorder %s16, 1
      %p76 = scmp.ne.s32.totalorder %s71, %s73
      %p77 = scmp.eq.s32.totalorder %s16, 0
      %p78 = por %p76, %p77
      %p79 = scmp.ne.s32.totalorder %s71, %s73
      %p80 = scmp.eq.s32.totalorder %s21, 1
      %p81 = por %p79, %p80
      %p82 = scmp.ne.s32.totalorder %s73, %s74
      %p83 = scmp.eq.s32.totalorder %s21, 0
      %p84 = por %p82, %p83
      %p85 = scmp.ne.s32.totalorder %s73, %s74
      %p86 = scmp.eq.s32.totalorder %s22, 1
      %p87 = por %p85, %p86
      %p89 = scmp.ne.s32.totalorder %s74, %s88
      %p90 = scmp.eq.s32.totalorder %s22, 0
      %p91 = por %p89, %p90
      %s93 = sadd.s32 %s92, 1
      %p96 = scmp.eq.s32.totalorder %s16, 1
      %p97 = scmp.ne.s32.totalorder %s92, %s94
      %p98 = scmp.eq.s32.totalorder %s16, 0
      %p99 = por %p97, %p98
      %p100 = scmp.ne.s32.totalorder %s92, %s94
      %p101 = scmp.eq.s32.totalorder %s21, 1
      %p102 = por %p100, %p101
      %p103 = scmp.ne.s32.totalorder %s94, %s95
      %p104 = scmp.eq.s32.totalorder %s21, 0
      %p105 = por %p103, %p104
      %p106 = scmp.ne.s32.totalorder %s94, %s95
      %p107 = scmp.eq.s32.totalorder %s22, 1
      %p108 = por %p106, %p107
      %p110 = scmp.ne.s32.totalorder %s95, %s109
      %p111 = scmp.eq.s32.totalorder %s22, 0
      %p112 = por %p110, %p111
      %s114 = sadd.s32 %s113, 1
      %p117 = scmp.eq.s32.totalorder %s16, 1
      %p118 = scmp.ne.s32.totalorder %s113, %s115
      %p119 = scmp.eq.s32.totalorder %s16, 0
      %p120 = por %p118, %p119
      %p121 = scmp.ne.s32.totalorder %s113, %s115
      %p122 = scmp.eq.s32.totalorder %s21, 1
      %p123 = por %p121, %p122
      %p124 = scmp.ne.s32.totalorder %s115, %s116
      %p125 = scmp.eq.s32.totalorder %s21, 0
      %p126 = por %p124, %p125
      %p127 = scmp.ne.s32.totalorder %s115, %s116
      %p128 = scmp.eq.s32.totalorder %s22, 1
      %p129 = por %p127, %p128
      %p131 = scmp.ne.s32.totalorder %s116, %s130
      %p132 = scmp.eq.s32.totalorder %s22, 0
      %p133 = por %p131, %p132
      %s135 = sadd.s32 %s134, 1
      %p138 = scmp.eq.s32.totalorder %s16, 1
      %p139 = scmp.ne.s32.totalorder %s134, %s136
      %p140 = scmp.eq.s32.totalorder %s16, 0
      %p141 = por %p139, %p140
      %p142 = scmp.ne.s32.totalorder %s134, %s136
      %p143 = scmp.eq.s32.totalorder %s21, 1
      %p144 = por %p142, %p143
      %p145 = scmp.ne.s32.totalorder %s136, %s137
      %p146 = scmp.eq.s32.totalorder %s21, 0
      %p147 = por %p145, %p146
      %p148 = scmp.ne.s32.totalorder %s136, %s137
      %p149 = scmp.eq.s32.totalorder %s22, 1
      %p150 = por %p148, %p149
      %p152 = scmp.ne.s32.totalorder %s137, %s151
      %p153 = scmp.eq.s32.totalorder %s22, 0
      %p154 = por %p152, %p153
      %s155 = ssub.s32 %s16, %s23
      %p156 = scmp.eq.s32.totalorder %s155, 0
      %s158 = sadd.s32 %s157, 1
      %s159 = scalar_select %p156, %s157, %s158
      %p162 = pneg %p156
      %p163 = scmp.eq.s32.totalorder %s16, 1
      %p164 = por %p162, %p163
      %p165 = scmp.ne.s32.totalorder %s157, %s160
      %p166 = scmp.eq.s32.totalorder %s16, 0
      %p167 = por %p165, %p166
      %p168 = scmp.ne.s32.totalorder %s157, %s160
      %p169 = scmp.eq.s32.totalorder %s21, 1
      %p170 = por %p168, %p169
      %p171 = scmp.ne.s32.totalorder %s160, %s161
      %p172 = scmp.eq.s32.totalorder %s21, 0
      %p173 = por %p171, %p172
      %p174 = scmp.ne.s32.totalorder %s160, %s161
      %p175 = scmp.eq.s32.totalorder %s22, 1
      %p176 = por %p174, %p175
      %p178 = scmp.ne.s32.totalorder %s161, %s177
      %p179 = scmp.eq.s32.totalorder %s22, 0
      %p180 = por %p178, %p179
      %p181 = scmp.le.s32.totalorder 1, %s16
      %p182 = scmp.lt.s32.totalorder %s16, 3
      %p183 = pnand %p181, %p182
      %p184 = pneg %p183
      // Predicated region
      $region9: #{encode_image.1} parent=5 // pred_check
        _
      $region10: #{encode_image.1} parent=5 // pred_check_branch
        %186 = sbr.rel (%p183) target = $region12
      $region11: #{encode_image.1} parent=5 // pred_region
        %s187 = ssub.s32 %s16, 1
        // Predicated region
        $region13: #{encode_image.1} parent=11 // pred_check
          %p188 = pneg %p63
        $region14: #{encode_image.1} parent=11 // pred_check_branch
          %190 = sbr.rel (%p188) target = $region16
        $region15: #{encode_image.1} parent=11 // pred_region
          _
        $region16: #{encode_image.1} parent=11 // pred_fallthru
          _
        // Predicated region
        $region17: #{encode_image.1} parent=11 // pred_check
          %p191 = pneg %p84
        $region18: #{encode_image.1} parent=11 // pred_check_branch
          %193 = sbr.rel (%p191) target = $region20
        $region19: #{encode_image.1} parent=11 // pred_region
          _
        $region20: #{encode_image.1} parent=11 // pred_fallthru
          _
        // Predicated region
        $region21: #{encode_image.1} parent=11 // pred_check
          %p194 = pneg %p105
        $region22: #{encode_image.1} parent=11 // pred_check_branch
          %196 = sbr.rel (%p194) target = $region24
        $region23: #{encode_image.1} parent=11 // pred_region
          _
        $region24: #{encode_image.1} parent=11 // pred_fallthru
          _
        // Predicated region
        $region25: #{encode_image.1} parent=11 // pred_check
          %p197 = pneg %p126
        $region26: #{encode_image.1} parent=11 // pred_check_branch
          %199 = sbr.rel (%p197) target = $region28
        $region27: #{encode_image.1} parent=11 // pred_region
          %s201 = ssub.s32 7168, 7168
          %202 = vsyncadd [#allocation3], %s201
          %s203 = sshll.u32 [#allocation2], 4
          %s204 = int_to_ptr.vmem [resolvable:$true] %s203
          %209 = dma.hbm_to_vmem [thread:$0]  %s4, 7168, %s204, [#allocation3], 448, 448, 28
        $region28: #{encode_image.1} parent=11 // pred_fallthru
          _
        // Predicated region
        $region29: #{encode_image.1} parent=11 // pred_check
          %p210 = pneg %p147
        $region30: #{encode_image.1} parent=11 // pred_check_branch
          %212 = sbr.rel (%p210) target = $region32
        $region31: #{encode_image.1} parent=11 // pred_region
          _
        $region32: #{encode_image.1} parent=11 // pred_fallthru
          _
      $region12: #{encode_image.1} parent=5 // pred_fallthru
        _
      %p213 = scmp.lt.s32.totalorder %s16, 2
      // Predicated region
      $region33: #{encode_image.1} parent=5 // pred_check
        %p214 = pneg %p213
      $region34: #{encode_image.1} parent=5 // pred_check_branch
        %216 = sbr.rel (%p214) target = $region36
      $region35: #{encode_image.1} parent=5 // pred_region
        // Predicated region
        $region37: #{encode_image.1} parent=35 // pred_check
          %p217 = pneg %p36
        $region38: #{encode_image.1} parent=35 // pred_check_branch
          %219 = sbr.rel (%p217) target = $region40
        $region39: #{encode_image.1} parent=35 // pred_region
          %p220 = scmp.lt.s32.totalorder %s16, 1
          %s221 = scalar_select %p220, %s16, 1
          %s222 = smul.addr %s221, 2
          %s223 = smul.addr %s222, 8
          %s224 = scalar_lea.vmem %s0, %s223
        $region40: #{encode_image.1} parent=35 // pred_fallthru
          _
      $region36: #{encode_image.1} parent=5 // pred_fallthru
        _
      %p225 = scmp.le.s32.totalorder 1, %s16
      %p226 = scmp.lt.s32.totalorder %s16, 3
      %p227 = pnand %p225, %p226
      %p228 = pneg %p227
      // Predicated region
      $region41: #{encode_image.1} parent=5 // pred_check
        _
      $region42: #{encode_image.1} parent=5 // pred_check_branch
        %230 = sbr.rel (%p227) target = $region44
      $region43: #{encode_image.1} parent=5 // pred_region
        %s231 = ssub.s32 %s16, 1
        // Predicated region
        $region45: #{encode_image.1} parent=43 // pred_check
          %p232 = pneg %p126
        $region46: #{encode_image.1} parent=43 // pred_check_branch
          %234 = sbr.rel (%p232) target = $region48
        $region47: #{encode_image.1} parent=43 // pred_region
          %235 = dma.done [#allocation3], 7168
        $region48: #{encode_image.1} parent=43 // pred_fallthru
          _
        %p236 = scmp.lt.s32.totalorder %s21, 1
        %s237 = scalar_select %p236, %s21, 1
        %s238 = smul.addr %s237, 2
        %s239 = smul.addr %s238, 8
        %s240 = scalar_lea.vmem %s0, %s239
        %p241 = pneg %p42
        %p242 = pneg %p39
        %p243 = pneg %p63
        %p244 = pneg %p60
        %p245 = pneg %p84
        %p246 = pneg %p81
        %p247 = pneg %p105
        %p248 = pneg %p102
        %p249 = pneg %p126
        %p250 = pneg %p123
        %p251 = pneg %p147
        %p252 = pneg %p144
        %p253 = pneg %p173
        %p254 = pneg %p170
        %s255 = sand.u32 %s160, 1
        %s256 = scalar_lea.sflag [#allocation4], %s255
        %s257 = sand.u32 %s160, 1
        %s258 = scalar_lea.vmem [#allocation5], %s257
        %p259 = scmp.lt.s32.totalorder %s21, 1
        %s260 = scalar_select %p259, %s21, 1
        %s261 = smul.addr %s260, 2
        %s262 = smul.addr %s261, 8
        %s263 = scalar_lea.vmem %s0, %s262
        %v265 = vld [vmem:[%s263] sm:$0xff]
        %v266 = vld [vmem:[%s263 + $0x8] sm:$0xff]
        %v267 = vpack.c.bf16 %v265, %v265
        %v268 = vpack.c.bf16 %v266, %v266
        %v269 = vld [vmem:[%s3] sm:$0xf]
        %v270 = vld [vmem:[%s3 + $0x4] sm:$0xf]
        %v271 = vld [vmem:[%s3 + $0x8] sm:$0xf]
        %v272 = vld [vmem:[%s3 + $0xc] sm:$0xf]
        %v273 = vld [vmem:[%s3 + $0x10] sm:$0xf]
        %v274 = vld [vmem:[%s3 + $0x14] sm:$0xf]
        %v275 = vld [vmem:[%s3 + $0x18] sm:$0xf]
        %v276 = vld [vmem:[%s3 + $0x1c] sm:$0xf]
        %v277 = vld [vmem:[%s3 + $0x20] sm:$0xf]
        %v278 = vld [vmem:[%s3 + $0x24] sm:$0xf]
        %v279 = vld [vmem:[%s3 + $0x28] sm:$0xf]
        %v280 = vld [vmem:[%s3 + $0x2c] sm:$0xf]
        %v281 = vld [vmem:[%s3 + $0x30] sm:$0xf]
        %v282 = vld [vmem:[%s3 + $0x34] sm:$0xf]
        %v283 = vld [vmem:[%s3 + $0x38] sm:$0xf]
        %v284 = vld [vmem:[%s3 + $0x3c] sm:$0xf]
        %v285 = vld [vmem:[%s3 + $0x40] sm:$0xf]
        %v286 = vld [vmem:[%s3 + $0x44] sm:$0xf]
        %v287 = vld [vmem:[%s3 + $0x48] sm:$0xf]
        %v288 = vld [vmem:[%s3 + $0x4c] sm:$0xf]
        %v289 = vld [vmem:[%s3 + $0x50] sm:$0xf]
        %v290 = vld [vmem:[%s3 + $0x54] sm:$0xf]
        %v291 = vld [vmem:[%s3 + $0x58] sm:$0xf]
        %v292 = vld [vmem:[%s3 + $0x5c] sm:$0xf]
        %v317 = vunpack.c.l.b16 %v269
        %v318 = vunpack.c.l.b16 %v270
        %v319 = vunpack.c.l.b16 %v271
        %v320 = vunpack.c.l.b16 %v272
        %v321 = vunpack.c.l.b16 %v273
        %v322 = vunpack.c.l.b16 %v274
        %v323 = vunpack.c.l.b16 %v275
        %v324 = vunpack.c.l.b16 %v276
        %v325 = vunpack.c.l.b16 %v277
        %v326 = vunpack.c.l.b16 %v278
        %v327 = vunpack.c.l.b16 %v279
        %v328 = vunpack.c.l.b16 %v280
        %v329 = vunpack.c.l.b16 %v281
        %v330 = vunpack.c.l.b16 %v282
        %v331 = vunpack.c.l.b16 %v283
        %v332 = vunpack.c.l.b16 %v284
        %v333 = vunpack.c.l.b16 %v285
        %v334 = vunpack.c.l.b16 %v286
        %v335 = vunpack.c.l.b16 %v287
        %v336 = vunpack.c.l.b16 %v288
        %v337 = vunpack.c.l.b16 %v289
        %v338 = vunpack.c.l.b16 %v290
        %v339 = vunpack.c.l.b16 %v291
        %v340 = vunpack.c.l.b16 %v292
        %v341 = vpack.c.b16 %v318, %v317
        %v342 = vpack.c.b16 %v320, %v319
        %v343 = vpack.c.b16 %v322, %v321
        %v344 = vpack.c.b16 %v324, %v323
        %v345 = vpack.c.b16 %v326, %v325
        %v346 = vpack.c.b16 %v328, %v327
        %v347 = vpack.c.b16 %v330, %v329
        %v348 = vpack.c.b16 %v332, %v331
        %v349 = vpack.c.b16 %v334, %v333
        %v350 = vpack.c.b16 %v336, %v335
        %v351 = vpack.c.b16 %v338, %v337
        %v352 = vpack.c.b16 %v340, %v339
        %vm365 = vcmask 523264
        %v367 = vsel %vm365, %v268, 0
        %369 = vmatprep.subr.bf16.mxu0 0
        %370 = vmatpush1.bf16.msra.mxu0 %v341
        %371 = vmatprep.subr.bf16.mxu0 0
        %372 = vmatpush1.bf16.msra.mxu0 %v342
        %373 = vmatprep.subr.bf16.mxu0 0
        %374 = vmatpush1.bf16.msra.mxu0 %v343
        %375 = vmatprep.subr.bf16.mxu0 0
        %376 = vmatpush1.bf16.msra.mxu0 %v344
        %377 = vmatprep.subr.bf16.mxu0 0
        %378 = vmatpush1.bf16.msra.mxu0 %v345
        %379 = vmatprep.subr.bf16.mxu0 0
        %380 = vmatpush1.bf16.msra.mxu0 %v346
        %381 = vmatprep.subr.bf16.mxu0 0
        %382 = vmatpush1.bf16.msra.mxu0 %v347
        %383 = vmatprep.subr.bf16.mxu0 0
        %384 = vmatpush1.bf16.msra.mxu0 %v348
        %385 = vmatprep.subr.bf16.mxu0 0
        %386 = vmatpush1.bf16.msra.mxu0 %v349
        %387 = vmatprep.subr.bf16.mxu0 0
        %388 = vmatpush1.bf16.msra.mxu0 %v350
        %389 = vmatprep.subr.bf16.mxu0 0
        %390 = vmatpush1.bf16.msra.mxu0 %v351
        %391 = vmatprep.subr.bf16.mxu0 0
        %392 = vmatpush1.bf16.msra.mxu0 %v352
        %393 = vmatprep.subr.bf16.mxu0 0
        %394 = vmatpush1.bf16.msra.mxu0 0
        %395 = vmatprep.subr.bf16.mxu0 0
        %396 = vmatpush1.bf16.msra.mxu0 0
        %397 = vmatprep.subr.bf16.mxu0 0
        %398 = vmatpush1.bf16.msra.mxu0 0
        %399 = vmatprep.subr.bf16.mxu0 0
        %400 = vmatpush1.bf16.msra.mxu0 0
        %401 = vmatprep.mubr.bf16.mxu0 %v367
        %402 = vmatmul.mubr.bf16.gmra.mrb[0].mxu0 %v267
        %v403 = vpop.f32.mrb[0].mxu0
        %v404 = vadd.f32 0.0, %v403
        %v405 = vpop.f32.mrb[0].mxu0
        %v406 = vpop.f32.mrb[0].mxu0
        %v407 = vpop.f32.mrb[0].mxu0
        %408 = vdwg.mxu0
        %v409 = vld [vmem:[%s1] sm:$0xff]
        %v410 = vadd.f32 %v409, %v404
        %v411 = vld [vmem:[%s1 + $0x8] sm:$0x1]
        %v412 = vld [vmem:[%s1 + $0x9] sm:$0x1]
        %v413 = vsel %vm365, %v410, 0.0
        %414 = vadd.xlane.f32.xlu0 %v413
        %v415 = vpop.xlane.xlu0 %414
        %v416 = vrcp.pop 64.0
        %v417 = vmul.f32 %v415, %v416
        %v418 = vsub.f32 %v410, %v417
        %v419 = vmul.f32 %v418, %v418
        %v420 = vsel %vm365, %v419, 0.0
        %421 = vadd.xlane.f32.xlu0 %v420
        %v422 = vpop.xlane.xlu0 %421
        %v423 = vmul.f32 %v422, %v416
        %v424 = vadd.f32 %v423, 1e-05
        %v425 = vrsqrt.pop %v424
        %v426 = vmul.f32 %v418, %v425
        %v427 = vlaneseq
        %v428 = vshrl.u32 %v427, 7
        %v429 = vsub.s32 0, %v428
        %v430 = vrot.slane %v411, %v429
        %v431 = vmul.f32 %v426, %v430
        %v432 = vlaneseq
        %v433 = vshrl.u32 %v432, 7
        %v434 = vsub.s32 0, %v433
        %v435 = vrot.slane %v412, %v434
        %v436 = vadd.f32 %v431, %v435
        %v437 = vlaneseq
        %v438 = vand.u32 %v437, 127
        %vm439 = vcmp.lt.s32.totalorder %v438, 5
        %v440 = vsel %vm439, 0.0, -1e+30
        %v441 = vld [vmem:[%s1 + $0xc] sm:$0x1]
        %v442 = vld [vmem:[%s1 + $0xd] sm:$0x1]
        %v443 = vsel %vm365, %v436, 0.0
        %444 = vadd.xlane.f32.xlu0 %v443
        %v445 = vpop.xlane.xlu0 %444
        %v446 = vmul.f32 %v445, %v416
        %v447 = vsub.f32 %v436, %v446
        %v448 = vmul.f32 %v447, %v447
        %v449 = vsel %vm365, %v448, 0.0
        %450 = vadd.xlane.f32.xlu0 %v449
        %v451 = vpop.xlane.xlu0 %450
        %v452 = vmul.f32 %v451, %v416
        %v453 = vadd.f32 %v452, 1e-05
        %v454 = vrsqrt.pop %v453
        %v455 = vmul.f32 %v447, %v454
        %v456 = vlaneseq
        %v457 = vshrl.u32 %v456, 7
        %v458 = vsub.s32 0, %v457
        %v459 = vrot.slane %v441, %v458
        %v460 = vmul.f32 %v455, %v459
        %v461 = vlaneseq
        %v462 = vshrl.u32 %v461, 7
        %v463 = vsub.s32 0, %v462
        %v464 = vrot.slane %v442, %v463
        %v465 = vadd.f32 %v460, %v464
        %v466 = vpack.c.bf16 %v465, %v465
        %v467 = vld [vmem:[#allocation2] sm:$0xff]
        %v468 = vld [vmem:[#allocation2 + $0x8] sm:$0xff]
        %v469 = vld [vmem:[#allocation2 + $0x10] sm:$0xff]
        %v470 = vld [vmem:[#allocation2 + $0x1c] sm:$0xff]
        %v471 = vld [vmem:[#allocation2 + $0x24] sm:$0xff]
        %v472 = vld [vmem:[#allocation2 + $0x2c] sm:$0xff]
        %v473 = vld [vmem:[#allocation2 + $0x38] sm:$0xff]
        %v474 = vld [vmem:[#allocation2 + $0x40] sm:$0xff]
        %v475 = vld [vmem:[#allocation2 + $0x48] sm:$0xff]
        %v476 = vld [vmem:[#allocation2 + $0x54] sm:$0xff]
        %v477 = vld [vmem:[#allocation2 + $0x5c] sm:$0xff]
        %v478 = vld [vmem:[#allocation2 + $0x64] sm:$0xff]
        %v479 = vld [vmem:[#allocation2 + $0x70] sm:$0xff]
        %v480 = vld [vmem:[#allocation2 + $0x78] sm:$0xff]
        %v481 = vld [vmem:[#allocation2 + $0x80] sm:$0xff]
        %v482 = vld [vmem:[#allocation2 + $0x8c] sm:$0xff]
        %v483 = vld [vmem:[#allocation2 + $0x94] sm:$0xff]
        %v484 = vld [vmem:[#allocation2 + $0x9c] sm:$0xff]
        %v485 = vld [vmem:[#allocation2 + $0xa8] sm:$0xff]
        %v486 = vld [vmem:[#allocation2 + $0xb0] sm:$0xff]
        %v487 = vld [vmem:[#allocation2 + $0xb8] sm:$0xff]
        %v488 = vld [vmem:[#allocation2 + $0xc4] sm:$0xff]
        %v489 = vld [vmem:[#allocation2 + $0xcc] sm:$0xff]
        %v490 = vld [vmem:[#allocation2 + $0xd4] sm:$0xff]
        %v491 = vld [vmem:[%s2] ss:$4 sm:$0x3f]
        %v493 = vlaneseq
        %v494 = vshrl.u32 %v493, 7
        %v495 = vsub.s32 0, %v494
        %v496 = vrot.slane %v491, %v495
        %v497 = vlaneseq
        %v498 = vshrl.u32 %v497, 7
        %v499 = vsub.s32 1, %v498
        %v500 = vrot.slane %v491, %v499
        %v501 = vlaneseq
        %v502 = vshrl.u32 %v501, 7
        %v503 = vsub.s32 2, %v502
        %v504 = vrot.slane %v491, %v503
        %v505 = vlaneseq
        %v506 = vshrl.u32 %v505, 7
        %v507 = vsub.s32 3, %v506
        %v508 = vrot.slane %v491, %v507
        %v509 = vlaneseq
        %v510 = vshrl.u32 %v509, 7
        %v511 = vsub.s32 4, %v510
        %v512 = vrot.slane %v491, %v511
        %v513 = vlaneseq
        %v514 = vshrl.u32 %v513, 7
        %v515 = vsub.s32 5, %v514
        %v516 = vrot.slane %v491, %v515
        %v547 = vunpack.c.l.b16 %v467
        %v548 = vunpack.c.h.b16 %v467
        %v549 = vunpack.c.l.b16 %v468
        %v550 = vunpack.c.h.b16 %v468
        %v551 = vunpack.c.l.b16 %v469
        %v552 = vunpack.c.h.b16 %v469
        %v553 = vunpack.c.l.b16 %v470
        %v554 = vunpack.c.h.b16 %v470
        %v555 = vunpack.c.l.b16 %v471
        %v556 = vunpack.c.h.b16 %v471
        %v557 = vunpack.c.l.b16 %v472
        %v558 = vunpack.c.h.b16 %v472
        %v559 = vunpack.c.l.b16 %v473
        %v560 = vunpack.c.h.b16 %v473
        %v561 = vunpack.c.l.b16 %v474
        %v562 = vunpack.c.h.b16 %v474
        %v563 = vunpack.c.l.b16 %v475
        %v564 = vunpack.c.h.b16 %v475
        %v565 = vunpack.c.l.b16 %v476
        %v566 = vunpack.c.h.b16 %v476
        %v567 = vunpack.c.l.b16 %v477
        %v568 = vunpack.c.h.b16 %v477
        %v569 = vunpack.c.l.b16 %v478
        %v570 = vunpack.c.h.b16 %v478
        %v571 = vunpack.c.l.b16 %v479
        %v572 = vunpack.c.h.b16 %v479
        %v573 = vunpack.c.l.b16 %v480
        %v574 = vunpack.c.h.b16 %v480
        %v575 = vunpack.c.l.b16 %v481
        %v576 = vunpack.c.h.b16 %v481
        %v577 = vunpack.c.l.b16 %v482
        %v578 = vunpack.c.h.b16 %v482
        %v579 = vunpack.c.l.b16 %v483
        %v580 = vunpack.c.h.b16 %v483
        %v581 = vunpack.c.l.b16 %v484
        %v582 = vunpack.c.h.b16 %v484
        %v583 = vunpack.c.l.b16 %v485
        %v584 = vunpack.c.h.b16 %v485
        %v585 = vunpack.c.l.b16 %v486
        %v586 = vunpack.c.h.b16 %v486
        %v587 = vunpack.c.l.b16 %v487
        %v588 = vunpack.c.h.b16 %v487
        %v589 = vunpack.c.l.b16 %v488
        %v590 = vunpack.c.h.b16 %v488
        %v591 = vunpack.c.l.b16 %v489
        %v592 = vunpack.c.h.b16 %v489
        %v593 = vunpack.c.l.b16 %v490
        %v594 = vunpack.c.h.b16 %v490
        %v595 = vpack.c.b16 %v553, %v547
        %v596 = vpack.c.b16 %v554, %v548
        %v597 = vpack.c.b16 %v555, %v549
        %v598 = vpack.c.b16 %v556, %v550
        %v599 = vpack.c.b16 %v557, %v551
        %v600 = vpack.c.b16 %v558, %v552
        %v601 = vpack.c.b16 %v565, %v559
        %v602 = vpack.c.b16 %v566, %v560
        %v603 = vpack.c.b16 %v567, %v561
        %v604 = vpack.c.b16 %v568, %v562
        %v605 = vpack.c.b16 %v569, %v563
        %v606 = vpack.c.b16 %v570, %v564
        %v607 = vpack.c.b16 %v577, %v571
        %v608 = vpack.c.b16 %v578, %v572
        %v609 = vpack.c.b16 %v579, %v573
        %v610 = vpack.c.b16 %v580, %v574
        %v611 = vpack.c.b16 %v581, %v575
        %v612 = vpack.c.b16 %v582, %v576
        %v613 = vpack.c.b16 %v589, %v583
        %v614 = vpack.c.b16 %v590, %v584
        %v615 = vpack.c.b16 %v591, %v585
        %v616 = vpack.c.b16 %v592, %v586
        %v617 = vpack.c.b16 %v593, %v587
        %v618 = vpack.c.b16 %v594, %v588
        %v644 = vsel %vm365, %v466, 0
        %646 = vmatprep.subr.bf16.mxu0 %v596
        %647 = vmatpush1.bf16.msra.mxu0 %v595
        %648 = vmatprep.subr.bf16.mxu0 %v602
        %649 = vmatpush1.bf16.msra.mxu0 %v601
        %650 = vmatprep.subr.bf16.mxu0 %v608
        %651 = vmatpush1.bf16.msra.mxu0 %v607
        %652 = vmatprep.subr.bf16.mxu0 %v614
        %653 = vmatpush1.bf16.msra.mxu0 %v613
        %654 = vmatprep.subr.bf16.mxu0 0
        %655 = vmatpush1.bf16.msra.mxu0 0
        %656 = vmatprep.subr.bf16.mxu0 0
        %657 = vmatpush1.bf16.msra.mxu0 0
        %658 = vmatprep.subr.bf16.mxu0 0
        %659 = vmatpush1.bf16.msra.mxu0 0
        %660 = vmatprep.subr.bf16.mxu0 0
        %661 = vmatpush1.bf16.msra.mxu0 0
        %662 = vmatprep.subr.bf16.mxu0 0
        %663 = vmatpush1.bf16.msra.mxu0 0
        %664 = vmatprep.subr.bf16.mxu0 0
        %665 = vmatpush1.bf16.msra.mxu0 0
        %666 = vmatprep.subr.bf16.mxu0 0
        %667 = vmatpush1.bf16.msra.mxu0 0
        %668 = vmatprep.subr.bf16.mxu0 0
        %669 = vmatpush1.bf16.msra.mxu0 0
        %670 = vmatprep.subr.bf16.mxu0 0
        %671 = vmatpush1.bf16.msra.mxu0 0
        %672 = vmatprep.subr.bf16.mxu0 0
        %673 = vmatpush1.bf16.msra.mxu0 0
        %674 = vmatprep.subr.bf16.mxu0 0
        %675 = vmatpush1.bf16.msra.mxu0 0
        %676 = vmatprep.subr.bf16.mxu0 0
        %677 = vmatpush1.bf16.msra.mxu0 0
        %678 = vmatprep.mubr.bf16.mxu0 0
        %679 = vmatmul.mubr.bf16.gmra.mrb[0].mxu0 %v644
        %v680 = vpop.f32.mrb[0].mxu0
        %v681 = vadd.f32 %v496, %v680
        %v682 = vpop.f32.mrb[0].mxu0
        %v683 = vadd.f32 %v500, %v682
        %v684 = vpop.f32.mrb[0].mxu0
        %v685 = vpop.f32.mrb[0].mxu0
        %686 = vdwg.mxu0
        %687 = vmatprep.subr.bf16.mxu0 %v598
        %688 = vmatpush1.bf16.msra.mxu0 %v597
        %689 = vmatprep.subr.bf16.mxu0 %v604
        %690 = vmatpush1.bf16.msra.mxu0 %v603
        %691 = vmatprep.subr.bf16.mxu0 %v610
        %692 = vmatpush1.bf16.msra.mxu0 %v609
        %693 = vmatprep.subr.bf16.mxu0 %v616
        %694 = vmatpush1.bf16.msra.mxu0 %v615
        %695 = vmatprep.subr.bf16.mxu0 0
        %696 = vmatpush1.bf16.msra.mxu0 0
        %697 = vmatprep.subr.bf16.mxu0 0
        %698 = vmatpush1.bf16.msra.mxu0 0
        %699 = vmatprep.subr.bf16.mxu0 0
        %700 = vmatpush1.bf16.msra.mxu0 0
        %701 = vmatprep.subr.bf16.mxu0 0
        %702 = vmatpush1.bf16.msra.mxu0 0
        %703 = vmatprep.subr.bf16.mxu0 0
        %704 = vmatpush1.bf16.msra.mxu0 0
        %705 = vmatprep.subr.bf16.mxu0 0
        %706 = vmatpush1.bf16.msra.mxu0 0
        %707 = vmatprep.subr.bf16.mxu0 0
        %708 = vmatpush1.bf16.msra.mxu0 0
        %709 = vmatprep.subr.bf16.mxu0 0
        %710 = vmatpush1.bf16.msra.mxu0 0
        %711 = vmatprep.subr.bf16.mxu0 0
        %712 = vmatpush1.bf16.msra.mxu0 0
        %713 = vmatprep.subr.bf16.mxu0 0
        %714 = vmatpush1.bf16.msra.mxu0 0
        %715 = vmatprep.subr.bf16.mxu0 0
        %716 = vmatpush1.bf16.msra.mxu0 0
        %717 = vmatprep.subr.bf16.mxu0 0
        %718 = vmatpush1.bf16.msra.mxu0 0
        %719 = vmatprep.mubr.bf16.mxu0 0
        %720 = vmatmul.mubr.bf16.gmra.mrb[0].mxu0 %v644
        %v721 = vpop.f32.mrb[0].mxu0
        %v722 = vadd.f32 %v504, %v721
        %v723 = vpop.f32.mrb[0].mxu0
        %v724 = vadd.f32 %v508, %v723
        %v725 = vpop.f32.mrb[0].mxu0
        %v726 = vpop.f32.mrb[0].mxu0
        %727 = vdwg.mxu0
        %728 = vmatprep.subr.bf16.mxu0 %v600
        %729 = vmatpush1.bf16.msra.mxu0 %v599
        %730 = vmatprep.subr.bf16.mxu0 %v606
        %731 = vmatpush1.bf16.msra.mxu0 %v605
        %732 = vmatprep.subr.bf16.mxu0 %v612
        %733 = vmatpush1.bf16.msra.mxu0 %v611
        %734 = vmatprep.subr.bf16.mxu0 %v618
        %735 = vmatpush1.bf16.msra.mxu0 %v617
        %736 = vmatprep.subr.bf16.mxu0 0
        %737 = vmatpush1.bf16.msra.mxu0 0
        %738 = vmatprep.subr.bf16.mxu0 0
        %739 = vmatpush1.bf16.msra.mxu0 0
        %740 = vmatprep.subr.bf16.mxu0 0
        %741 = vmatpush1.bf16.msra.mxu0 0
        %742 = vmatprep.subr.bf16.mxu0 0
        %743 = vmatpush1.bf16.msra.mxu0 0
        %744 = vmatprep.subr.bf16.mxu0 0
        %745 = vmatpush1.bf16.msra.mxu0 0
        %746 = vmatprep.subr.bf16.mxu0 0
        %747 = vmatpush1.bf16.msra.mxu0 0
        %748 = vmatprep.subr.bf16.mxu0 0
        %749 = vmatpush1.bf16.msra.mxu0 0
        %750 = vmatprep.subr.bf16.mxu0 0
        %751 = vmatpush1.bf16.msra.mxu0 0
        %752 = vmatprep.subr.bf16.mxu0 0
        %753 = vmatpush1.bf16.msra.mxu0 0
        %754 = vmatprep.subr.bf16.mxu0 0
        %755 = vmatpush1.bf16.msra.mxu0 0
        %756 = vmatprep.subr.bf16.mxu0 0
        %757 = vmatpush1.bf16.msra.mxu0 0
        %758 = vmatprep.subr.bf16.mxu0 0
        %759 = vmatpush1.bf16.msra.mxu0 0
        %760 = vmatprep.mubr.bf16.mxu0 0
        %761 = vmatmul.mubr.bf16.gmra.mrb[0].mxu0 %v644
        %v762 = vpop.f32.mrb[0].mxu0
        %v763 = vadd.f32 %v512, %v762
        %v764 = vpop.f32.mrb[0].mxu0
        %v765 = vadd.f32 %v516, %v764
        %v766 = vpop.f32.mrb[0].mxu0
        %v767 = vpop.f32.mrb[0].mxu0
        %768 = vdwg.mxu0
        %v769 = vmul.f32 %v681, 0.17677669
        %770 = vmatprep.subr.mxu0 0.0
        %771 = vmatpush1.xpose.msra.mxu0 %v683
        %772 = vmatprep.subr.mxu0 0.0
        %773 = vmatpush1.xpose.msra.mxu0 0.0
        %774 = vmatprep.subr.mxu0 0.0
        %775 = vmatpush1.xpose.msra.mxu0 0.0
        %776 = vmatprep.subr.mxu0 0.0
        %777 = vmatpush1.xpose.msra.mxu0 0.0
        %778 = vmatprep.subr.mxu0 0.0
        %779 = vmatpush1.xpose.msra.mxu0 0.0
        %780 = vmatprep.subr.mxu0 0.0
        %781 = vmatpush1.xpose.msra.mxu0 0.0
        %782 = vmatprep.subr.mxu0 0.0
        %783 = vmatpush1.xpose.msra.mxu0 0.0
        %784 = vmatprep.subr.mxu0 0.0
        %785 = vmatpush1.xpose.msra.mxu0 0.0
        %786 = vmatprep.subr.mxu0 0.0
        %787 = vmatpush1.xpose.msra.mxu0 0.0
        %788 = vmatprep.subr.mxu0 0.0
        %789 = vmatpush1.xpose.msra.mxu0 0.0
        %790 = vmatprep.subr.mxu0 0.0
        %791 = vmatpush1.xpose.msra.mxu0 0.0
        %792 = vmatprep.subr.mxu0 0.0
        %793 = vmatpush1.xpose.msra.mxu0 0.0
        %794 = vmatprep.subr.mxu0 0.0
        %795 = vmatpush1.xpose.msra.mxu0 0.0
        %796 = vmatprep.subr.mxu0 0.0
        %797 = vmatpush1.xpose.msra.mxu0 0.0
        %798 = vmatprep.subr.mxu0 0.0
        %799 = vmatpush1.xpose.msra.mxu0 0.0
        %800 = vmatprep.subr.mxu0 0.0
        %801 = vmatpush1.xpose.msra.mxu0 0.0
        %802 = vmatprep.subr.mxu0 0.0
        %803 = vmatpush1.xpose.msra.mxu0 0.0
        %804 = vmatprep.subr.mxu0 0.0
        %805 = vmatpush1.xpose.msra.mxu0 0.0
        %806 = vmatprep.subr.mxu0 0.0
        %807 = vmatpush1.xpose.msra.mxu0 0.0
        %808 = vmatprep.subr.mxu0 0.0
        %809 = vmatpush1.xpose.msra.mxu0 0.0
        %810 = vmatprep.subr.mxu0 0.0
        %811 = vmatpush1.xpose.msra.mxu0 0.0
        %812 = vmatprep.subr.mxu0 0.0
        %813 = vmatpush1.xpose.msra.mxu0 0.0
        %814 = vmatprep.subr.mxu0 0.0
        %815 = vmatpush1.xpose.msra.mxu0 0.0
        %816 = vmatprep.subr.mxu0 0.0
        %817 = vmatpush1.xpose.msra.mxu0 0.0
        %818 = vmatprep.subr.mxu0 0.0
        %819 = vmatpush1.xpose.msra.mxu0 0.0
        %820 = vmatprep.subr.mxu0 0.0
        %821 = vmatpush1.xpose.msra.mxu0 0.0
        %822 = vmatprep.subr.mxu0 0.0
        %823 = vmatpush1.xpose.msra.mxu0 0.0
        %824 = vmatprep.subr.mxu0 0.0
        %825 = vmatpush1.xpose.msra.mxu0 0.0
        %826 = vmatprep.subr.mxu0 0.0
        %827 = vmatpush1.xpose.msra.mxu0 0.0
        %828 = vmatprep.subr.mxu0 0.0
        %829 = vmatpush1.xpose.msra.mxu0 0.0
        %830 = vmatprep.subr.mxu0 0.0
        %831 = vmatpush1.xpose.msra.mxu0 0.0
        %832 = vmatprep.subr.mxu0 0.0
        %833 = vmatpush1.xpose.msra.mxu0 0.0
        %834 = vmatprep.mubr.f32.mxu0 0.0
        %835 = vmatmul.mubr.f32.gmra.mrb[0].mxu0 %v769
        %v836 = vpop.f32.mrb[0].mxu0
        %v837 = vadd.f32 %v440, %v836
        %v838 = vpop.f32.mrb[0].mxu0
        %839 = vdwg.mxu0
        %v840 = vmul.f32 %v837, 1.442695
        %v841 = vpow.pop %v840
        %vm842 = vcmask 64512
        %v843 = vsel %vm842, %v841, 0.0
        %844 = vadd.xlane.f32.xlu0 %v843
        %v845 = vpop.xlane.xlu0 %844
        %v846 = vrcp.pop %v845
        %v847 = vmul.f32 %v841, %v846
        %v849 = vsel %vm842, %v847, 0
        %851 = vmatprep.subr.mxu0 0.0
        %852 = vmatpush1.msra.mxu0 %v722
        %853 = vmatprep.subr.mxu0 0.0
        %854 = vmatpush1.msra.mxu0 0.0
        %855 = vmatprep.subr.mxu0 0.0
        %856 = vmatpush1.msra.mxu0 0.0
        %857 = vmatprep.subr.mxu0 0.0
        %858 = vmatpush1.msra.mxu0 0.0
        %859 = vmatprep.subr.mxu0 0.0
        %860 = vmatpush1.msra.mxu0 0.0
        %861 = vmatprep.subr.mxu0 0.0
        %862 = vmatpush1.msra.mxu0 0.0
        %863 = vmatprep.subr.mxu0 0.0
        %864 = vmatpush1.msra.mxu0 0.0
        %865 = vmatprep.subr.mxu0 0.0
        %866 = vmatpush1.msra.mxu0 0.0
        %867 = vmatprep.subr.mxu0 0.0
        %868 = vmatpush1.msra.mxu0 0.0
        %869 = vmatprep.subr.mxu0 0.0
        %870 = vmatpush1.msra.mxu0 0.0
        %871 = vmatprep.subr.mxu0 0.0
        %872 = vmatpush1.msra.mxu0 0.0
        %873 = vmatprep.subr.mxu0 0.0
        %874 = vmatpush1.msra.mxu0 0.0
        %875 = vmatprep.subr.mxu0 0.0
        %876 = vmatpush1.msra.mxu0 0.0
        %877 = vmatprep.subr.mxu0 0.0
        %878 = vmatpush1.msra.mxu0 0.0
        %879 = vmatprep.subr.mxu0 0.0
        %880 = vmatpush1.msra.mxu0 0.0
        %881 = vmatprep.subr.mxu0 0.0
        %882 = vmatpush1.msra.mxu0 0.0
        %883 = vmatprep.subr.mxu0 0.0
        %884 = vmatpush1.msra.mxu0 0.0
        %885 = vmatprep.subr.mxu0 0.0
        %886 = vmatpush1.msra.mxu0 0.0
        %887 = vmatprep.subr.mxu0 0.0
        %888 = vmatpush1.msra.mxu0 0.0
        %889 = vmatprep.subr.mxu0 0.0
        %890 = vmatpush1.msra.mxu0 0.0
        %891 = vmatprep.subr.mxu0 0.0
        %892 = vmatpush1.msra.mxu0 0.0
        %893 = vmatprep.subr.mxu0 0.0
        %894 = vmatpush1.msra.mxu0 0.0
        %895 = vmatprep.subr.mxu0 0.0
        %896 = vmatpush1.msra.mxu0 0.0
        %897 = vmatprep.subr.mxu0 0.0
        %898 = vmatpush1.msra.mxu0 0.0
        %899 = vmatprep.subr.mxu0 0.0
        %900 = vmatpush1.msra.mxu0 0.0
        %901 = vmatprep.subr.mxu0 0.0
        %902 = vmatpush1.msra.mxu0 0.0
        %903 = vmatprep.subr.mxu0 0.0
        %904 = vmatpush1.msra.mxu0 0.0
        %905 = vmatprep.subr.mxu0 0.0
        %906 = vmatpush1.msra.mxu0 0.0
        %907 = vmatprep.subr.mxu0 0.0
        %908 = vmatpush1.msra.mxu0 0.0
        %909 = vmatprep.subr.mxu0 0.0
        %910 = vmatpush1.msra.mxu0 0.0
        %911 = vmatprep.subr.mxu0 0.0
        %912 = vmatpush1.msra.mxu0 0.0
        %913 = vmatprep.subr.mxu0 0.0
        %914 = vmatpush1.msra.mxu0 0.0
        %915 = vmatprep.mubr.f32.mxu0 0.0
        %916 = vmatmul.mubr.f32.gmra.mrb[0].mxu0 %v849
        %v917 = vpop.f32.mrb[0].mxu0
        %v918 = vadd.f32 0.0, %v917
        %v919 = vpop.f32.mrb[0].mxu0
        %920 = vdwg.mxu0
        %v921 = vld [vmem:[#allocation2 + $0x18] sm:$0xf]
        %v922 = vld [vmem:[#allocation2 + $0x34] sm:$0xf]
        %v923 = vld [vmem:[#allocation2 + $0x50] sm:$0xf]
        %v924 = vld [vmem:[#allocation2 + $0x6c] sm:$0xf]
        %v925 = vpack.c.bf16 %v918, %v918
        %v926 = vmul.f32 %v724, 0.17677669
        %927 = vmatprep.subr.mxu0 0.0
        %928 = vmatpush1.xpose.msra.mxu0 %v763
        %929 = vmatprep.subr.mxu0 0.0
        %930 = vmatpush1.xpose.msra.mxu0 0.0
        %931 = vmatprep.subr.mxu0 0.0
        %932 = vmatpush1.xpose.msra.mxu0 0.0
        %933 = vmatprep.subr.mxu0 0.0
        %934 = vmatpush1.xpose.msra.mxu0 0.0
        %935 = vmatprep.subr.mxu0 0.0
        %936 = vmatpush1.xpose.msra.mxu0 0.0
        %937 = vmatprep.subr.mxu0 0.0
        %938 = vmatpush1.xpose.msra.mxu0 0.0
        %939 = vmatprep.subr.mxu0 0.0
        %940 = vmatpush1.xpose.msra.mxu0 0.0
        %941 = vmatprep.subr.mxu0 0.0
        %942 = vmatpush1.xpose.msra.mxu0 0.0
        %943 = vmatprep.subr.mxu0 0.0
        %944 = vmatpush1.xpose.msra.mxu0 0.0
        %945 = vmatprep.subr.mxu0 0.0
        %946 = vmatpush1.xpose.msra.mxu0 0.0
        %947 = vmatprep.subr.mxu0 0.0
        %948 = vmatpush1.xpose.msra.mxu0 0.0
        %949 = vmatprep.subr.mxu0 0.0
        %950 = vmatpush1.xpose.msra.mxu0 0.0
        %951 = vmatprep.subr.mxu0 0.0
        %952 = vmatpush1.xpose.msra.mxu0 0.0
        %953 = vmatprep.subr.mxu0 0.0
        %954 = vmatpush1.xpose.msra.mxu0 0.0
        %955 = vmatprep.subr.mxu0 0.0
        %956 = vmatpush1.xpose.msra.mxu0 0.0
        %957 = vmatprep.subr.mxu0 0.0
        %958 = vmatpush1.xpose.msra.mxu0 0.0
        %959 = vmatprep.subr.mxu0 0.0
        %960 = vmatpush1.xpose.msra.mxu0 0.0
        %961 = vmatprep.subr.mxu0 0.0
        %962 = vmatpush1.xpose.msra.mxu0 0.0
        %963 = vmatprep.subr.mxu0 0.0
        %964 = vmatpush1.xpose.msra.mxu0 0.0
        %965 = vmatprep.subr.mxu0 0.0
        %966 = vmatpush1.xpose.msra.mxu0 0.0
        %967 = vmatprep.subr.mxu0 0.0
        %968 = vmatpush1.xpose.msra.mxu0 0.0
        %969 = vmatprep.subr.mxu0 0.0
        %970 = vmatpush1.xpose.msra.mxu0 0.0
        %971 = vmatprep.subr.mxu0 0.0
        %972 = vmatpush1.xpose.msra.mxu0 0.0
        %973 = vmatprep.subr.mxu0 0.0
        %974 = vmatpush1.xpose.msra.mxu0 0.0
        %975 = vmatprep.subr.mxu0 0.0
        %976 = vmatpush1.xpose.msra.mxu0 0.0
        %977 = vmatprep.subr.mxu0 0.0
        %978 = vmatpush1.xpose.msra.mxu0 0.0
        %979 = vmatprep.subr.mxu0 0.0
        %980 = vmatpush1.xpose.msra.mxu0 0.0
        %981 = vmatprep.subr.mxu0 0.0
        %982 = vmatpush1.xpose.msra.mxu0 0.0
        %983 = vmatprep.subr.mxu0 0.0
        %984 = vmatpush1.xpose.msra.mxu0 0.0
        %985 = vmatprep.subr.mxu0 0.0
        %986 = vmatpush1.xpose.msra.mxu0 0.0
        %987 = vmatprep.subr.mxu0 0.0
        %988 = vmatpush1.xpose.msra.mxu0 0.0
        %989 = vmatprep.subr.mxu0 0.0
        %990 = vmatpush1.xpose.msra.mxu0 0.0
        %991 = vmatprep.mubr.f32.mxu0 0.0
        %992 = vmatmul.mubr.f32.gmra.mrb[0].mxu0 %v926
        %v993 = vpop.f32.mrb[0].mxu0
        %v994 = vadd.f32 %v440, %v993
        %v995 = vpop.f32.mrb[0].mxu0
        %996 = vdwg.mxu0
        %v997 = vmul.f32 %v994, 1.442695
        %v998 = vpow.pop %v997
        %v999 = vsel %vm842, %v998, 0.0
        %1000 = vadd.xlane.f32.xlu0 %v999
        %v1001 = vpop.xlane.xlu0 %1000
        %v1002 = vrcp.pop %v1001
        %v1003 = vmul.f32 %v998, %v1002
        %v1005 = vsel %vm842, %v1003, 0
        %1007 = vmatprep.subr.mxu0 0.0
        %1008 = vmatpush1.msra.mxu0 %v765
        %1009 = vmatprep.subr.mxu0 0.0
        %1010 = vmatpush1.msra.mxu0 0.0
        %1011 = vmatprep.subr.mxu0 0.0
        %1012 = vmatpush1.msra.mxu0 0.0
        %1013 = vmatprep.subr.mxu0 0.0
        %1014 = vmatpush1.msra.mxu0 0.0
        %1015 = vmatprep.subr.mxu0 0.0
        %1016 = vmatpush1.msra.mxu0 0.0
        %1017 = vmatprep.subr.mxu0 0.0
        %1018 = vmatpush1.msra.mxu0 0.0
        %1019 = vmatprep.subr.mxu0 0.0
        %1020 = vmatpush1.msra.mxu0 0.0
        %1021 = vmatprep.subr.mxu0 0.0
        %1022 = vmatpush1.msra.mxu0 0.0
        %1023 = vmatprep.subr.mxu0 0.0
        %1024 = vmatpush1.msra.mxu0 0.0
        %1025 = vmatprep.subr.mxu0 0.0
        %1026 = vmatpush1.msra.mxu0 0.0
        %1027 = vmatprep.subr.mxu0 0.0
        %1028 = vmatpush1.msra.mxu0 0.0
        %1029 = vmatprep.subr.mxu0 0.0
        %1030 = vmatpush1.msra.mxu0 0.0
        %1031 = vmatprep.subr.mxu0 0.0
        %1032 = vmatpush1.msra.mxu0 0.0
        %1033 = vmatprep.subr.mxu0 0.0
        %1034 = vmatpush1.msra.mxu0 0.0
        %1035 = vmatprep.subr.mxu0 0.0
        %1036 = vmatpush1.msra.mxu0 0.0
        %1037 = vmatprep.subr.mxu0 0.0
        %1038 = vmatpush1.msra.mxu0 0.0
        %1039 = vmatprep.subr.mxu0 0.0
        %1040 = vmatpush1.msra.mxu0 0.0
        %1041 = vmatprep.subr.mxu0 0.0
        %1042 = vmatpush1.msra.mxu0 0.0
        %1043 = vmatprep.subr.mxu0 0.0
        %1044 = vmatpush1.msra.mxu0 0.0
        %1045 = vmatprep.subr.mxu0 0.0
        %1046 = vmatpush1.msra.mxu0 0.0
        %1047 = vmatprep.subr.mxu0 0.0
        %1048 = vmatpush1.msra.mxu0 0.0
        %1049 = vmatprep.subr.mxu0 0.0
        %1050 = vmatpush1.msra.mxu0 0.0
        %1051 = vmatprep.subr.mxu0 0.0
        %1052 = vmatpush1.msra.mxu0 0.0
        %1053 = vmatprep.subr.mxu0 0.0
        %1054 = vmatpush1.msra.mxu0 0.0
        %1055 = vmatprep.subr.mxu0 0.0
        %1056 = vmatpush1.msra.mxu0 0.0
        %1057 = vmatprep.subr.mxu0 0.0
        %1058 = vmatpush1.msra.mxu0 0.0
        %1059 = vmatprep.subr.mxu0 0.0
        %1060 = vmatpush1.msra.mxu0 0.0
        %1061 = vmatprep.subr.mxu0 0.0
        %1062 = vmatpush1.msra.mxu0 0.0
        %1063 = vmatprep.subr.mxu0 0.0
        %1064 = vmatpush1.msra.mxu0 0.0
        %1065 = vmatprep.subr.mxu0 0.0
        %1066 = vmatpush1.msra.mxu0 0.0
        %1067 = vmatprep.subr.mxu0 0.0
        %1068 = vmatpush1.msra.mxu0 0.0
        %1069 = vmatprep.subr.mxu0 0.0
        %1070 = vmatpush1.msra.mxu0 0.0
        %1071 = vmatprep.mubr.f32.mxu0 0.0
        %1072 = vmatmul.mubr.f32.gmra.mrb[0].mxu0 %v1005
        %v1073 = vpop.f32.mrb[0].mxu0
        %v1074 = vadd.f32 0.0, %v1073
        %v1075 = vpop.f32.mrb[0].mxu0
        %1076 = vdwg.mxu0
        %v1077 = vld [vmem:[#allocation2 + $0x88] sm:$0xf]
        %v1078 = vld [vmem:[#allocation2 + $0xa4] sm:$0xf]
        %v1079 = vld [vmem:[#allocation2 + $0xc0] sm:$0xf]
        %v1080 = vld [vmem:[#allocation2 + $0xdc] sm:$0xf]
        %v1081 = vpack.c.bf16 %v1074, %v1074
        %v1086 = vunpack.c.l.b16 %v1077
        %v1087 = vunpack.c.l.b16 %v1078
        %v1088 = vunpack.c.l.b16 %v1079
        %v1089 = vunpack.c.l.b16 %v1080
        %v1090 = vpack.c.b16 %v1087, %v1086
        %v1091 = vpack.c.b16 %v1089, %v1088
        %vm1094 = vcmask 261120
        %v1096 = vsel %vm1094, %v1081, 0
        %1098 = vmatprep.subr.bf16.mxu0 0
        %1099 = vmatpush1.bf16.msra.mxu0 %v1090
        %1100 = vmatprep.subr.bf16.mxu0 0
        %1101 = vmatpush1.bf16.msra.mxu0 %v1091
        %1102 = vmatprep.subr.bf16.mxu0 0
        %1103 = vmatpush1.bf16.msra.mxu0 0
        %1104 = vmatprep.subr.bf16.mxu0 0
        %1105 = vmatpush1.bf16.msra.mxu0 0
        %1106 = vmatprep.subr.bf16.mxu0 0
        %1107 = vmatpush1.bf16.msra.mxu0 0
        %1108 = vmatprep.subr.bf16.mxu0 0
        %1109 = vmatpush1.bf16.msra.mxu0 0
        %1110 = vmatprep.subr.bf16.mxu0 0
        %1111 = vmatpush1.bf16.msra.mxu0 0
        %1112 = vmatprep.subr.bf16.mxu0 0
        %1113 = vmatpush1.bf16.msra.mxu0 0
        %1114 = vmatprep.subr.bf16.mxu0 0
        %1115 = vmatpush1.bf16.msra.mxu0 0
        %1116 = vmatprep.subr.bf16.mxu0 0
        %1117 = vmatpush1.bf16.msra.mxu0 0
        %1118 = vmatprep.subr.bf16.mxu0 0
        %1119 = vmatpush1.bf16.msra.mxu0 0
        %1120 = vmatprep.subr.bf16.mxu0 0
        %1121 = vmatpush1.bf16.msra.mxu0 0
        %1122 = vmatprep.subr.bf16.mxu0 0
        %1123 = vmatpush1.bf16.msra.mxu0 0
        %1124 = vmatprep.subr.bf16.mxu0 0
        %1125 = vmatpush1.bf16.msra.mxu0 0
        %1126 = vmatprep.subr.bf16.mxu0 0
        %1127 = vmatpush1.bf16.msra.mxu0 0
        %1128 = vmatprep.subr.bf16.mxu0 0
        %1129 = vmatpush1.bf16.msra.mxu0 0
        %1130 = vmatprep.mubr.bf16.mxu0 0
        %1131 = vmatmul.mubr.bf16.gmra.mrb[0].mxu0 %v1096
        %v1132 = vpop.f32.mrb[0].mxu0
        %v1133 = vadd.f32 0.0, %v1132
        %v1134 = vpop.f32.mrb[0].mxu0
        %v1135 = vpop.f32.mrb[0].mxu0
        %v1136 = vpop.f32.mrb[0].mxu0
        %1137 = vdwg.mxu0
        %v1142 = vunpack.c.l.b16 %v921
        %v1143 = vunpack.c.l.b16 %v922
        %v1144 = vunpack.c.l.b16 %v923
        %v1145 = vunpack.c.l.b16 %v924
        %v1146 = vpack.c.b16 %v1143, %v1142
        %v1147 = vpack.c.b16 %v1145, %v1144
        %v1151 = vsel %vm1094, %v925, 0
        %1153 = vmatprep.subr.bf16.mxu0 0
        %1154 = vmatpush1.bf16.msra.mxu0 %v1146
        %1155 = vmatprep.subr.bf16.mxu0 0
        %1156 = vmatpush1.bf16.msra.mxu0 %v1147
        %1157 = vmatprep.subr.bf16.mxu0 0
        %1158 = vmatpush1.bf16.msra.mxu0 0
        %1159 = vmatprep.subr.bf16.mxu0 0
        %1160 = vmatpush1.bf16.msra.mxu0 0
        %1161 = vmatprep.subr.bf16.mxu0 0
        %1162 = vmatpush1.bf16.msra.mxu0 0
        %1163 = vmatprep.subr.bf16.mxu0 0
        %1164 = vmatpush1.bf16.msra.mxu0 0
        %1165 = vmatprep.subr.bf16.mxu0 0
        %1166 = vmatpush1.bf16.msra.mxu0 0
        %1167 = vmatprep.subr.bf16.mxu0 0
        %1168 = vmatpush1.bf16.msra.mxu0 0
        %1169 = vmatprep.subr.bf16.mxu0 0
        %1170 = vmatpush1.bf16.msra.mxu0 0
        %1171 = vmatprep.subr.bf16.mxu0 0
        %1172 = vmatpush1.bf16.msra.mxu0 0
        %1173 = vmatprep.subr.bf16.mxu0 0
        %1174 = vmatpush1.bf16.msra.mxu0 0
        %1175 = vmatprep.subr.bf16.mxu0 0
        %1176 = vmatpush1.bf16.msra.mxu0 0
        %1177 = vmatprep.subr.bf16.mxu0 0
        %1178 = vmatpush1.bf16.msra.mxu0 0
        %1179 = vmatprep.subr.bf16.mxu0 0
        %1180 = vmatpush1.bf16.msra.mxu0 0
        %1181 = vmatprep.subr.bf16.mxu0 0
        %1182 = vmatpush1.bf16.msra.mxu0 0
        %1183 = vmatprep.subr.bf16.mxu0 0
        %1184 = vmatpush1.bf16.msra.mxu0 0
        %1185 = vmatprep.mubr.bf16.mxu0 0
        %1186 = vmatmul.mubr.bf16.gmra.mrb[0].mxu0 %v1151
        %v1187 = vpop.f32.mrb[0].mxu0
        %v1188 = vadd.f32 %v1133, %v1187
        %v1189 = vpop.f32.mrb[0].mxu0
        %v1190 = vpop.f32.mrb[0].mxu0
        %v1191 = vpop.f32.mrb[0].mxu0
        %1192 = vdwg.mxu0
        %v1193 = vadd.f32 %v436, %v1188
        %v1194 = vld [vmem:[%s2 + $0x1] sm:$0x1]
        %v1195 = vlaneseq
        %v1196 = vshrl.u32 %v1195, 7
        %v1197 = vsub.s32 0, %v1196
        %v1198 = vrot.slane %v1194, %v1197
        %v1199 = vadd.f32 %v1193, %v1198
        %v1200 = vld [vmem:[%s1 + $0xe] sm:$0x1]
        %v1201 = vld [vmem:[%s1 + $0xf] sm:$0x1]
        %v1202 = vsel %vm365, %v1199, 0.0
        %1203 = vadd.xlane.f32.xlu0 %v1202
        %v1204 = vpop.xlane.xlu0 %1203
        %v1205 = vmul.f32 %v1204, %v416
        %v1206 = vsub.f32 %v1199, %v1205
        %v1207 = vmul.f32 %v1206, %v1206
        %v1208 = vsel %vm365, %v1207, 0.0
        %1209 = vadd.xlane.f32.xlu0 %v1208
        %v1210 = vpop.xlane.xlu0 %1209
        %v1211 = vmul.f32 %v1210, %v416
        %v1212 = vadd.f32 %v1211, 1e-05
        %v1213 = vrsqrt.pop %v1212
        %v1214 = vmul.f32 %v1206, %v1213
        %v1215 = vlaneseq
        %v1216 = vshrl.u32 %v1215, 7
        %v1217 = vsub.s32 0, %v1216
        %v1218 = vrot.slane %v1200, %v1217
        %v1219 = vmul.f32 %v1214, %v1218
        %v1220 = vlaneseq
        %v1221 = vshrl.u32 %v1220, 7
        %v1222 = vsub.s32 0, %v1221
        %v1223 = vrot.slane %v1201, %v1222
        %v1224 = vadd.f32 %v1219, %v1223
        %v1225 = vpack.c.bf16 %v1224, %v1224
        %v1226 = vld [vmem:[%s5] sm:$0xff]
        %v1227 = vld [vmem:[%s5 + $0x8] sm:$0xff]
        %v1228 = vld [vmem:[%s5 + $0x10] sm:$0xff]
        %v1229 = vld [vmem:[%s5 + $0x18] sm:$0xff]
        %v1230 = vld [vmem:[%s5 + $0x20] sm:$0xff]
        %v1231 = vld [vmem:[%s5 + $0x28] sm:$0xff]
        %v1232 = vld [vmem:[%s5 + $0x30] sm:$0xff]
        %v1233 = vld [vmem:[%s5 + $0x38] sm:$0xff]
        %s1234 = scalar_lea.vmem %s2, 2
        %v1235 = vld [vmem:[%s1234] ss:$4 sm:$0x3]
        %v1237 = vlaneseq
        %v1238 = vshrl.u32 %v1237, 7
        %v1239 = vsub.s32 0, %v1238
        %v1240 = vrot.slane %v1235, %v1239
        %v1241 = vlaneseq
        %v1242 = vshrl.u32 %v1241, 7
        %v1243 = vsub.s32 1, %v1242
        %v1244 = vrot.slane %v1235, %v1243
        %v1255 = vunpack.c.l.b16 %v1226
        %v1256 = vunpack.c.h.b16 %v1226
        %v1257 = vunpack.c.l.b16 %v1227
        %v1258 = vunpack.c.h.b16 %v1227
        %v1259 = vunpack.c.l.b16 %v1228
        %v1260 = vunpack.c.h.b16 %v1228
        %v1261 = vunpack.c.l.b16 %v1229
        %v1262 = vunpack.c.h.b16 %v1229
        %v1263 = vunpack.c.l.b16 %v1230
        %v1264 = vunpack.c.h.b16 %v1230
        %v1265 = vunpack.c.l.b16 %v1231
        %v1266 = vunpack.c.h.b16 %v1231
        %v1267 = vunpack.c.l.b16 %v1232
        %v1268 = vunpack.c.h.b16 %v1232
        %v1269 = vunpack.c.l.b16 %v1233
        %v1270 = vunpack.c.h.b16 %v1233
        %v1271 = vpack.c.b16 %v1257, %v1255
        %v1272 = vpack.c.b16 %v1258, %v1256
        %v1273 = vpack.c.b16 %v1261, %v1259
        %v1274 = vpack.c.b16 %v1262, %v1260
        %v1275 = vpack.c.b16 %v1265, %v1263
        %v1276 = vpack.c.b16 %v1266, %v1264
        %v1277 = vpack.c.b16 %v1269, %v1267
        %v1278 = vpack.c.b16 %v1270, %v1268
        %v1288 = vsel %vm365, %v1225, 0
        %1290 = vmatprep.subr.bf16.mxu0 %v1272
        %1291 = vmatpush1.bf16.msra.mxu0 %v1271
        %1292 = vmatprep.subr.bf16.mxu0 %v1274
        %1293 = vmatpush1.bf16.msra.mxu0 %v1273
        %1294 = vmatprep.subr.bf16.mxu0 %v1276
        %1295 = vmatpush1.bf16.msra.mxu0 %v1275
        %1296 = vmatprep.subr.bf16.mxu0 %v1278
        %1297 = vmatpush1.bf16.msra.mxu0 %v1277
        %1298 = vmatprep.subr.bf16.mxu0 0
        %1299 = vmatpush1.bf16.msra.mxu0 0
        %1300 = vmatprep.subr.bf16.mxu0 0
        %1301 = vmatpush1.bf16.msra.mxu0 0
        %1302 = vmatprep.subr.bf16.mxu0 0
        %1303 = vmatpush1.bf16.msra.mxu0 0
        %1304 = vmatprep.subr.bf16.mxu0 0
        %1305 = vmatpush1.bf16.msra.mxu0 0
        %1306 = vmatprep.subr.bf16.mxu0 0
        %1307 = vmatpush1.bf16.msra.mxu0 0
        %1308 = vmatprep.subr.bf16.mxu0 0
        %1309 = vmatpush1.bf16.msra.mxu0 0
        %1310 = vmatprep.subr.bf16.mxu0 0
        %1311 = vmatpush1.bf16.msra.mxu0 0
        %1312 = vmatprep.subr.bf16.mxu0 0
        %1313 = vmatpush1.bf16.msra.mxu0 0
        %1314 = vmatprep.subr.bf16.mxu0 0
        %1315 = vmatpush1.bf16.msra.mxu0 0
        %1316 = vmatprep.subr.bf16.mxu0 0
        %1317 = vmatpush1.bf16.msra.mxu0 0
        %1318 = vmatprep.subr.bf16.mxu0 0
        %1319 = vmatpush1.bf16.msra.mxu0 0
        %1320 = vmatprep.subr.bf16.mxu0 0
        %1321 = vmatpush1.bf16.msra.mxu0 0
        %1322 = vmatprep.mubr.bf16.mxu0 0
        %1323 = vmatmul.mubr.bf16.gmra.mrb[0].mxu0 %v1288
        %v1324 = vpop.f32.mrb[0].mxu0
        %v1325 = vadd.f32 %v1240, %v1324
        %v1326 = vpop.f32.mrb[0].mxu0
        %v1327 = vadd.f32 %v1244, %v1326
        %v1328 = vpop.f32.mrb[0].mxu0
        %v1329 = vpop.f32.mrb[0].mxu0
        %1330 = vdwg.mxu0
        %v1331 = vmul.f32 %v1325, 1.702
        %v1332 = vmul.f32 %v1327, 1.702
        %v1333 = vxor.u32 %v1331, 2147483648
        %v1334 = vxor.u32 %v1332, 2147483648
        %v1335 = vmul.f32 %v1333, 1.442695
        %v1336 = vpow.pop %v1335
        %v1337 = vmul.f32 %v1334, 1.442695
        %v1338 = vpow.pop %v1337
        %v1339 = vadd.f32 %v1336, 1.0
        %v1340 = vadd.f32 %v1338, 1.0
        %v1341 = vrcp.pop %v1339
        %v1342 = vmul.f32 1.0, %v1341
        %v1343 = vrcp.pop %v1340
        %v1344 = vmul.f32 1.0, %v1343
        %v1345 = vmul.f32 %v1325, %v1342
        %v1346 = vmul.f32 %v1327, %v1344
        %v1347 = vpack.c.bf16 %v1345, %v1345
        %v1348 = vpack.c.bf16 %v1346, %v1346
        %v1349 = vld [vmem:[%s5 + $0x40] sm:$0xf]
        %v1350 = vld [vmem:[%s5 + $0x48] sm:$0xf]
        %v1351 = vld [vmem:[%s5 + $0x50] sm:$0xf]
        %v1352 = vld [vmem:[%s5 + $0x58] sm:$0xf]
        %v1353 = vld [vmem:[%s5 + $0x60] sm:$0xf]
        %v1354 = vld [vmem:[%s5 + $0x68] sm:$0xf]
        %v1355 = vld [vmem:[%s5 + $0x70] sm:$0xf]
        %v1356 = vld [vmem:[%s5 + $0x78] sm:$0xf]
        %v1357 = vld [vmem:[%s5 + $0x80] sm:$0xf]
        %v1358 = vld [vmem:[%s5 + $0x88] sm:$0xf]
        %v1359 = vld [vmem:[%s5 + $0x90] sm:$0xf]
        %v1360 = vld [vmem:[%s5 + $0x98] sm:$0xf]
        %v1361 = vld [vmem:[%s5 + $0xa0] sm:$0xf]
        %v1362 = vld [vmem:[%s5 + $0xa8] sm:$0xf]
        %v1363 = vld [vmem:[%s5 + $0xb0] sm:$0xf]
        %v1364 = vld [vmem:[%s5 + $0xb8] sm:$0xf]
        %v1365 = vld [vmem:[%s5 + $0xc0] sm:$0xf]
        %v1366 = vld [vmem:[%s5 + $0xc8] sm:$0xf]
        %v1367 = vld [vmem:[%s5 + $0xd0] sm:$0xf]
        %v1368 = vld [vmem:[%s5 + $0xd8] sm:$0xf]
        %v1369 = vld [vmem:[%s5 + $0xe0] sm:$0xf]
        %v1370 = vld [vmem:[%s5 + $0xe8] sm:$0xf]
        %v1371 = vld [vmem:[%s5 + $0xf0] sm:$0xf]
        %v1372 = vld [vmem:[%s5 + $0xf8] sm:$0xf]
        %v1373 = vld [vmem:[%s5 + $0x100] sm:$0xf]
        %v1374 = vld [vmem:[%s5 + $0x108] sm:$0xf]
        %v1375 = vld [vmem:[%s5 + $0x110] sm:$0xf]
        %v1376 = vld [vmem:[%s5 + $0x118] sm:$0xf]
        %v1377 = vld [vmem:[%s5 + $0x120] sm:$0xf]
        %v1378 = vld [vmem:[%s5 + $0x128] sm:$0xf]
        %v1379 = vld [vmem:[%s5 + $0x130] sm:$0xf]
        %v1380 = vld [vmem:[%s5 + $0x138] sm:$0xf]
        %v1381 = vld [vmem:[%s2 + $0x3] sm:$0x1]
        %v1382 = vlaneseq
        %v1383 = vshrl.u32 %v1382, 7
        %v1384 = vsub.s32 0, %v1383
        %v1385 = vrot.slane %v1381, %v1384
        %v1418 = vunpack.c.l.b16 %v1349
        %v1419 = vunpack.c.l.b16 %v1350
        %v1420 = vunpack.c.l.b16 %v1351
        %v1421 = vunpack.c.l.b16 %v1352
        %v1422 = vunpack.c.l.b16 %v1353
        %v1423 = vunpack.c.l.b16 %v1354
        %v1424 = vunpack.c.l.b16 %v1355
        %v1425 = vunpack.c.l.b16 %v1356
        %v1426 = vunpack.c.l.b16 %v1357
        %v1427 = vunpack.c.l.b16 %v1358
        %v1428 = vunpack.c.l.b16 %v1359
        %v1429 = vunpack.c.l.b16 %v1360
        %v1430 = vunpack.c.l.b16 %v1361
        %v1431 = vunpack.c.l.b16 %v1362
        %v1432 = vunpack.c.l.b16 %v1363
        %v1433 = vunpack.c.l.b16 %v1364
        %v1434 = vunpack.c.l.b16 %v1365
        %v1435 = vunpack.c.l.b16 %v1366
        %v1436 = vunpack.c.l.b16 %v1367
        %v1437 = vunpack.c.l.b16 %v1368
        %v1438 = vunpack.c.l.b16 %v1369
        %v1439 = vunpack.c.l.b16 %v1370
        %v1440 = vunpack.c.l.b16 %v1371
        %v1441 = vunpack.c.l.b16 %v1372
        %v1442 = vunpack.c.l.b16 %v1373
        %v1443 = vunpack.c.l.b16 %v1374
        %v1444 = vunpack.c.l.b16 %v1375
        %v1445 = vunpack.c.l.b16 %v1376
        %v1446 = vunpack.c.l.b16 %v1377
        %v1447 = vunpack.c.l.b16 %v1378
        %v1448 = vunpack.c.l.b16 %v1379
        %v1449 = vunpack.c.l.b16 %v1380
        %v1450 = vpack.c.b16 %v1419, %v1418
        %v1451 = vpack.c.b16 %v1421, %v1420
        %v1452 = vpack.c.b16 %v1423, %v1422
        %v1453 = vpack.c.b16 %v1425, %v1424
        %v1454 = vpack.c.b16 %v1427, %v1426
        %v1455 = vpack.c.b16 %v1429, %v1428
        %v1456 = vpack.c.b16 %v1431, %v1430
        %v1457 = vpack.c.b16 %v1433, %v1432
        %v1458 = vpack.c.b16 %v1435, %v1434
        %v1459 = vpack.c.b16 %v1437, %v1436
        %v1460 = vpack.c.b16 %v1439, %v1438
        %v1461 = vpack.c.b16 %v1441, %v1440
        %v1462 = vpack.c.b16 %v1443, %v1442
        %v1463 = vpack.c.b16 %v1445, %v1444
        %v1464 = vpack.c.b16 %v1447, %v1446
        %v1465 = vpack.c.b16 %v1449, %v1448
        %1482 = vmatprep.subr.bf16.mxu0 0
        %1483 = vmatpush1.bf16.msra.mxu0 %v1450
        %1484 = vmatprep.subr.bf16.mxu0 0
        %1485 = vmatpush1.bf16.msra.mxu0 %v1451
        %1486 = vmatprep.subr.bf16.mxu0 0
        %1487 = vmatpush1.bf16.msra.mxu0 %v1452
        %1488 = vmatprep.subr.bf16.mxu0 0
        %1489 = vmatpush1.bf16.msra.mxu0 %v1453
        %1490 = vmatprep.subr.bf16.mxu0 0
        %1491 = vmatpush1.bf16.msra.mxu0 %v1454
        %1492 = vmatprep.subr.bf16.mxu0 0
        %1493 = vmatpush1.bf16.msra.mxu0 %v1455
        %1494 = vmatprep.subr.bf16.mxu0 0
        %1495 = vmatpush1.bf16.msra.mxu0 %v1456
        %1496 = vmatprep.subr.bf16.mxu0 0
        %1497 = vmatpush1.bf16.msra.mxu0 %v1457
        %1498 = vmatprep.subr.bf16.mxu0 0
        %1499 = vmatpush1.bf16.msra.mxu0 %v1458
        %1500 = vmatprep.subr.bf16.mxu0 0
        %1501 = vmatpush1.bf16.msra.mxu0 %v1459
        %1502 = vmatprep.subr.bf16.mxu0 0
        %1503 = vmatpush1.bf16.msra.mxu0 %v1460
        %1504 = vmatprep.subr.bf16.mxu0 0
        %1505 = vmatpush1.bf16.msra.mxu0 %v1461
        %1506 = vmatprep.subr.bf16.mxu0 0
        %1507 = vmatpush1.bf16.msra.mxu0 %v1462
        %1508 = vmatprep.subr.bf16.mxu0 0
        %1509 = vmatpush1.bf16.msra.mxu0 %v1463
        %1510 = vmatprep.subr.bf16.mxu0 0
        %1511 = vmatpush1.bf16.msra.mxu0 %v1464
        %1512 = vmatprep.subr.bf16.mxu0 0
        %1513 = vmatpush1.bf16.msra.mxu0 %v1465
        %1514 = vmatprep.mubr.bf16.mxu0 %v1348
        %1515 = vmatmul.mubr.bf16.gmra.mrb[0].mxu0 %v1347
        %v1516 = vpop.f32.mrb[0].mxu0
        %v1517 = vadd.f32 %v1385, %v1516
        %v1518 = vpop.f32.mrb[0].mxu0
        %v1519 = vpop.f32.mrb[0].mxu0
        %v1520 = vpop.f32.mrb[0].mxu0
        %1521 = vdwg.mxu0
        %v1522 = vadd.f32 %v1199, %v1517
        %v1523 = vld [vmem:[%s1 + $0x10] sm:$0x1]
        %v1524 = vld [vmem:[%s1 + $0x11] sm:$0x1]
        %v1525 = vsel %vm365, %v1522, 0.0
        %1526 = vadd.xlane.f32.xlu0 %v1525
        %v1527 = vpop.xlane.xlu0 %1526
        %v1528 = vmul.f32 %v1527, %v416
        %v1529 = vsub.f32 %v1522, %v1528
        %v1530 = vmul.f32 %v1529, %v1529
        %v1531 = vsel %vm365, %v1530, 0.0
        %1532 = vadd.xlane.f32.xlu0 %v1531
        %v1533 = vpop.xlane.xlu0 %1532
        %v1534 = vmul.f32 %v1533, %v416
        %v1535 = vadd.f32 %v1534, 1e-05
        %v1536 = vrsqrt.pop %v1535
        %v1537 = vmul.f32 %v1529, %v1536
        %v1538 = vlaneseq
        %v1539 = vshrl.u32 %v1538, 7
        %v1540 = vsub.s32 0, %v1539
        %v1541 = vrot.slane %v1523, %v1540
        %v1542 = vmul.f32 %v1537, %v1541
        %v1543 = vlaneseq
        %v1544 = vshrl.u32 %v1543, 7
        %v1545 = vsub.s32 0, %v1544
        %v1546 = vrot.slane %v1524, %v1545
        %v1547 = vadd.f32 %v1542, %v1546
        %v1548 = vpack.c.bf16 %v1547, %v1547
        %s1549 = scalar_lea.vmem [#allocation2], 224
        %v1550 = vld [vmem:[%s1549] sm:$0xff]
        %v1551 = vld [vmem:[%s1549 + $0x8] sm:$0xff]
        %v1552 = vld [vmem:[%s1549 + $0x10] sm:$0xff]
        %v1553 = vld [vmem:[%s1549 + $0x1c] sm:$0xff]
        %v1554 = vld [vmem:[%s1549 + $0x24] sm:$0xff]
        %v1555 = vld [vmem:[%s1549 + $0x2c] sm:$0xff]
        %v1556 = vld [vmem:[%s1549 + $0x38] sm:$0xff]
        %v1557 = vld [vmem:[%s1549 + $0x40] sm:$0xff]
        %v1558 = vld [vmem:[%s1549 + $0x48] sm:$0xff]
        %v1559 = vld [vmem:[%s1549 + $0x54] sm:$0xff]
        %v1560 = vld [vmem:[%s1549 + $0x5c] sm:$0xff]
        %v1561 = vld [vmem:[%s1549 + $0x64] sm:$0xff]
        %v1562 = vld [vmem:[%s1549 + $0x70] sm:$0xff]
        %v1563 = vld [vmem:[%s1549 + $0x78] sm:$0xff]
        %v1564 = vld [vmem:[%s1549 + $0x80] sm:$0xff]
        %v1565 = vld [vmem:[%s1549 + $0x8c] sm:$0xff]
        %v1566 = vld [vmem:[%s1549 + $0x94] sm:$0xff]
        %v1567 = vld [vmem:[%s1549 + $0x9c] sm:$0xff]
        %v1568 = vld [vmem:[%s1549 + $0xa8] sm:$0xff]
        %v1569 = vld [vmem:[%s1549 + $0xb0] sm:$0xff]
        %v1570 = vld [vmem:[%s1549 + $0xb8] sm:$0xff]
        %v1571 = vld [vmem:[%s1549 + $0xc4] sm:$0xff]
        %v1572 = vld [vmem:[%s1549 + $0xcc] sm:$0xff]
        %v1573 = vld [vmem:[%s1549 + $0xd4] sm:$0xff]
        %s1574 = scalar_lea.vmem %s2, 24
        %v1575 = vld [vmem:[%s1574] ss:$4 sm:$0x3f]
        %v1577 = vlaneseq
        %v1578 = vshrl.u32 %v1577, 7
        %v1579 = vsub.s32 0, %v1578
        %v1580 = vrot.slane %v1575, %v1579
        %v1581 = vlaneseq
        %v1582 = vshrl.u32 %v1581, 7
        %v1583 = vsub.s32 1, %v1582
        %v1584 = vrot.slane %v1575, %v1583
        %v1585 = vlaneseq
        %v1586 = vshrl.u32 %v1585, 7
        %v1587 = vsub.s32 2, %v1586
        %v1588 = vrot.slane %v1575, %v1587
        %v1589 = vlaneseq
        %v1590 = vshrl.u32 %v1589, 7
        %v1591 = vsub.s32 3, %v1590
        %v1592 = vrot.slane %v1575, %v1591
        %v1593 = vlaneseq
        %v1594 = vshrl.u32 %v1593, 7
        %v1595 = vsub.s32 4, %v1594
        %v1596 = vrot.slane %v1575, %v1595
        %v1597 = vlaneseq
        %v1598 = vshrl.u32 %v1597, 7
        %v1599 = vsub.s32 5, %v1598
        %v1600 = vrot.slane %v1575, %v1599
        %v1631 = vunpack.c.l.b16 %v1550
        %v1632 = vunpack.c.h.b16 %v1550
        %v1633 = vunpack.c.l.b16 %v1551
        %v1634 = vunpack.c.h.b16 %v1551
        %v1635 = vunpack.c.l.b16 %v1552
        %v1636 = vunpack.c.h.b16 %v1552
        %v1637 = vunpack.c.l.b16 %v1553
        %v1638 = vunpack.c.h.b16 %v1553
        %v1639 = vunpack.c.l.b16 %v1554
        %v1640 = vunpack.c.h.b16 %v1554
        %v1641 = vunpack.c.l.b16 %v1555
        %v1642 = vunpack.c.h.b16 %v1555
        %v1643 = vunpack.c.l.b16 %v1556
        %v1644 = vunpack.c.h.b16 %v1556
        %v1645 = vunpack.c.l.b16 %v1557
        %v1646 = vunpack.c.h.b16 %v1557
        %v1647 = vunpack.c.l.b16 %v1558
        %v1648 = vunpack.c.h.b16 %v1558
        %v1649 = vunpack.c.l.b16 %v1559
        %v1650 = vunpack.c.h.b16 %v1559
        %v1651 = vunpack.c.l.b16 %v1560
        %v1652 = vunpack.c.h.b16 %v1560
        %v1653 = vunpack.c.l.b16 %v1561
        %v1654 = vunpack.c.h.b16 %v1561
        %v1655 = vunpack.c.l.b16 %v1562
        %v1656 = vunpack.c.h.b16 %v1562
        %v1657 = vunpack.c.l.b16 %v1563
        %v1658 = vunpack.c.h.b16 %v1563
        %v1659 = vunpack.c.l.b16 %v1564
        %v1660 = vunpack.c.h.b16 %v1564
        %v1661 = vunpack.c.l.b16 %v1565
        %v1662 = vunpack.c.h.b16 %v1565
        %v1663 = vunpack.c.l.b16 %v1566
        %v1664 = vunpack.c.h.b16 %v1566
        %v1665 = vunpack.c.l.b16 %v1567
        %v1666 = vunpack.c.h.b16 %v1567
        %v1667 = vunpack.c.l.b16 %v1568
        %v1668 = vunpack.c.h.b16 %v1568
        %v1669 = vunpack.c.l.b16 %v1569
        %v1670 = vunpack.c.h.b16 %v1569
        %v1671 = vunpack.c.l.b16 %v1570
        %v1672 = vunpack.c.h.b16 %v1570
        %v1673 = vunpack.c.l.b16 %v1571
        %v1674 = vunpack.c.h.b16 %v1571
        %v1675 = vunpack.c.l.b16 %v1572
        %v1676 = vunpack.c.h.b16 %v1572
        %v1677 = vunpack.c.l.b16 %v1573
        %v1678 = vunpack.c.h.b16 %v1573
        %v1679 = vpack.c.b16 %v1637, %v1631
        %v1680 = vpack.c.b16 %v1638, %v1632
        %v1681 = vpack.c.b16 %v1639, %v1633
        %v1682 = vpack.c.b16 %v1640, %v1634
        %v1683 = vpack.c.b16 %v1641, %v1635
        %v1684 = vpack.c.b16 %v1642, %v1636
        %v1685 = vpack.c.b16 %v1649, %v1643
        %v1686 = vpack.c.b16 %v1650, %v1644
        %v1687 = vpack.c.b16 %v1651, %v1645
        %v1688 = vpack.c.b16 %v1652, %v1646
        %v1689 = vpack.c.b16 %v1653, %v1647
        %v1690 = vpack.c.b16 %v1654, %v1648
        %v1691 = vpack.c.b16 %v1661, %v1655
        %v1692 = vpack.c.b16 %v1662, %v1656
        %v1693 = vpack.c.b16 %v1663, %v1657
        %v1694 = vpack.c.b16 %v1664, %v1658
        %v1695 = vpack.c.b16 %v1665, %v1659
        %v1696 = vpack.c.b16 %v1666, %v1660
        %v1697 = vpack.c.b16 %v1673, %v1667
        %v1698 = vpack.c.b16 %v1674, %v1668
        %v1699 = vpack.c.b16 %v1675, %v1669
        %v1700 = vpack.c.b16 %v1676, %v1670
        %v1701 = vpack.c.b16 %v1677, %v1671
        %v1702 = vpack.c.b16 %v1678, %v1672
        %v1728 = vsel %vm365, %v1548, 0
        %1730 = vmatprep.subr.bf16.mxu0 %v1680
        %1731 = vmatpush1.bf16.msra.mxu0 %v1679
        %1732 = vmatprep.subr.bf16.mxu0 %v1686
        %1733 = vmatpush1.bf16.msra.mxu0 %v1685
        %1734 = vmatprep.subr.bf16.mxu0 %v1692
        %1735 = vmatpush1.bf16.msra.mxu0 %v1691
        %1736 = vmatprep.subr.bf16.mxu0 %v1698
        %1737 = vmatpush1.bf16.msra.mxu0 %v1697
        %1738 = vmatprep.subr.bf16.mxu0 0
        %1739 = vmatpush1.bf16.msra.mxu0 0
        %1740 = vmatprep.subr.bf16.mxu0 0
        %1741 = vmatpush1.bf16.msra.mxu0 0
        %1742 = vmatprep.subr.bf16.mxu0 0
        %1743 = vmatpush1.bf16.msra.mxu0 0
        %1744 = vmatprep.subr.bf16.mxu0 0
        %1745 = vmatpush1.bf16.msra.mxu0 0
        %1746 = vmatprep.subr.bf16.mxu0 0
        %1747 = vmatpush1.bf16.msra.mxu0 0
        %1748 = vmatprep.subr.bf16.mxu0 0
        %1749 = vmatpush1.bf16.msra.mxu0 0
        %1750 = vmatprep.subr.bf16.mxu0 0
        %1751 = vmatpush1.bf16.msra.mxu0 0
        %1752 = vmatprep.subr.bf16.mxu0 0
        %1753 = vmatpush1.bf16.msra.mxu0 0
        %1754 = vmatprep.subr.bf16.mxu0 0
        %1755 = vmatpush1.bf16.msra.mxu0 0
        %1756 = vmatprep.subr.bf16.mxu0 0
        %1757 = vmatpush1.bf16.msra.mxu0 0
        %1758 = vmatprep.subr.bf16.mxu0 0
        %1759 = vmatpush1.bf16.msra.mxu0 0
        %1760 = vmatprep.subr.bf16.mxu0 0
        %1761 = vmatpush1.bf16.msra.mxu0 0
        %1762 = vmatprep.mubr.bf16.mxu0 0
        %1763 = vmatmul.mubr.bf16.gmra.mrb[0].mxu0 %v1728
        %v1764 = vpop.f32.mrb[0].mxu0
        %v1765 = vadd.f32 %v1580, %v1764
        %v1766 = vpop.f32.mrb[0].mxu0
        %v1767 = vadd.f32 %v1584, %v1766
        %v1768 = vpop.f32.mrb[0].mxu0
        %v1769 = vpop.f32.mrb[0].mxu0
        %1770 = vdwg.mxu0
        %1771 = vmatprep.subr.bf16.mxu0 %v1682
        %1772 = vmatpush1.bf16.msra.mxu0 %v1681
        %1773 = vmatprep.subr.bf16.mxu0 %v1688
        %1774 = vmatpush1.bf16.msra.mxu0 %v1687
        %1775 = vmatprep.subr.bf16.mxu0 %v1694
        %1776 = vmatpush1.bf16.msra.mxu0 %v1693
        %1777 = vmatprep.subr.bf16.mxu0 %v1700
        %1778 = vmatpush1.bf16.msra.mxu0 %v1699
        %1779 = vmatprep.subr.bf16.mxu0 0
        %1780 = vmatpush1.bf16.msra.mxu0 0
        %1781 = vmatprep.subr.bf16.mxu0 0
        %1782 = vmatpush1.bf16.msra.mxu0 0
        %1783 = vmatprep.subr.bf16.mxu0 0
        %1784 = vmatpush1.bf16.msra.mxu0 0
        %1785 = vmatprep.subr.bf16.mxu0 0
        %1786 = vmatpush1.bf16.msra.mxu0 0
        %1787 = vmatprep.subr.bf16.mxu0 0
        %1788 = vmatpush1.bf16.msra.mxu0 0
        %1789 = vmatprep.subr.bf16.mxu0 0
        %1790 = vmatpush1.bf16.msra.mxu0 0
        %1791 = vmatprep.subr.bf16.mxu0 0
        %1792 = vmatpush1.bf16.msra.mxu0 0
        %1793 = vmatprep.subr.bf16.mxu0 0
        %1794 = vmatpush1.bf16.msra.mxu0 0
        %1795 = vmatprep.subr.bf16.mxu0 0
        %1796 = vmatpush1.bf16.msra.mxu0 0
        %1797 = vmatprep.subr.bf16.mxu0 0
        %1798 = vmatpush1.bf16.msra.mxu0 0
        %1799 = vmatprep.subr.bf16.mxu0 0
        %1800 = vmatpush1.bf16.msra.mxu0 0
        %1801 = vmatprep.subr.bf16.mxu0 0
        %1802 = vmatpush1.bf16.msra.mxu0 0
        %1803 = vmatprep.mubr.bf16.mxu0 0
        %1804 = vmatmul.mubr.bf16.gmra.mrb[0].mxu0 %v1728
        %v1805 = vpop.f32.mrb[0].mxu0
        %v1806 = vadd.f32 %v1588, %v1805
        %v1807 = vpop.f32.mrb[0].mxu0
        %v1808 = vadd.f32 %v1592, %v1807
        %v1809 = vpop.f32.mrb[0].mxu0
        %v1810 = vpop.f32.mrb[0].mxu0
        %1811 = vdwg.mxu0
        %1812 = vmatprep.subr.bf16.mxu0 %v1684
        %1813 = vmatpush1.bf16.msra.mxu0 %v1683
        %1814 = vmatprep.subr.bf16.mxu0 %v1690
        %1815 = vmatpush1.bf16.msra.mxu0 %v1689
        %1816 = vmatprep.subr.bf16.mxu0 %v1696
        %1817 = vmatpush1.bf16.msra.mxu0 %v1695
        %1818 = vmatprep.subr.bf16.mxu0 %v1702
        %1819 = vmatpush1.bf16.msra.mxu0 %v1701
        %1820 = vmatprep.subr.bf16.mxu0 0
        %1821 = vmatpush1.bf16.msra.mxu0 0
        %1822 = vmatprep.subr.bf16.mxu0 0
        %1823 = vmatpush1.bf16.msra.mxu0 0
        %1824 = vmatprep.subr.bf16.mxu0 0
        %1825 = vmatpush1.bf16.msra.mxu0 0
        %1826 = vmatprep.subr.bf16.mxu0 0
        %1827 = vmatpush1.bf16.msra.mxu0 0
        %1828 = vmatprep.subr.bf16.mxu0 0
        %1829 = vmatpush1.bf16.msra.mxu0 0
        %1830 = vmatprep.subr.bf16.mxu0 0
        %1831 = vmatpush1.bf16.msra.mxu0 0
        %1832 = vmatprep.subr.bf16.mxu0 0
        %1833 = vmatpush1.bf16.msra.mxu0 0
        %1834 = vmatprep.subr.bf16.mxu0 0
        %1835 = vmatpush1.bf16.msra.mxu0 0
        %1836 = vmatprep.subr.bf16.mxu0 0
        %1837 = vmatpush1.bf16.msra.mxu0 0
        %1838 = vmatprep.subr.bf16.mxu0 0
        %1839 = vmatpush1.bf16.msra.mxu0 0
        %1840 = vmatprep.subr.bf16.mxu0 0
        %1841 = vmatpush1.bf16.msra.mxu0 0
        %1842 = vmatprep.subr.bf16.mxu0 0
        %1843 = vmatpush1.bf16.msra.mxu0 0
        %1844 = vmatprep.mubr.bf16.mxu0 0
        %1845 = vmatmul.mubr.bf16.gmra.mrb[0].mxu0 %v1728
        %v1846 = vpop.f32.mrb[0].mxu0
        %v1847 = vadd.f32 %v1596, %v1846
        %v1848 = vpop.f32.mrb[0].mxu0
        %v1849 = vadd.f32 %v1600, %v1848
        %v1850 = vpop.f32.mrb[0].mxu0
        %v1851 = vpop.f32.mrb[0].mxu0
        %1852 = vdwg.mxu0
        %v1853 = vmul.f32 %v1765, 0.17677669
        %1854 = vmatprep.subr.mxu0 0.0
        %1855 = vmatpush1.xpose.msra.mxu0 %v1767
        %1856 = vmatprep.subr.mxu0 0.0
        %1857 = vmatpush1.xpose.msra.mxu0 0.0
        %1858 = vmatprep.subr.mxu0 0.0
        %1859 = vmatpush1.xpose.msra.mxu0 0.0
        %1860 = vmatprep.subr.mxu0 0.0
        %1861 = vmatpush1.xpose.msra.mxu0 0.0
        %1862 = vmatprep.subr.mxu0 0.0
        %1863 = vmatpush1.xpose.msra.mxu0 0.0
        %1864 = vmatprep.subr.mxu0 0.0
        %1865 = vmatpush1.xpose.msra.mxu0 0.0
        %1866 = vmatprep.subr.mxu0 0.0
        %1867 = vmatpush1.xpose.msra.mxu0 0.0
        %1868 = vmatprep.subr.mxu0 0.0
        %1869 = vmatpush1.xpose.msra.mxu0 0.0
        %1870 = vmatprep.subr.mxu0 0.0
        %1871 = vmatpush1.xpose.msra.mxu0 0.0
        %1872 = vmatprep.subr.mxu0 0.0
        %1873 = vmatpush1.xpose.msra.mxu0 0.0
        %1874 = vmatprep.subr.mxu0 0.0
        %1875 = vmatpush1.xpose.msra.mxu0 0.0
        %1876 = vmatprep.subr.mxu0 0.0
        %1877 = vmatpush1.xpose.msra.mxu0 0.0
        %1878 = vmatprep.subr.mxu0 0.0
        %1879 = vmatpush1.xpose.msra.mxu0 0.0
        %1880 = vmatprep.subr.mxu0 0.0
        %1881 = vmatpush1.xpose.msra.mxu0 0.0
        %1882 = vmatprep.subr.mxu0 0.0
        %1883 = vmatpush1.xpose.msra.mxu0 0.0
        %1884 = vmatprep.subr.mxu0 0.0
        %1885 = vmatpush1.xpose.msra.mxu0 0.0
        %1886 = vmatprep.subr.mxu0 0.0
        %1887 = vmatpush1.xpose.msra.mxu0 0.0
        %1888 = vmatprep.subr.mxu0 0.0
        %1889 = vmatpush1.xpose.msra.mxu0 0.0
        %1890 = vmatprep.subr.mxu0 0.0
        %1891 = vmatpush1.xpose.msra.mxu0 0.0
        %1892 = vmatprep.subr.mxu0 0.0
        %1893 = vmatpush1.xpose.msra.mxu0 0.0
        %1894 = vmatprep.subr.mxu0 0.0
        %1895 = vmatpush1.xpose.msra.mxu0 0.0
        %1896 = vmatprep.subr.mxu0 0.0
        %1897 = vmatpush1.xpose.msra.mxu0 0.0
        %1898 = vmatprep.subr.mxu0 0.0
        %1899 = vmatpush1.xpose.msra.mxu0 0.0
        %1900 = vmatprep.subr.mxu0 0.0
        %1901 = vmatpush1.xpose.msra.mxu0 0.0
        %1902 = vmatprep.subr.mxu0 0.0
        %1903 = vmatpush1.xpose.msra.mxu0 0.0
        %1904 = vmatprep.subr.mxu0 0.0
        %1905 = vmatpush1.xpose.msra.mxu0 0.0
        %1906 = vmatprep.subr.mxu0 0.0
        %1907 = vmatpush1.xpose.msra.mxu0 0.0
        %1908 = vmatprep.subr.mxu0 0.0
        %1909 = vmatpush1.xpose.msra.mxu0 0.0
        %1910 = vmatprep.subr.mxu0 0.0
        %1911 = vmatpush1.xpose.msra.mxu0 0.0
        %1912 = vmatprep.subr.mxu0 0.0
        %1913 = vmatpush1.xpose.msra.mxu0 0.0
        %1914 = vmatprep.subr.mxu0 0.0
        %1915 = vmatpush1.xpose.msra.mxu0 0.0
        %1916 = vmatprep.subr.mxu0 0.0
        %1917 = vmatpush1.xpose.msra.mxu0 0.0
        %1918 = vmatprep.mubr.f32.mxu0 0.0
        %1919 = vmatmul.mubr.f32.gmra.mrb[0].mxu0 %v1853
        %v1920 = vpop.f32.mrb[0].mxu0
        %v1921 = vadd.f32 %v440, %v1920
        %v1922 = vpop.f32.mrb[0].mxu0
        %1923 = vdwg.mxu0
        %v1924 = vmul.f32 %v1921, 1.442695
        %v1925 = vpow.pop %v1924
        %v1926 = vsel %vm842, %v1925, 0.0
        %1927 = vadd.xlane.f32.xlu0 %v1926
        %v1928 = vpop.xlane.xlu0 %1927
        %v1929 = vrcp.pop %v1928
        %v1930 = vmul.f32 %v1925, %v1929
        %v1932 = vsel %vm842, %v1930, 0
        %1934 = vmatprep.subr.mxu0 0.0
        %1935 = vmatpush1.msra.mxu0 %v1806
        %1936 = vmatprep.subr.mxu0 0.0
        %1937 = vmatpush1.msra.mxu0 0.0
        %1938 = vmatprep.subr.mxu0 0.0
        %1939 = vmatpush1.msra.mxu0 0.0
        %1940 = vmatprep.subr.mxu0 0.0
        %1941 = vmatpush1.msra.mxu0 0.0
        %1942 = vmatprep.subr.mxu0 0.0
        %1943 = vmatpush1.msra.mxu0 0.0
        %1944 = vmatprep.subr.mxu0 0.0
        %1945 = vmatpush1.msra.mxu0 0.0
        %1946 = vmatprep.subr.mxu0 0.0
        %1947 = vmatpush1.msra.mxu0 0.0
        %1948 = vmatprep.subr.mxu0 0.0
        %1949 = vmatpush1.msra.mxu0 0.0
        %1950 = vmatprep.subr.mxu0 0.0
        %1951 = vmatpush1.msra.mxu0 0.0
        %1952 = vmatprep.subr.mxu0 0.0
        %1953 = vmatpush1.msra.mxu0 0.0
        %1954 = vmatprep.subr.mxu0 0.0
        %1955 = vmatpush1.msra.mxu0 0.0
        %1956 = vmatprep.subr.mxu0 0.0
        %1957 = vmatpush1.msra.mxu0 0.0
        %1958 = vmatprep.subr.mxu0 0.0
        %1959 = vmatpush1.msra.mxu0 0.0
        %1960 = vmatprep.subr.mxu0 0.0
        %1961 = vmatpush1.msra.mxu0 0.0
        %1962 = vmatprep.subr.mxu0 0.0
        %1963 = vmatpush1.msra.mxu0 0.0
        %1964 = vmatprep.subr.mxu0 0.0
        %1965 = vmatpush1.msra.mxu0 0.0
        %1966 = vmatprep.subr.mxu0 0.0
        %1967 = vmatpush1.msra.mxu0 0.0
        %1968 = vmatprep.subr.mxu0 0.0
        %1969 = vmatpush1.msra.mxu0 0.0
        %1970 = vmatprep.subr.mxu0 0.0
        %1971 = vmatpush1.msra.mxu0 0.0
        %1972 = vmatprep.subr.mxu0 0.0
        %1973 = vmatpush1.msra.mxu0 0.0
        %1974 = vmatprep.subr.mxu0 0.0
        %1975 = vmatpush1.msra.mxu0 0.0
        %1976 = vmatprep.subr.mxu0 0.0
        %1977 = vmatpush1.msra.mxu0 0.0
        %1978 = vmatprep.subr.mxu0 0.0
        %1979 = vmatpush1.msra.mxu0 0.0
        %1980 = vmatprep.subr.mxu0 0.0
        %1981 = vmatpush1.msra.mxu0 0.0
        %1982 = vmatprep.subr.mxu0 0.0
        %1983 = vmatpush1.msra.mxu0 0.0
        %1984 = vmatprep.subr.mxu0 0.0
        %1985 = vmatpush1.msra.mxu0 0.0
        %1986 = vmatprep.subr.mxu0 0.0
        %1987 = vmatpush1.msra.mxu0 0.0
        %1988 = vmatprep.subr.mxu0 0.0
        %1989 = vmatpush1.msra.mxu0 0.0
        %1990 = vmatprep.subr.mxu0 0.0
        %1991 = vmatpush1.msra.mxu0 0.0
        %1992 = vmatprep.subr.mxu0 0.0
        %1993 = vmatpush1.msra.mxu0 0.0
        %1994 = vmatprep.subr.mxu0 0.0
        %1995 = vmatpush1.msra.mxu0 0.0
        %1996 = vmatprep.subr.mxu0 0.0
        %1997 = vmatpush1.msra.mxu0 0.0
        %1998 = vmatprep.mubr.f32.mxu0 0.0
        %1999 = vmatmul.mubr.f32.gmra.mrb[0].mxu0 %v1932
        %v2000 = vpop.f32.mrb[0].mxu0
        %v2001 = vadd.f32 0.0, %v2000
        %v2002 = vpop.f32.mrb[0].mxu0
        %2003 = vdwg.mxu0
        %v2004 = vld [vmem:[%s1549 + $0x18] sm:$0xf]
        %v2005 = vld [vmem:[%s1549 + $0x34] sm:$0xf]
        %v2006 = vld [vmem:[%s1549 + $0x50] sm:$0xf]
        %v2007 = vld [vmem:[%s1549 + $0x6c] sm:$0xf]
        %v2008 = vpack.c.bf16 %v2001, %v2001
        %v2009 = vmul.f32 %v1808, 0.17677669
        %2010 = vmatprep.subr.mxu0 0.0
        %2011 = vmatpush1.xpose.msra.mxu0 %v1847
        %2012 = vmatprep.subr.mxu0 0.0
        %2013 = vmatpush1.xpose.msra.mxu0 0.0
        %2014 = vmatprep.subr.mxu0 0.0
        %2015 = vmatpush1.xpose.msra.mxu0 0.0
        %2016 = vmatprep.subr.mxu0 0.0
        %2017 = vmatpush1.xpose.msra.mxu0 0.0
        %2018 = vmatprep.subr.mxu0 0.0
        %2019 = vmatpush1.xpose.msra.mxu0 0.0
        %2020 = vmatprep.subr.mxu0 0.0
        %2021 = vmatpush1.xpose.msra.mxu0 0.0
        %2022 = vmatprep.subr.mxu0 0.0
        %2023 = vmatpush1.xpose.msra.mxu0 0.0
        %2024 = vmatprep.subr.mxu0 0.0
        %2025 = vmatpush1.xpose.msra.mxu0 0.0
        %2026 = vmatprep.subr.mxu0 0.0
        %2027 = vmatpush1.xpose.msra.mxu0 0.0
        %2028 = vmatprep.subr.mxu0 0.0
        %2029 = vmatpush1.xpose.msra.mxu0 0.0
        %2030 = vmatprep.subr.mxu0 0.0
        %2031 = vmatpush1.xpose.msra.mxu0 0.0
        %2032 = vmatprep.subr.mxu0 0.0
        %2033 = vmatpush1.xpose.msra.mxu0 0.0
        %2034 = vmatprep.subr.mxu0 0.0
        %2035 = vmatpush1.xpose.msra.mxu0 0.0
        %2036 = vmatprep.subr.mxu0 0.0
        %2037 = vmatpush1.xpose.msra.mxu0 0.0
        %2038 = vmatprep.subr.mxu0 0.0
        %2039 = vmatpush1.xpose.msra.mxu0 0.0
        %2040 = vmatprep.subr.mxu0 0.0
        %2041 = vmatpush1.xpose.msra.mxu0 0.0
        %2042 = vmatprep.subr.mxu0 0.0
        %2043 = vmatpush1.xpose.msra.mxu0 0.0
        %2044 = vmatprep.subr.mxu0 0.0
        %2045 = vmatpush1.xpose.msra.mxu0 0.0
        %2046 = vmatprep.subr.mxu0 0.0
        %2047 = vmatpush1.xpose.msra.mxu0 0.0
        %2048 = vmatprep.subr.mxu0 0.0
        %2049 = vmatpush1.xpose.msra.mxu0 0.0
        %2050 = vmatprep.subr.mxu0 0.0
        %2051 = vmatpush1.xpose.msra.mxu0 0.0
        %2052 = vmatprep.subr.mxu0 0.0
        %2053 = vmatpush1.xpose.msra.mxu0 0.0
        %2054 = vmatprep.subr.mxu0 0.0
        %2055 = vmatpush1.xpose.msra.mxu0 0.0
        %2056 = vmatprep.subr.mxu0 0.0
        %2057 = vmatpush1.xpose.msra.mxu0 0.0
        %2058 = vmatprep.subr.mxu0 0.0
        %2059 = vmatpush1.xpose.msra.mxu0 0.0
        %2060 = vmatprep.subr.mxu0 0.0
        %2061 = vmatpush1.xpose.msra.mxu0 0.0
        %2062 = vmatprep.subr.mxu0 0.0
        %2063 = vmatpush1.xpose.msra.mxu0 0.0
        %2064 = vmatprep.subr.mxu0 0.0
        %2065 = vmatpush1.xpose.msra.mxu0 0.0
        %2066 = vmatprep.subr.mxu0 0.0
        %2067 = vmatpush1.xpose.msra.mxu0 0.0
        %2068 = vmatprep.subr.mxu0 0.0
        %2069 = vmatpush1.xpose.msra.mxu0 0.0
        %2070 = vmatprep.subr.mxu0 0.0
        %2071 = vmatpush1.xpose.msra.mxu0 0.0
        %2072 = vmatprep.subr.mxu0 0.0
        %2073 = vmatpush1.xpose.msra.mxu0 0.0
        %2074 = vmatprep.mubr.f32.mxu0 0.0
        %2075 = vmatmul.mubr.f32.gmra.mrb[0].mxu0 %v2009
        %v2076 = vpop.f32.mrb[0].mxu0
        %v2077 = vadd.f32 %v440, %v2076
        %v2078 = vpop.f32.mrb[0].mxu0
        %2079 = vdwg.mxu0
        %v2080 = vmul.f32 %v2077, 1.442695
        %v2081 = vpow.pop %v2080
        %v2082 = vsel %vm842, %v2081, 0.0
        %2083 = vadd.xlane.f32.xlu0 %v2082
        %v2084 = vpop.xlane.xlu0 %2083
        %v2085 = vrcp.pop %v2084
        %v2086 = vmul.f32 %v2081, %v2085
        %v2088 = vsel %vm842, %v2086, 0
        %2090 = vmatprep.subr.mxu0 0.0
        %2091 = vmatpush1.msra.mxu0 %v1849
        %2092 = vmatprep.subr.mxu0 0.0
        %2093 = vmatpush1.msra.mxu0 0.0
        %2094 = vmatprep.subr.mxu0 0.0
        %2095 = vmatpush1.msra.mxu0 0.0
        %2096 = vmatprep.subr.mxu0 0.0
        %2097 = vmatpush1.msra.mxu0 0.0
        %2098 = vmatprep.subr.mxu0 0.0
        %2099 = vmatpush1.msra.mxu0 0.0
        %2100 = vmatprep.subr.mxu0 0.0
        %2101 = vmatpush1.msra.mxu0 0.0
        %2102 = vmatprep.subr.mxu0 0.0
        %2103 = vmatpush1.msra.mxu0 0.0
        %2104 = vmatprep.subr.mxu0 0.0
        %2105 = vmatpush1.msra.mxu0 0.0
        %2106 = vmatprep.subr.mxu0 0.0
        %2107 = vmatpush1.msra.mxu0 0.0
        %2108 = vmatprep.subr.mxu0 0.0
        %2109 = vmatpush1.msra.mxu0 0.0
        %2110 = vmatprep.subr.mxu0 0.0
        %2111 = vmatpush1.msra.mxu0 0.0
        %2112 = vmatprep.subr.mxu0 0.0
        %2113 = vmatpush1.msra.mxu0 0.0
        %2114 = vmatprep.subr.mxu0 0.0
        %2115 = vmatpush1.msra.mxu0 0.0
        %2116 = vmatprep.subr.mxu0 0.0
        %2117 = vmatpush1.msra.mxu0 0.0
        %2118 = vmatprep.subr.mxu0 0.0
        %2119 = vmatpush1.msra.mxu0 0.0
        %2120 = vmatprep.subr.mxu0 0.0
        %2121 = vmatpush1.msra.mxu0 0.0
        %2122 = vmatprep.subr.mxu0 0.0
        %2123 = vmatpush1.msra.mxu0 0.0
        %2124 = vmatprep.subr.mxu0 0.0
        %2125 = vmatpush1.msra.mxu0 0.0
        %2126 = vmatprep.subr.mxu0 0.0
        %2127 = vmatpush1.msra.mxu0 0.0
        %2128 = vmatprep.subr.mxu0 0.0
        %2129 = vmatpush1.msra.mxu0 0.0
        %2130 = vmatprep.subr.mxu0 0.0
        %2131 = vmatpush1.msra.mxu0 0.0
        %2132 = vmatprep.subr.mxu0 0.0
        %2133 = vmatpush1.msra.mxu0 0.0
        %2134 = vmatprep.subr.mxu0 0.0
        %2135 = vmatpush1.msra.mxu0 0.0
        %2136 = vmatprep.subr.mxu0 0.0
        %2137 = vmatpush1.msra.mxu0 0.0
        %2138 = vmatprep.subr.mxu0 0.0
        %2139 = vmatpush1.msra.mxu0 0.0
        %2140 = vmatprep.subr.mxu0 0.0
        %2141 = vmatpush1.msra.mxu0 0.0
        %2142 = vmatprep.subr.mxu0 0.0
        %2143 = vmatpush1.msra.mxu0 0.0
        %2144 = vmatprep.subr.mxu0 0.0
        %2145 = vmatpush1.msra.mxu0 0.0
        %2146 = vmatprep.subr.mxu0 0.0
        %2147 = vmatpush1.msra.mxu0 0.0
        %2148 = vmatprep.subr.mxu0 0.0
        %2149 = vmatpush1.msra.mxu0 0.0
        %2150 = vmatprep.subr.mxu0 0.0
        %2151 = vmatpush1.msra.mxu0 0.0
        %2152 = vmatprep.subr.mxu0 0.0
        %2153 = vmatpush1.msra.mxu0 0.0
        %2154 = vmatprep.mubr.f32.mxu0 0.0
        %2155 = vmatmul.mubr.f32.gmra.mrb[0].mxu0 %v2088
        %v2156 = vpop.f32.mrb[0].mxu0
        %v2157 = vadd.f32 0.0, %v2156
        %v2158 = vpop.f32.mrb[0].mxu0
        %2159 = vdwg.mxu0
        %v2160 = vld [vmem:[%s1549 + $0x88] sm:$0xf]
        %v2161 = vld [vmem:[%s1549 + $0xa4] sm:$0xf]
        %v2162 = vld [vmem:[%s1549 + $0xc0] sm:$0xf]
        %v2163 = vld [vmem:[%s1549 + $0xdc] sm:$0xf]
        %v2164 = vpack.c.bf16 %v2157, %v2157
        %v2169 = vunpack.c.l.b16 %v2160
        %v2170 = vunpack.c.l.b16 %v2161
        %v2171 = vunpack.c.l.b16 %v2162
        %v2172 = vunpack.c.l.b16 %v2163
        %v2173 = vpack.c.b16 %v2170, %v2169
        %v2174 = vpack.c.b16 %v2172, %v2171
        %v2178 = vsel %vm1094, %v2164, 0
        %2180 = vmatprep.subr.bf16.mxu0 0
        %2181 = vmatpush1.bf16.msra.mxu0 %v2173
        %2182 = vmatprep.subr.bf16.mxu0 0
        %2183 = vmatpush1.bf16.msra.mxu0 %v2174
        %2184 = vmatprep.subr.bf16.mxu0 0
        %2185 = vmatpush1.bf16.msra.mxu0 0
        %2186 = vmatprep.subr.bf16.mxu0 0
        %2187 = vmatpush1.bf16.msra.mxu0 0
        %2188 = vmatprep.subr.bf16.mxu0 0
        %2189 = vmatpush1.bf16.msra.mxu0 0
        %2190 = vmatprep.subr.bf16.mxu0 0
        %2191 = vmatpush1.bf16.msra.mxu0 0
        %2192 = vmatprep.subr.bf16.mxu0 0
        %2193 = vmatpush1.bf16.msra.mxu0 0
        %2194 = vmatprep.subr.bf16.mxu0 0
        %2195 = vmatpush1.bf16.msra.mxu0 0
        %2196 = vmatprep.subr.bf16.mxu0 0
        %2197 = vmatpush1.bf16.msra.mxu0 0
        %2198 = vmatprep.subr.bf16.mxu0 0
        %2199 = vmatpush1.bf16.msra.mxu0 0
        %2200 = vmatprep.subr.bf16.mxu0 0
        %2201 = vmatpush1.bf16.msra.mxu0 0
        %2202 = vmatprep.subr.bf16.mxu0 0
        %2203 = vmatpush1.bf16.msra.mxu0 0
        %2204 = vmatprep.subr.bf16.mxu0 0
        %2205 = vmatpush1.bf16.msra.mxu0 0
        %2206 = vmatprep.subr.bf16.mxu0 0
        %2207 = vmatpush1.bf16.msra.mxu0 0
        %2208 = vmatprep.subr.bf16.mxu0 0
        %2209 = vmatpush1.bf16.msra.mxu0 0
        %2210 = vmatprep.subr.bf16.mxu0 0
        %2211 = vmatpush1.bf16.msra.mxu0 0
        %2212 = vmatprep.mubr.bf16.mxu0 0
        %2213 = vmatmul.mubr.bf16.gmra.mrb[0].mxu0 %v2178
        %v2214 = vpop.f32.mrb[0].mxu0
        %v2215 = vadd.f32 0.0, %v2214
        %v2216 = vpop.f32.mrb[0].mxu0
        %v2217 = vpop.f32.mrb[0].mxu0
        %v2218 = vpop.f32.mrb[0].mxu0
        %2219 = vdwg.mxu0
        %v2224 = vunpack.c.l.b16 %v2004
        %v2225 = vunpack.c.l.b16 %v2005
        %v2226 = vunpack.c.l.b16 %v2006
        %v2227 = vunpack.c.l.b16 %v2007
        %v2228 = vpack.c.b16 %v2225, %v2224
        %v2229 = vpack.c.b16 %v2227, %v2226
        %v2233 = vsel %vm1094, %v2008, 0
        %2235 = vmatprep.subr.bf16.mxu0 0
        %2236 = vmatpush1.bf16.msra.mxu0 %v2228
        %2237 = vmatprep.subr.bf16.mxu0 0
        %2238 = vmatpush1.bf16.msra.mxu0 %v2229
        %2239 = vmatprep.subr.bf16.mxu0 0
        %2240 = vmatpush1.bf16.msra.mxu0 0
        %2241 = vmatprep.subr.bf16.mxu0 0
        %2242 = vmatpush1.bf16.msra.mxu0 0
        %2243 = vmatprep.subr.bf16.mxu0 0
        %2244 = vmatpush1.bf16.msra.mxu0 0
        %2245 = vmatprep.subr.bf16.mxu0 0
        %2246 = vmatpush1.bf16.msra.mxu0 0
        %2247 = vmatprep.subr.bf16.mxu0 0
        %2248 = vmatpush1.bf16.msra.mxu0 0
        %2249 = vmatprep.subr.bf16.mxu0 0
        %2250 = vmatpush1.bf16.msra.mxu0 0
        %2251 = vmatprep.subr.bf16.mxu0 0
        %2252 = vmatpush1.bf16.msra.mxu0 0
        %2253 = vmatprep.subr.bf16.mxu0 0
        %2254 = vmatpush1.bf16.msra.mxu0 0
        %2255 = vmatprep.subr.bf16.mxu0 0
        %2256 = vmatpush1.bf16.msra.mxu0 0
        %2257 = vmatprep.subr.bf16.mxu0 0
        %2258 = vmatpush1.bf16.msra.mxu0 0
        %2259 = vmatprep.subr.bf16.mxu0 0
        %2260 = vmatpush1.bf16.msra.mxu0 0
        %2261 = vmatprep.subr.bf16.mxu0 0
        %2262 = vmatpush1.bf16.msra.mxu0 0
        %2263 = vmatprep.subr.bf16.mxu0 0
        %2264 = vmatpush1.bf16.msra.mxu0 0
        %2265 = vmatprep.subr.bf16.mxu0 0
        %2266 = vmatpush1.bf16.msra.mxu0 0
        %2267 = vmatprep.mubr.bf16.mxu0 0
        %2268 = vmatmul.mubr.bf16.gmra.mrb[0].mxu0 %v2233
        %v2269 = vpop.f32.mrb[0].mxu0
        %v2270 = vadd.f32 %v2215, %v2269
        %v2271 = vpop.f32.mrb[0].mxu0
        %v2272 = vpop.f32.mrb[0].mxu0
        %v2273 = vpop.f32.mrb[0].mxu0
        %2274 = vdwg.mxu0
        %v2275 = vadd.f32 %v1522, %v2270
        %v2276 = vld [vmem:[%s1574 + $0x1] sm:$0x1]
        %v2277 = vlaneseq
        %v2278 = vshrl.u32 %v2277, 7
        %v2279 = vsub.s32 0, %v2278
        %v2280 = vrot.slane %v2276, %v2279
        %v2281 = vadd.f32 %v2275, %v2280
        %v2282 = vld [vmem:[%s1 + $0x12] sm:$0x1]
        %v2283 = vld [vmem:[%s1 + $0x13] sm:$0x1]
        %v2284 = vsel %vm365, %v2281, 0.0
        %2285 = vadd.xlane.f32.xlu0 %v2284
        %v2286 = vpop.xlane.xlu0 %2285
        %v2287 = vmul.f32 %v2286, %v416
        %v2288 = vsub.f32 %v2281, %v2287
        %v2289 = vmul.f32 %v2288, %v2288
        %v2290 = vsel %vm365, %v2289, 0.0
        %2291 = vadd.xlane.f32.xlu0 %v2290
        %v2292 = vpop.xlane.xlu0 %2291
        %v2293 = vmul.f32 %v2292, %v416
        %v2294 = vadd.f32 %v2293, 1e-05
        %v2295 = vrsqrt.pop %v2294
        %v2296 = vmul.f32 %v2288, %v2295
        %v2297 = vlaneseq
        %v2298 = vshrl.u32 %v2297, 7
        %v2299 = vsub.s32 0, %v2298
        %v2300 = vrot.slane %v2282, %v2299
        %v2301 = vmul.f32 %v2296, %v2300
        %v2302 = vlaneseq
        %v2303 = vshrl.u32 %v2302, 7
        %v2304 = vsub.s32 0, %v2303
        %v2305 = vrot.slane %v2283, %v2304
        %v2306 = vadd.f32 %v2301, %v2305
        %v2307 = vpack.c.bf16 %v2306, %v2306
        %s2308 = scalar_lea.vmem %s5, 320
        %v2309 = vld [vmem:[%s2308] sm:$0xff]
        %v2310 = vld [vmem:[%s2308 + $0x8] sm:$0xff]
        %v2311 = vld [vmem:[%s2308 + $0x10] sm:$0xff]
        %v2312 = vld [vmem:[%s2308 + $0x18] sm:$0xff]
        %v2313 = vld [vmem:[%s2308 + $0x20] sm:$0xff]
        %v2314 = vld [vmem:[%s2308 + $0x28] sm:$0xff]
        %v2315 = vld [vmem:[%s2308 + $0x30] sm:$0xff]
        %v2316 = vld [vmem:[%s2308 + $0x38] sm:$0xff]
        %s2317 = scalar_lea.vmem %s1574, 2
        %v2318 = vld [vmem:[%s2317] ss:$4 sm:$0x3]
        %v2320 = vlaneseq
        %v2321 = vshrl.u32 %v2320, 7
        %v2322 = vsub.s32 0, %v2321
        %v2323 = vrot.slane %v2318, %v2322
        %v2324 = vlaneseq
        %v2325 = vshrl.u32 %v2324, 7
        %v2326 = vsub.s32 1, %v2325
        %v2327 = vrot.slane %v2318, %v2326
        %v2338 = vunpack.c.l.b16 %v2309
        %v2339 = vunpack.c.h.b16 %v2309
        %v2340 = vunpack.c.l.b16 %v2310
        %v2341 = vunpack.c.h.b16 %v2310
        %v2342 = vunpack.c.l.b16 %v2311
        %v2343 = vunpack.c.h.b16 %v2311
        %v2344 = vunpack.c.l.b16 %v2312
        %v2345 = vunpack.c.h.b16 %v2312
        %v2346 = vunpack.c.l.b16 %v2313
        %v2347 = vunpack.c.h.b16 %v2313
        %v2348 = vunpack.c.l.b16 %v2314
        %v2349 = vunpack.c.h.b16 %v2314
        %v2350 = vunpack.c.l.b16 %v2315
        %v2351 = vunpack.c.h.b16 %v2315
        %v2352 = vunpack.c.l.b16 %v2316
        %v2353 = vunpack.c.h.b16 %v2316
        %v2354 = vpack.c.b16 %v2340, %v2338
        %v2355 = vpack.c.b16 %v2341, %v2339
        %v2356 = vpack.c.b16 %v2344, %v2342
        %v2357 = vpack.c.b16 %v2345, %v2343
        %v2358 = vpack.c.b16 %v2348, %v2346
        %v2359 = vpack.c.b16 %v2349, %v2347
        %v2360 = vpack.c.b16 %v2352, %v2350
        %v2361 = vpack.c.b16 %v2353, %v2351
        %v2371 = vsel %vm365, %v2307, 0
        %2373 = vmatprep.subr.bf16.mxu0 %v2355
        %2374 = vmatpush1.bf16.msra.mxu0 %v2354
        %2375 = vmatprep.subr.bf16.mxu0 %v2357
        %2376 = vmatpush1.bf16.msra.mxu0 %v2356
        %2377 = vmatprep.subr.bf16.mxu0 %v2359
        %2378 = vmatpush1.bf16.msra.mxu0 %v2358
        %2379 = vmatprep.subr.bf16.mxu0 %v2361
        %2380 = vmatpush1.bf16.msra.mxu0 %v2360
        %2381 = vmatprep.subr.bf16.mxu0 0
        %2382 = vmatpush1.bf16.msra.mxu0 0
        %2383 = vmatprep.subr.bf16.mxu0 0
        %2384 = vmatpush1.bf16.msra.mxu0 0
        %2385 = vmatprep.subr.bf16.mxu0 0
        %2386 = vmatpush1.bf16.msra.mxu0 0
        %2387 = vmatprep.subr.bf16.mxu0 0
        %2388 = vmatpush1.bf16.msra.mxu0 0
        %2389 = vmatprep.subr.bf16.mxu0 0
        %2390 = vmatpush1.bf16.msra.mxu0 0
        %2391 = vmatprep.subr.bf16.mxu0 0
        %2392 = vmatpush1.bf16.msra.mxu0 0
        %2393 = vmatprep.subr.bf16.mxu0 0
        %2394 = vmatpush1.bf16.msra.mxu0 0
        %2395 = vmatprep.subr.bf16.mxu0 0
        %2396 = vmatpush1.bf16.msra.mxu0 0
        %2397 = vmatprep.subr.bf16.mxu0 0
        %2398 = vmatpush1.bf16.msra.mxu0 0
        %2399 = vmatprep.subr.bf16.mxu0 0
        %2400 = vmatpush1.bf16.msra.mxu0 0
        %2401 = vmatprep.subr.bf16.mxu0 0
        %2402 = vmatpush1.bf16.msra.mxu0 0
        %2403 = vmatprep.subr.bf16.mxu0 0
        %2404 = vmatpush1.bf16.msra.mxu0 0
        %2405 = vmatprep.mubr.bf16.mxu0 0
        %2406 = vmatmul.mubr.bf16.gmra.mrb[0].mxu0 %v2371
        %v2407 = vpop.f32.mrb[0].mxu0
        %v2408 = vadd.f32 %v2323, %v2407
        %v2409 = vpop.f32.mrb[0].mxu0
        %v2410 = vadd.f32 %v2327, %v2409
        %v2411 = vpop.f32.mrb[0].mxu0
        %v2412 = vpop.f32.mrb[0].mxu0
        %2413 = vdwg.mxu0
        %v2414 = vmul.f32 %v2408, 1.702
        %v2415 = vmul.f32 %v2410, 1.702
        %v2416 = vxor.u32 %v2414, 2147483648
        %v2417 = vxor.u32 %v2415, 2147483648
        %v2418 = vmul.f32 %v2416, 1.442695
        %v2419 = vpow.pop %v2418
        %v2420 = vmul.f32 %v2417, 1.442695
        %v2421 = vpow.pop %v2420
        %v2422 = vadd.f32 %v2419, 1.0
        %v2423 = vadd.f32 %v2421, 1.0
        %v2424 = vrcp.pop %v2422
        %v2425 = vmul.f32 1.0, %v2424
        %v2426 = vrcp.pop %v2423
        %v2427 = vmul.f32 1.0, %v2426
        %v2428 = vmul.f32 %v2408, %v2425
        %v2429 = vmul.f32 %v2410, %v2427
        %v2430 = vpack.c.bf16 %v2428, %v2428
        %v2431 = vpack.c.bf16 %v2429, %v2429
        %v2432 = vld [vmem:[%s2308 + $0x40] sm:$0xf]
        %v2433 = vld [vmem:[%s2308 + $0x48] sm:$0xf]
        %v2434 = vld [vmem:[%s2308 + $0x50] sm:$0xf]
        %v2435 = vld [vmem:[%s2308 + $0x58] sm:$0xf]
        %v2436 = vld [vmem:[%s2308 + $0x60] sm:$0xf]
        %v2437 = vld [vmem:[%s2308 + $0x68] sm:$0xf]
        %v2438 = vld [vmem:[%s2308 + $0x70] sm:$0xf]
        %v2439 = vld [vmem:[%s2308 + $0x78] sm:$0xf]
        %v2440 = vld [vmem:[%s2308 + $0x80] sm:$0xf]
        %v2441 = vld [vmem:[%s2308 + $0x88] sm:$0xf]
        %v2442 = vld [vmem:[%s2308 + $0x90] sm:$0xf]
        %v2443 = vld [vmem:[%s2308 + $0x98] sm:$0xf]
        %v2444 = vld [vmem:[%s2308 + $0xa0] sm:$0xf]
        %v2445 = vld [vmem:[%s2308 + $0xa8] sm:$0xf]
        %v2446 = vld [vmem:[%s2308 + $0xb0] sm:$0xf]
        %v2447 = vld [vmem:[%s2308 + $0xb8] sm:$0xf]
        %v2448 = vld [vmem:[%s2308 + $0xc0] sm:$0xf]
        %v2449 = vld [vmem:[%s2308 + $0xc8] sm:$0xf]
        %v2450 = vld [vmem:[%s2308 + $0xd0] sm:$0xf]
        %v2451 = vld [vmem:[%s2308 + $0xd8] sm:$0xf]
        %v2452 = vld [vmem:[%s2308 + $0xe0] sm:$0xf]
        %v2453 = vld [vmem:[%s2308 + $0xe8] sm:$0xf]
        %v2454 = vld [vmem:[%s2308 + $0xf0] sm:$0xf]
        %v2455 = vld [vmem:[%s2308 + $0xf8] sm:$0xf]
        %v2456 = vld [vmem:[%s2308 + $0x100] sm:$0xf]
        %v2457 = vld [vmem:[%s2308 + $0x108] sm:$0xf]
        %v2458 = vld [vmem:[%s2308 + $0x110] sm:$0xf]
        %v2459 = vld [vmem:[%s2308 + $0x118] sm:$0xf]
        %v2460 = vld [vmem:[%s2308 + $0x120] sm:$0xf]
        %v2461 = vld [vmem:[%s2308 + $0x128] sm:$0xf]
        %v2462 = vld [vmem:[%s2308 + $0x130] sm:$0xf]
        %v2463 = vld [vmem:[%s2308 + $0x138] sm:$0xf]
        %v2464 = vld [vmem:[%s1574 + $0x3] sm:$0x1]
        %v2465 = vlaneseq
        %v2466 = vshrl.u32 %v2465, 7
        %v2467 = vsub.s32 0, %v2466
        %v2468 = vrot.slane %v2464, %v2467
        %v2501 = vunpack.c.l.b16 %v2432
        %v2502 = vunpack.c.l.b16 %v2433
        %v2503 = vunpack.c.l.b16 %v2434
        %v2504 = vunpack.c.l.b16 %v2435
        %v2505 = vunpack.c.l.b16 %v2436
        %v2506 = vunpack.c.l.b16 %v2437
        %v2507 = vunpack.c.l.b16 %v2438
        %v2508 = vunpack.c.l.b16 %v2439
        %v2509 = vunpack.c.l.b16 %v2440
        %v2510 = vunpack.c.l.b16 %v2441
        %v2511 = vunpack.c.l.b16 %v2442
        %v2512 = vunpack.c.l.b16 %v2443
        %v2513 = vunpack.c.l.b16 %v2444
        %v2514 = vunpack.c.l.b16 %v2445
        %v2515 = vunpack.c.l.b16 %v2446
        %v2516 = vunpack.c.l.b16 %v2447
        %v2517 = vunpack.c.l.b16 %v2448
        %v2518 = vunpack.c.l.b16 %v2449
        %v2519 = vunpack.c.l.b16 %v2450
        %v2520 = vunpack.c.l.b16 %v2451
        %v2521 = vunpack.c.l.b16 %v2452
        %v2522 = vunpack.c.l.b16 %v2453
        %v2523 = vunpack.c.l.b16 %v2454
        %v2524 = vunpack.c.l.b16 %v2455
        %v2525 = vunpack.c.l.b16 %v2456
        %v2526 = vunpack.c.l.b16 %v2457
        %v2527 = vunpack.c.l.b16 %v2458
        %v2528 = vunpack.c.l.b16 %v2459
        %v2529 = vunpack.c.l.b16 %v2460
        %v2530 = vunpack.c.l.b16 %v2461
        %v2531 = vunpack.c.l.b16 %v2462
        %v2532 = vunpack.c.l.b16 %v2463
        %v2533 = vpack.c.b16 %v2502, %v2501
        %v2534 = vpack.c.b16 %v2504, %v2503
        %v2535 = vpack.c.b16 %v2506, %v2505
        %v2536 = vpack.c.b16 %v2508, %v2507
        %v2537 = vpack.c.b16 %v2510, %v2509
        %v2538 = vpack.c.b16 %v2512, %v2511
        %v2539 = vpack.c.b16 %v2514, %v2513
        %v2540 = vpack.c.b16 %v2516, %v2515
        %v2541 = vpack.c.b16 %v2518, %v2517
        %v2542 = vpack.c.b16 %v2520, %v2519
        %v2543 = vpack.c.b16 %v2522, %v2521
        %v2544 = vpack.c.b16 %v2524, %v2523
        %v2545 = vpack.c.b16 %v2526, %v2525
        %v2546 = vpack.c.b16 %v2528, %v2527
        %v2547 = vpack.c.b16 %v2530, %v2529
        %v2548 = vpack.c.b16 %v2532, %v2531
        %2565 = vmatprep.subr.bf16.mxu0 0
        %2566 = vmatpush1.bf16.msra.mxu0 %v2533
        %2567 = vmatprep.subr.bf16.mxu0 0
        %2568 = vmatpush1.bf16.msra.mxu0 %v2534
        %2569 = vmatprep.subr.bf16.mxu0 0
        %2570 = vmatpush1.bf16.msra.mxu0 %v2535
        %2571 = vmatprep.subr.bf16.mxu0 0
        %2572 = vmatpush1.bf16.msra.mxu0 %v2536
        %2573 = vmatprep.subr.bf16.mxu0 0
        %2574 = vmatpush1.bf16.msra.mxu0 %v2537
        %2575 = vmatprep.subr.bf16.mxu0 0
        %2576 = vmatpush1.bf16.msra.mxu0 %v2538
        %2577 = vmatprep.subr.bf16.mxu0 0
        %2578 = vmatpush1.bf16.msra.mxu0 %v2539
        %2579 = vmatprep.subr.bf16.mxu0 0
        %2580 = vmatpush1.bf16.msra.mxu0 %v2540
        %2581 = vmatprep.subr.bf16.mxu0 0
        %2582 = vmatpush1.bf16.msra.mxu0 %v2541
        %2583 = vmatprep.subr.bf16.mxu0 0
        %2584 = vmatpush1.bf16.msra.mxu0 %v2542
        %2585 = vmatprep.subr.bf16.mxu0 0
        %2586 = vmatpush1.bf16.msra.mxu0 %v2543
        %2587 = vmatprep.subr.bf16.mxu0 0
        %2588 = vmatpush1.bf16.msra.mxu0 %v2544
        %2589 = vmatprep.subr.bf16.mxu0 0
        %2590 = vmatpush1.bf16.msra.mxu0 %v2545
        %2591 = vmatprep.subr.bf16.mxu0 0
        %2592 = vmatpush1.bf16.msra.mxu0 %v2546
        %2593 = vmatprep.subr.bf16.mxu0 0
        %2594 = vmatpush1.bf16.msra.mxu0 %v2547
        %2595 = vmatprep.subr.bf16.mxu0 0
        %2596 = vmatpush1.bf16.msra.mxu0 %v2548
        %2597 = vmatprep.mubr.bf16.mxu0 %v2431
        %2598 = vmatmul.mubr.bf16.gmra.mrb[0].mxu0 %v2430
        %v2599 = vpop.f32.mrb[0].mxu0
        %v2600 = vadd.f32 %v2468, %v2599
        %v2601 = vpop.f32.mrb[0].mxu0
        %v2602 = vpop.f32.mrb[0].mxu0
        %v2603 = vpop.f32.mrb[0].mxu0
        %2604 = vdwg.mxu0
        %v2605 = vadd.f32 %v2281, %v2600
        %v2606 = vld [vmem:[%s1 + $0xa] sm:$0x1]
        %v2607 = vld [vmem:[%s1 + $0xb] sm:$0x1]
        %vm2608 = vcmask 516096
        %v2609 = vsel %vm2608, %v2605, 0.0
        %2610 = vadd.xlane.f32.xlu0 %v2609
        %v2611 = vpop.xlane.xlu0 %2610
        %v2612 = vmul.f32 %v2611, %v416
        %v2613 = vsub.f32 %v2605, %v2612
        %v2614 = vmul.f32 %v2613, %v2613
        %v2615 = vsel %vm2608, %v2614, 0.0
        %2616 = vadd.xlane.f32.xlu0 %v2615
        %v2617 = vpop.xlane.xlu0 %2616
        %v2618 = vmul.f32 %v2617, %v416
        %v2619 = vadd.f32 %v2618, 1e-05
        %v2620 = vrsqrt.pop %v2619
        %v2621 = vmul.f32 %v2613, %v2620
        %v2622 = vmul.f32 %v2621, %v2606
        %v2623 = vadd.f32 %v2622, %v2607
        %v2624 = vpack.c.bf16 %v2623, %v2623
        %v2625 = vld [vmem:[%s3 + $0x60] sm:$0xf]
        %v2626 = vld [vmem:[%s3 + $0x64] sm:$0xf]
        %v2627 = vld [vmem:[%s3 + $0x68] sm:$0xf]
        %v2628 = vld [vmem:[%s3 + $0x6c] sm:$0xf]
        %v2629 = vld [vmem:[%s3 + $0x70] sm:$0xf]
        %v2630 = vld [vmem:[%s3 + $0x74] sm:$0xf]
        %v2631 = vld [vmem:[%s3 + $0x78] sm:$0xf]
        %v2632 = vld [vmem:[%s3 + $0x7c] sm:$0xf]
        %v2641 = vunpack.c.l.b16 %v2625
        %v2642 = vunpack.c.l.b16 %v2626
        %v2643 = vunpack.c.l.b16 %v2627
        %v2644 = vunpack.c.l.b16 %v2628
        %v2645 = vunpack.c.l.b16 %v2629
        %v2646 = vunpack.c.l.b16 %v2630
        %v2647 = vunpack.c.l.b16 %v2631
        %v2648 = vunpack.c.l.b16 %v2632
        %v2649 = vpack.c.b16 %v2642, %v2641
        %v2650 = vpack.c.b16 %v2644, %v2643
        %v2651 = vpack.c.b16 %v2646, %v2645
        %v2652 = vpack.c.b16 %v2648, %v2647
        %v2658 = vsel %vm365, %v2624, 0
        %2660 = vmatprep.subr.bf16.mxu0 0
        %2661 = vmatpush1.bf16.msra.mxu0 %v2649
        %2662 = vmatprep.subr.bf16.mxu0 0
        %2663 = vmatpush1.bf16.msra.mxu0 %v2650
        %2664 = vmatprep.subr.bf16.mxu0 0
        %2665 = vmatpush1.bf16.msra.mxu0 %v2651
        %2666 = vmatprep.subr.bf16.mxu0 0
        %2667 = vmatpush1.bf16.msra.mxu0 %v2652
        %2668 = vmatprep.subr.bf16.mxu0 0
        %2669 = vmatpush1.bf16.msra.mxu0 0
        %2670 = vmatprep.subr.bf16.mxu0 0
        %2671 = vmatpush1.bf16.msra.mxu0 0
        %2672 = vmatprep.subr.bf16.mxu0 0
        %2673 = vmatpush1.bf16.msra.mxu0 0
        %2674 = vmatprep.subr.bf16.mxu0 0
        %2675 = vmatpush1.bf16.msra.mxu0 0
        %2676 = vmatprep.subr.bf16.mxu0 0
        %2677 = vmatpush1.bf16.msra.mxu0 0
        %2678 = vmatprep.subr.bf16.mxu0 0
        %2679 = vmatpush1.bf16.msra.mxu0 0
        %2680 = vmatprep.subr.bf16.mxu0 0
        %2681 = vmatpush1.bf16.msra.mxu0 0
        %2682 = vmatprep.subr.bf16.mxu0 0
        %2683 = vmatpush1.bf16.msra.mxu0 0
        %2684 = vmatprep.subr.bf16.mxu0 0
        %2685 = vmatpush1.bf16.msra.mxu0 0
        %2686 = vmatprep.subr.bf16.mxu0 0
        %2687 = vmatpush1.bf16.msra.mxu0 0
        %2688 = vmatprep.subr.bf16.mxu0 0
        %2689 = vmatpush1.bf16.msra.mxu0 0
        %2690 = vmatprep.subr.bf16.mxu0 0
        %2691 = vmatpush1.bf16.msra.mxu0 0
        %2692 = vmatprep.mubr.bf16.mxu0 0
        %2693 = vmatmul.mubr.bf16.gmra.mrb[0].mxu0 %v2658
        %v2694 = vpop.f32.mrb[0].mxu0
        %v2695 = vadd.f32 0.0, %v2694
        %v2696 = vpop.f32.mrb[0].mxu0
        %v2697 = vpop.f32.mrb[0].mxu0
        %v2698 = vpop.f32.mrb[0].mxu0
        %2699 = vdwg.mxu0
        %2700 = vst [vmem:[%s258] sm:$0x1] %v2695
        %s2701 = sand.u32 %s160, 1
        %s2702 = scalar_lea.sflag [#allocation4], %s2701
        %s2703 = sand.u32 %s160, 1
        %s2704 = scalar_lea.vmem [#allocation5], %s2703
        // Predicated region
        $region49: #{encode_image.1} parent=43 // pred_check
          %p2705 = pneg %p170
        $region50: #{encode_image.1} parent=43 // pred_check_branch
          %2707 = sbr.rel (%p2705) target = $region52
        $region51: #{encode_image.1} parent=43 // pred_region
          %s2709 = ssub.s32 16, 16
          %2710 = vsyncadd %s2702, %s2709
          %s2711 = smul.addr %s21, 16
          %s2712 = scalar_lea.hbm %s6, %s2711
          %s2714 = sshll.u32 %s2704, 4
          %s2715 = int_to_ptr.vmem [resolvable:$true] %s2714
          %2717 = dma.vmem_to_hbm [thread:$0]  %s2715, 16, %s2712, %s2702
        $region52: #{encode_image.1} parent=43 // pred_fallthru
          _
      $region44: #{encode_image.1} parent=5 // pred_fallthru
        _
      %p2718 = scmp.le.s32.totalorder 2, %s16
      // Predicated region
      $region53: #{encode_image.1} parent=5 // pred_check
        %p2719 = pneg %p2718
      $region54: #{encode_image.1} parent=5 // pred_check_branch
        %2721 = sbr.rel (%p2719) target = $region56
      $region55: #{encode_image.1} parent=5 // pred_region
        %s2722 = ssub.s32 %s16, 2
        // Predicated region
        $region57: #{encode_image.1} parent=55 // pred_check
          %p2723 = pneg %p176
        $region58: #{encode_image.1} parent=55 // pred_check_branch
          %2725 = sbr.rel (%p2723) target = $region60
        $region59: #{encode_image.1} parent=55 // pred_region
          %s2726 = sand.u32 %s161, 1
          %s2727 = scalar_lea.sflag [#allocation4], %s2726
          %s2728 = sand.u32 %s161, 1
          %s2729 = scalar_lea.vmem [#allocation5], %s2728
          %2730 = dma.done %s2727, 16
        $region60: #{encode_image.1} parent=55 // pred_fallthru
          _
      $region56: #{encode_image.1} parent=5 // pred_fallthru
        _
    $region6: #{encode_image.1} parent=1 // loop_footer
      %s20 = sadd.s32 1, %s16
    $region7: #{encode_image.1} parent=1 // loop_footer_branch
      %15 = sbr.rel target = $region3
    $region8: #{encode_image.1} parent=1 // loop_exit
      _
    %2731 = vsyncpa [#allocation3], 1
    %s2732 = scalar_lea.sflag [#allocation3], 1
    %2733 = vsyncpa %s2732, 1
    %2734 = vsyncpa [#allocation4], 1
    %s2735 = scalar_lea.sflag [#allocation4], 1
    %2736 = vsyncpa %s2735, 1

</llo_original>
